<compile_context>
chip_gen: v7x
topology: tpu7x:2x2x1
jax: 0.10.0
libtpu: 0.0.40
codegen_flags: <defaults>
</compile_context>

<pallas_src>
import functools
import math

import jax
import jax.numpy as jnp
from jax.experimental import pallas as pl
from jax.experimental.pallas import tpu as pltpu


def _round_up(x, m):
    return (x + m - 1) // m * m


def _vmem_capacity_bytes():
    """Per-core VMEM capacity (64 MiB on v7x, 128 MiB on v5e/v6e).  Falls back
    to the smallest (v7x) figure if the query is unavailable."""
    try:
        return int(pltpu.get_tpu_info().vmem_capacity_bytes)
    except Exception:
        return 64 * 1024 * 1024


def _block_footprint_bytes(nb, *, lt, li, dt, di, e, e_pad,
                           in_itemsize, weight_bytes):
    """Rough per-grid-step VMEM footprint: double-buffered in/out blocks +
    single-buffered resident weights + the main f32 intermediates (lane/sublane
    padded to (8, 128))."""
    lane = lambda d: _round_up(max(d, 1), 128)
    rows = lambda r: _round_up(max(r, 1), 8)
    rt, ri = rows(nb * lt), rows(nb * li)
    f32 = 4
    io = in_itemsize * (rt * lane(dt) + ri * lane(di)) + f32 * rt * lane(e_pad)
    inter = f32 * (rt * lane(e) + ri * lane(e)     # pt / pi projections
                   + rt * lane(e)                  # assembled head-output tile
                   + rt * lane(li))                # one live (rows, Li) score tile
    return 2 * io + weight_bytes + inter


def _pick_batch_block(n, lt, li, footprint_bytes, *, budget_bytes,
                      prefer_even_steps=True):
    """Largest batch-divisor block whose footprint fits the VMEM budget.
    Blocks keep their row counts sublane-aligned (multiple of 8) unless they
    cover the whole batch.  With prefer_even_steps the picker favours an even
    number of grid steps so the 'parallel' batch axis splits evenly over the
    two TensorCores of a v7x megacore (an odd count leaves one TC idle for the
    last step)."""
    feasible = []
    for nb in range(1, n + 1):
        if n % nb:
            continue
        if nb != n and ((nb * lt) % 8 or (nb * li) % 8):
            continue
        if footprint_bytes(nb) > budget_bytes:
            continue
        feasible.append(nb)
    if not feasible:
        return 1
    if prefer_even_steps:
        even = [nb for nb in feasible if (n // nb) % 2 == 0]
        if even:
            return max(even)
    return max(feasible)


def prepare_params(params, *, heads, compute_dtype=jnp.float32):
    """One-time host-side weight preparation (keep OUT of the per-call path):
      * pre-transpose every Linear weight to (in, out) layout (no .T in-kernel),
      * fold the 1/sqrt(E) attention scale into the text (query) projection,
      * algebraically fuse cross_attention.fc_out and the model fc_out into a
        single (E, E) matmul + bias,
      * pad the fused output features to 128 lanes only when E >= 128,
      * optionally cast matmul operands to compute_dtype (bf16 on v6e/v7x uses
        the fast MXU path and halves weight VMEM/DMA; accumulation and softmax
        stay f32 in-kernel).  On bandwidth-limited v5e also pass bf16
        activations to halve the streamed bytes."""
    E = params["wt"].shape[0]
    assert E % heads == 0, "output_size must be divisible by heads"
    inv_scale = 1.0 / math.sqrt(float(E))         # PyTorch: softmax(att / E**0.5)
    e_pad = _round_up(E, 128) if E >= 128 else E  # lane-dense stores only when cheap

    wt = params["wt"].T * inv_scale               # (Dt, E), query scale folded in
    bt = params["bt"] * inv_scale                 # (1, E)
    wi = params["wi"].T                           # (Di, E)
    bi = params["bi"]                             # (1, E)
    # out = (attn @ Wafc^T + bafc) @ Wout^T + bout
    #     = attn @ (Wafc^T @ Wout^T) + (bafc @ Wout^T + bout)   (prepped in f32)
    wc = params["wafc"].T @ params["wout"].T      # (E, E)
    bc = params["bafc"] @ params["wout"].T + params["bout"]     # (1, E)
    if e_pad != E:
        wc = jnp.pad(wc, ((0, 0), (0, e_pad - E)))
        bc = jnp.pad(bc, ((0, 0), (0, e_pad - E)))

    if compute_dtype != jnp.float32:
        wt, wi, wc = (w.astype(compute_dtype) for w in (wt, wi, wc))

    return dict(wt=wt, bt=bt, wi=wi, bi=bi, wc=wc, bc=bc,
                heads=heads, embed=E, e_pad=e_pad, compute_dtype=compute_dtype)


def _fusion_kernel(text_ref, img_ref,
                   wt_ref, bt_ref,     # text/query projection (scale folded)  (Dt,E),(1,E)
                   wi_ref, bi_ref,     # image projection                       (Di,E),(1,E)
                   wc_ref, bc_ref,     # fused fc_out o attn.fc_out             (E,E_pad),(1,E_pad)
                   o_ref,
                   attn_ref,           # VMEM scratch: assembled head outputs   (nb,Lt,E)
                   *, heads, embed, lt, li, nb, compute_dtype, approx_recip):
    f32 = jnp.float32
    cd = compute_dtype
    hd = embed // heads

    # --- modality projections: one MXU contraction each over the whole
    #     (nb*L, D) row slab (inputs were flattened on the host). ---
    pt = jnp.dot(text_ref[...].astype(cd), wt_ref[...],
                 preferred_element_type=f32) + bt_ref[...]      # (nb*Lt, E), pre-scaled queries
    pi = jnp.dot(img_ref[...].astype(cd), wi_ref[...],
                 preferred_element_type=f32) + bi_ref[...]      # (nb*Li, E), keys == values

    # Row-split to expose the batch dim for batched attention.  Lt / Li row
    # counts are sublane-aligned so this is layout-preserving (no relayout).
    pt3 = pt.reshape(nb, lt, embed)
    pi3 = pi.reshape(nb, li, embed)

    # NOTE: the reference CrossAttention.forward never applies its per-head
    # values/keys/queries Linear layers, so they are faithfully skipped.
    # Heads stay a short static loop; every matmul inside is batched over the
    # whole nb block.
    for h in range(heads):
        lo = h * hd
        q = pt3[:, :, lo:lo + hd].astype(cd)                    # (nb, Lt, hd)
        kv = pi3[:, :, lo:lo + hd].astype(cd)                   # (nb, Li, hd)
        s = jnp.einsum("nqd,nkd->nqk", q, kv,
                       preferred_element_type=f32)              # (nb, Lt, Li)
        m = jnp.max(s, axis=-1, keepdims=True)
        e = jnp.exp(s - m)
        den = jnp.sum(e, axis=-1, keepdims=True)
        if approx_recip:
            # EUP vrcp slot (otherwise idle); ~1e-3 abs error in the softmax.
            p = e * pl.reciprocal(den, approx=True)
        else:
            p = e / den
        ho = jnp.einsum("nqk,nkd->nqd", p.astype(cd), kv,
                        preferred_element_type=f32)             # (nb, Lt, hd)
        attn_ref[:, :, lo:lo + hd] = ho      # assemble one (nb, Lt, E) tile

    # Single K=E fused epilogue matmul over all nb*Lt rows
    # (cross_attention.fc_out and fc_out were fused on the host).
    attn = attn_ref[...].reshape(nb * lt, embed)
    out = jnp.dot(attn.astype(cd), wc_ref[...],
                  preferred_element_type=f32) + bc_ref[...]     # (nb*Lt, E_pad)
    o_ref[...] = out.astype(o_ref.dtype)


def modality_fusion_forward(text_features, image_features, prepared, *,
                            text_mask=None, image_mask=None,
                            batch_block=None, prefer_even_steps=True,
                            approx_recip=True):
    """text_features: (N, Lt, Dt); image_features: (N, Li, Di) -> (N, Lt, E).
    `prepared` comes from prepare_params() (call it once per model)."""
    # The reference forward always builds combined_mask=None; fail loudly
    # instead of silently ignoring a real mask.
    assert text_mask is None and image_mask is None, \
        "masks are not supported (reference forward passes combined_mask=None)"

    N, Lt, Dt = text_features.shape
    N2, Li, Di = image_features.shape
    assert N2 == N
    E, E_pad, heads = prepared["embed"], prepared["e_pad"], prepared["heads"]

    # Host-side flatten (free layout plumbing on HBM data): the kernel sees
    # plain 2-D row slabs.
    text2d = text_features.reshape(N * Lt, Dt)
    img2d = image_features.reshape(N * Li, Di)

    weight_arrays = (prepared["wt"], prepared["bt"], prepared["wi"],
                     prepared["bi"], prepared["wc"], prepared["bc"])
    weight_bytes = sum(int(a.size) * a.dtype.itemsize for a in weight_arrays)

    # Weight-aware, generation-aware sizing: budget the batch block against the
    # actual per-core VMEM (64 MiB v7x, 128 MiB v5e/v6e) minus headroom.
    cap = _vmem_capacity_bytes()
    footprint = functools.partial(
        _block_footprint_bytes, lt=Lt, li=Li, dt=Dt, di=Di, e=E, e_pad=E_pad,
        in_itemsize=text_features.dtype.itemsize, weight_bytes=weight_bytes)
    nb = batch_block or _pick_batch_block(
        N, Lt, Li, footprint, budget_bytes=int(cap * 3 // 4),
        prefer_even_steps=prefer_even_steps)
    assert N % nb == 0
    vmem_limit = int(min(cap - (4 << 20),
                         max(32 << 20, footprint(nb) + (8 << 20))))

    kernel = functools.partial(
        _fusion_kernel, heads=heads, embed=E, lt=Lt, li=Li, nb=nb,
        compute_dtype=prepared["compute_dtype"], approx_recip=approx_recip)

    def make_call(single_buffer_weights):
        def const_spec(a):
            idx = lambda b: (0,) * a.ndim
            if single_buffer_weights:
                # Resident across the whole grid; Buffered(1) avoids the
                # default 2x double-buffer VMEM cost for never-refetched blocks.
                return pl.BlockSpec(a.shape, idx, pipeline_mode=pl.Buffered(1))
            return pl.BlockSpec(a.shape, idx)

        return pl.pallas_call(
            kernel,
            out_shape=jax.ShapeDtypeStruct((N * Lt, E_pad), jnp.float32),
            grid_spec=pltpu.PrefetchScalarGridSpec(
                num_scalar_prefetch=0,
                grid=(N // nb,),
                in_specs=[
                    pl.BlockSpec((nb * Lt, Dt), lambda b: (b, 0)),   # text rows
                    pl.BlockSpec((nb * Li, Di), lambda b: (b, 0)),   # image rows
                    *(const_spec(a) for a in weight_arrays),
                ],
                out_specs=pl.BlockSpec((nb * Lt, E_pad), lambda b: (b, 0)),
                scratch_shapes=[pltpu.VMEM((nb, Lt, E), jnp.float32)],
            ),
            compiler_params=pltpu.CompilerParams(
                dimension_semantics=("parallel",),   # batch blocks independent
                vmem_limit_bytes=vmem_limit,
            ),
        )

    operands = (text2d, img2d, *weight_arrays)
    out2d = None
    for single_buffer_weights in (True, False):
        try:
            out2d = make_call(single_buffer_weights)(*operands)
            break
        except Exception:  # noqa: BLE001
            # Fall back to default double-buffered weights if this JAX/Mosaic
            # build rejects pipeline_mode=pl.Buffered(1) on a BlockSpec.
            if not single_buffer_weights:
                raise
    assert out2d is not None

    out = out2d.reshape(N, Lt, E_pad)
    return out[..., :E] if E_pad != E else out


def reference_forward(text_features, image_features, params, *, heads):
    """Pure-JAX replica of the PyTorch forward (for verification)."""
    pt = text_features @ params["wt"].T + params["bt"]
    pi = image_features @ params["wi"].T + params["bi"]
    N, Lt, E = pt.shape
    Li = pi.shape[1]
    hd = E // heads
    q = pt.reshape(N, Lt, heads, hd)
    k = pi.reshape(N, Li, heads, hd)
    v = pi.reshape(N, Li, heads, hd)
    att = jnp.einsum("nqhd,nkhd->nhqk", q, k)
    att = jax.nn.softmax(att / math.sqrt(float(E)), axis=3)
    out = jnp.einsum("nhql,nlhd->nqhd", att, v).reshape(N, Lt, E)
    out = out @ params["wafc"].T + params["bafc"]
    out = out @ params["wout"].T + params["bout"]
    return out


def init_params(key, text_embed_size, image_embed_size, output_size):
    ks = jax.random.split(key, 8)

    def lin(kw, kb, out_dim, in_dim):
        bound = 1.0 / math.sqrt(in_dim)
        w = jax.random.uniform(kw, (out_dim, in_dim), jnp.float32, -bound, bound)
        b = jax.random.uniform(kb, (1, out_dim), jnp.float32, -bound, bound)
        return w, b

    wt, bt = lin(ks[0], ks[1], output_size, text_embed_size)
    wi, bi = lin(ks[2], ks[3], output_size, image_embed_size)
    wafc, bafc = lin(ks[4], ks[5], output_size, output_size)
    wout, bout = lin(ks[6], ks[7], output_size, output_size)
    return dict(wt=wt, bt=bt, wi=wi, bi=bi, wafc=wafc, bafc=bafc,
                wout=wout, bout=bout)


if __name__ == "__main__":
    # Small shapes: batch=2, text seq=8, image seq=16,
    # text_embed_size=32, image_embed_size=64, output_size=32, heads=4.
    N, Lt, Li = 2, 8, 16
    TEXT_E, IMG_E, OUT_E, HEADS = 32, 64, 32, 4

    key = jax.random.PRNGKey(0)
    k_text, k_img, k_params = jax.random.split(key, 3)

    text_features = jax.random.normal(k_text, (N, Lt, TEXT_E), jnp.float32)
    image_features = jax.random.normal(k_img, (N, Li, IMG_E), jnp.float32)
    params = init_params(k_params, TEXT_E, IMG_E, OUT_E)

    prepared = prepare_params(params, heads=HEADS)   # one-time host-side prep
    out = modality_fusion_forward(text_features, image_features, prepared)
    out = jax.block_until_ready(out)

    ref = reference_forward(text_features, image_features, params, heads=HEADS)
    assert out.shape == (N, Lt, OUT_E)
    # The approx EUP reciprocal in the softmax denominator contributes up to
    # ~1e-3 abs error; pass approx_recip=False for the exact (<1e-5) path.
    err = float(jnp.max(jnp.abs(out - ref)))
    assert err < 1e-2, err

    print("KERNEL_OK")
</pallas_src>

<mosaic_0001>
module attributes {stable_mosaic.version = 11 : i64} {
  func.func @_fusion_kernel(%arg0: i32, %arg1: memref<8x32xf32, #tpu.memory_space<vmem>>, %arg2: memref<16x64xf32, #tpu.memory_space<vmem>>, %arg3: memref<32x32xf32, #tpu.memory_space<vmem>>, %arg4: memref<1x32xf32, #tpu.memory_space<vmem>>, %arg5: memref<64x32xf32, #tpu.memory_space<vmem>>, %arg6: memref<1x32xf32, #tpu.memory_space<vmem>>, %arg7: memref<32x32xf32, #tpu.memory_space<vmem>>, %arg8: memref<1x32xf32, #tpu.memory_space<vmem>>, %arg9: memref<8x32xf32, #tpu.memory_space<vmem>>, %arg10: memref<1x8x32xf32, #tpu.memory_space<vmem>>) attributes {dimension_semantics = [#tpu.dimension_semantics<parallel>], iteration_bounds = array<i64: 2>, scalar_prefetch = 0 : i64, scratch_operands = 1 : i64, tpu.core_type = #tpu.core_type<tc>, window_params = [{transform_indices = @transform_0, window_bounds = array<i64: 8, 32>}, {transform_indices = @transform_1, window_bounds = array<i64: 16, 64>}, {pipeline_mode = #tpu.pipeline_mode<synchronous>, transform_indices = @transform_2, window_bounds = array<i64: 32, 32>}, {pipeline_mode = #tpu.pipeline_mode<synchronous>, transform_indices = @transform_3, window_bounds = array<i64: 1, 32>}, {pipeline_mode = #tpu.pipeline_mode<synchronous>, transform_indices = @transform_4, window_bounds = array<i64: 64, 32>}, {pipeline_mode = #tpu.pipeline_mode<synchronous>, transform_indices = @transform_5, window_bounds = array<i64: 1, 32>}, {pipeline_mode = #tpu.pipeline_mode<synchronous>, transform_indices = @transform_6, window_bounds = array<i64: 32, 32>}, {pipeline_mode = #tpu.pipeline_mode<synchronous>, transform_indices = @transform_7, window_bounds = array<i64: 1, 32>}, {transform_indices = @transform_8, window_bounds = array<i64: 8, 32>}]} {
    %c0 = arith.constant 0 : index
    %c0_0 = arith.constant 0 : index
    %0 = vector.load %arg1[%c0, %c0_0] : memref<8x32xf32, #tpu.memory_space<vmem>>, vector<8x32xf32>
    %c0_1 = arith.constant 0 : index
    %c0_2 = arith.constant 0 : index
    %1 = vector.load %arg3[%c0_1, %c0_2] : memref<32x32xf32, #tpu.memory_space<vmem>>, vector<32x32xf32>
    %cst = arith.constant dense<0.000000e+00> : vector<8x32xf32>
    %2 = tpu.matmul %0, %1, %cst {dimension_numbers = #tpu.dot_dimension_numbers<[1], [0], [0], [1], [0, 0, 1, 1], [], []>} : vector<8x32xf32>, vector<32x32xf32>, vector<8x32xf32> -> vector<8x32xf32>
    %c0_3 = arith.constant 0 : index
    %c0_4 = arith.constant 0 : index
    %3 = vector.load %arg4[%c0_3, %c0_4] : memref<1x32xf32, #tpu.memory_space<vmem>>, vector<1x32xf32>
    %4 = vector.broadcast %3 : vector<1x32xf32> to vector<8x32xf32>
    %5 = arith.addf %2, %4 : vector<8x32xf32>
    %c0_5 = arith.constant 0 : index
    %c0_6 = arith.constant 0 : index
    %6 = vector.load %arg2[%c0_5, %c0_6] : memref<16x64xf32, #tpu.memory_space<vmem>>, vector<16x64xf32>
    %c0_7 = arith.constant 0 : index
    %c0_8 = arith.constant 0 : index
    %7 = vector.load %arg5[%c0_7, %c0_8] : memref<64x32xf32, #tpu.memory_space<vmem>>, vector<64x32xf32>
    %cst_9 = arith.constant dense<0.000000e+00> : vector<16x32xf32>
    %8 = tpu.matmul %6, %7, %cst_9 {dimension_numbers = #tpu.dot_dimension_numbers<[1], [0], [0], [1], [0, 0, 1, 1], [], []>} : vector<16x64xf32>, vector<64x32xf32>, vector<16x32xf32> -> vector<16x32xf32>
    %c0_10 = arith.constant 0 : index
    %c0_11 = arith.constant 0 : index
    %9 = vector.load %arg6[%c0_10, %c0_11] : memref<1x32xf32, #tpu.memory_space<vmem>>, vector<1x32xf32>
    %10 = vector.broadcast %9 : vector<1x32xf32> to vector<16x32xf32>
    %11 = arith.addf %8, %10 : vector<16x32xf32>
    %12 = vector.shape_cast %5 : vector<8x32xf32> to vector<1x8x32xf32>
    %13 = vector.shape_cast %11 : vector<16x32xf32> to vector<1x16x32xf32>
    %14 = vector.extract_strided_slice %12 {offsets = [0, 0, 0], sizes = [1, 8, 8], strides = [1, 1, 1]} : vector<1x8x32xf32> to vector<1x8x8xf32>
    %15 = vector.extract_strided_slice %13 {offsets = [0, 0, 0], sizes = [1, 16, 8], strides = [1, 1, 1]} : vector<1x16x32xf32> to vector<1x16x8xf32>
    "tpu.trace_start"() <{level = 10 : i32, message = "nqd,nkd->nqk"}> : () -> ()
    %cst_12 = arith.constant dense<0.000000e+00> : vector<1x8x16xf32>
    %16 = tpu.matmul %14, %15, %cst_12 {dimension_numbers = #tpu.dot_dimension_numbers<[2], [2], [1], [1], [0, 0, 0, 1, 1, 1], [0], [0]>} : vector<1x8x8xf32>, vector<1x16x8xf32>, vector<1x8x16xf32> -> vector<1x8x16xf32>
    "tpu.trace_stop"() : () -> ()
    %cst_13 = arith.constant dense<0xFF800000> : vector<1x8xf32>
    %17 = vector.multi_reduction <maximumf>, %16, %cst_13 [2] : vector<1x8x16xf32> to vector<1x8xf32>
    %18 = vector.shape_cast %17 : vector<1x8xf32> to vector<1x8x1xf32>
    %19 = vector.broadcast %18 : vector<1x8x1xf32> to vector<1x8x16xf32>
    %20 = arith.subf %16, %19 : vector<1x8x16xf32>
    %21 = math.exp %20 : vector<1x8x16xf32>
    %cst_14 = arith.constant dense<0.000000e+00> : vector<1x8xf32>
    %22 = vector.multi_reduction <add>, %21, %cst_14 [2] : vector<1x8x16xf32> to vector<1x8xf32>
    %23 = vector.shape_cast %22 : vector<1x8xf32> to vector<1x8x1xf32>
    %24 = tpu.reciprocal %23 {approx = true} : vector<1x8x1xf32> -> vector<1x8x1xf32>
    %25 = vector.broadcast %24 : vector<1x8x1xf32> to vector<1x8x16xf32>
    %26 = arith.mulf %21, %25 : vector<1x8x16xf32>
    "tpu.trace_start"() <{level = 10 : i32, message = "nqk,nkd->nqd"}> : () -> ()
    %cst_15 = arith.constant dense<0.000000e+00> : vector<1x8x8xf32>
    %27 = tpu.matmul %26, %15, %cst_15 {dimension_numbers = #tpu.dot_dimension_numbers<[2], [1], [1], [2], [0, 0, 0, 1, 1, 2], [0], [0]>} : vector<1x8x16xf32>, vector<1x16x8xf32>, vector<1x8x8xf32> -> vector<1x8x8xf32>
    "tpu.trace_stop"() : () -> ()
    %c0_16 = arith.constant 0 : index
    %c0_17 = arith.constant 0 : index
    %c0_18 = arith.constant 0 : index
    %28 = vector.load %arg10[%c0_16, %c0_17, %c0_18] : memref<1x8x32xf32, #tpu.memory_space<vmem>>, vector<1x8x8xf32>
    tpu.vector_store %arg10[%c0_16, %c0_17, %c0_18], %27 {strides = array<i32>} : memref<1x8x32xf32, #tpu.memory_space<vmem>>, vector<1x8x8xf32>,
    %29 = vector.extract_strided_slice %12 {offsets = [0, 0, 8], sizes = [1, 8, 8], strides = [1, 1, 1]} : vector<1x8x32xf32> to vector<1x8x8xf32>
    %30 = vector.extract_strided_slice %13 {offsets = [0, 0, 8], sizes = [1, 16, 8], strides = [1, 1, 1]} : vector<1x16x32xf32> to vector<1x16x8xf32>
    "tpu.trace_start"() <{level = 10 : i32, message = "nqd,nkd->nqk"}> : () -> ()
    %cst_19 = arith.constant dense<0.000000e+00> : vector<1x8x16xf32>
    %31 = tpu.matmul %29, %30, %cst_19 {dimension_numbers = #tpu.dot_dimension_numbers<[2], [2], [1], [1], [0, 0, 0, 1, 1, 1], [0], [0]>} : vector<1x8x8xf32>, vector<1x16x8xf32>, vector<1x8x16xf32> -> vector<1x8x16xf32>
    "tpu.trace_stop"() : () -> ()
    %cst_20 = arith.constant dense<0xFF800000> : vector<1x8xf32>
    %32 = vector.multi_reduction <maximumf>, %31, %cst_20 [2] : vector<1x8x16xf32> to vector<1x8xf32>
    %33 = vector.shape_cast %32 : vector<1x8xf32> to vector<1x8x1xf32>
    %34 = vector.broadcast %33 : vector<1x8x1xf32> to vector<1x8x16xf32>
    %35 = arith.subf %31, %34 : vector<1x8x16xf32>
    %36 = math.exp %35 : vector<1x8x16xf32>
    %cst_21 = arith.constant dense<0.000000e+00> : vector<1x8xf32>
    %37 = vector.multi_reduction <add>, %36, %cst_21 [2] : vector<1x8x16xf32> to vector<1x8xf32>
    %38 = vector.shape_cast %37 : vector<1x8xf32> to vector<1x8x1xf32>
    %39 = tpu.reciprocal %38 {approx = true} : vector<1x8x1xf32> -> vector<1x8x1xf32>
    %40 = vector.broadcast %39 : vector<1x8x1xf32> to vector<1x8x16xf32>
    %41 = arith.mulf %36, %40 : vector<1x8x16xf32>
    "tpu.trace_start"() <{level = 10 : i32, message = "nqk,nkd->nqd"}> : () -> ()
    %cst_22 = arith.constant dense<0.000000e+00> : vector<1x8x8xf32>
    %42 = tpu.matmul %41, %30, %cst_22 {dimension_numbers = #tpu.dot_dimension_numbers<[2], [1], [1], [2], [0, 0, 0, 1, 1, 2], [0], [0]>} : vector<1x8x16xf32>, vector<1x16x8xf32>, vector<1x8x8xf32> -> vector<1x8x8xf32>
    "tpu.trace_stop"() : () -> ()
    %c0_23 = arith.constant 0 : index
    %c0_24 = arith.constant 0 : index
    %c8 = arith.constant 8 : index
    %43 = vector.load %arg10[%c0_23, %c0_24, %c8] : memref<1x8x32xf32, #tpu.memory_space<vmem>>, vector<1x8x8xf32>
    tpu.vector_store %arg10[%c0_23, %c0_24, %c8], %42 {strides = array<i32>} : memref<1x8x32xf32, #tpu.memory_space<vmem>>, vector<1x8x8xf32>,
    %44 = vector.extract_strided_slice %12 {offsets = [0, 0, 16], sizes = [1, 8, 8], strides = [1, 1, 1]} : vector<1x8x32xf32> to vector<1x8x8xf32>
    %45 = vector.extract_strided_slice %13 {offsets = [0, 0, 16], sizes = [1, 16, 8], strides = [1, 1, 1]} : vector<1x16x32xf32> to vector<1x16x8xf32>
    "tpu.trace_start"() <{level = 10 : i32, message = "nqd,nkd->nqk"}> : () -> ()
    %cst_25 = arith.constant dense<0.000000e+00> : vector<1x8x16xf32>
    %46 = tpu.matmul %44, %45, %cst_25 {dimension_numbers = #tpu.dot_dimension_numbers<[2], [2], [1], [1], [0, 0, 0, 1, 1, 1], [0], [0]>} : vector<1x8x8xf32>, vector<1x16x8xf32>, vector<1x8x16xf32> -> vector<1x8x16xf32>
    "tpu.trace_stop"() : () -> ()
    %cst_26 = arith.constant dense<0xFF800000> : vector<1x8xf32>
    %47 = vector.multi_reduction <maximumf>, %46, %cst_26 [2] : vector<1x8x16xf32> to vector<1x8xf32>
    %48 = vector.shape_cast %47 : vector<1x8xf32> to vector<1x8x1xf32>
    %49 = vector.broadcast %48 : vector<1x8x1xf32> to vector<1x8x16xf32>
    %50 = arith.subf %46, %49 : vector<1x8x16xf32>
    %51 = math.exp %50 : vector<1x8x16xf32>
    %cst_27 = arith.constant dense<0.000000e+00> : vector<1x8xf32>
    %52 = vector.multi_reduction <add>, %51, %cst_27 [2] : vector<1x8x16xf32> to vector<1x8xf32>
    %53 = vector.shape_cast %52 : vector<1x8xf32> to vector<1x8x1xf32>
    %54 = tpu.reciprocal %53 {approx = true} : vector<1x8x1xf32> -> vector<1x8x1xf32>
    %55 = vector.broadcast %54 : vector<1x8x1xf32> to vector<1x8x16xf32>
    %56 = arith.mulf %51, %55 : vector<1x8x16xf32>
    "tpu.trace_start"() <{level = 10 : i32, message = "nqk,nkd->nqd"}> : () -> ()
    %cst_28 = arith.constant dense<0.000000e+00> : vector<1x8x8xf32>
    %57 = tpu.matmul %56, %45, %cst_28 {dimension_numbers = #tpu.dot_dimension_numbers<[2], [1], [1], [2], [0, 0, 0, 1, 1, 2], [0], [0]>} : vector<1x8x16xf32>, vector<1x16x8xf32>, vector<1x8x8xf32> -> vector<1x8x8xf32>
    "tpu.trace_stop"() : () -> ()
    %c0_29 = arith.constant 0 : index
    %c0_30 = arith.constant 0 : index
    %c16 = arith.constant 16 : index
    %58 = vector.load %arg10[%c0_29, %c0_30, %c16] : memref<1x8x32xf32, #tpu.memory_space<vmem>>, vector<1x8x8xf32>
    tpu.vector_store %arg10[%c0_29, %c0_30, %c16], %57 {strides = array<i32>} : memref<1x8x32xf32, #tpu.memory_space<vmem>>, vector<1x8x8xf32>,
    %59 = vector.extract_strided_slice %12 {offsets = [0, 0, 24], sizes = [1, 8, 8], strides = [1, 1, 1]} : vector<1x8x32xf32> to vector<1x8x8xf32>
    %60 = vector.extract_strided_slice %13 {offsets = [0, 0, 24], sizes = [1, 16, 8], strides = [1, 1, 1]} : vector<1x16x32xf32> to vector<1x16x8xf32>
    "tpu.trace_start"() <{level = 10 : i32, message = "nqd,nkd->nqk"}> : () -> ()
    %cst_31 = arith.constant dense<0.000000e+00> : vector<1x8x16xf32>
    %61 = tpu.matmul %59, %60, %cst_31 {dimension_numbers = #tpu.dot_dimension_numbers<[2], [2], [1], [1], [0, 0, 0, 1, 1, 1], [0], [0]>} : vector<1x8x8xf32>, vector<1x16x8xf32>, vector<1x8x16xf32> -> vector<1x8x16xf32>
    "tpu.trace_stop"() : () -> ()
    %cst_32 = arith.constant dense<0xFF800000> : vector<1x8xf32>
    %62 = vector.multi_reduction <maximumf>, %61, %cst_32 [2] : vector<1x8x16xf32> to vector<1x8xf32>
    %63 = vector.shape_cast %62 : vector<1x8xf32> to vector<1x8x1xf32>
    %64 = vector.broadcast %63 : vector<1x8x1xf32> to vector<1x8x16xf32>
    %65 = arith.subf %61, %64 : vector<1x8x16xf32>
    %66 = math.exp %65 : vector<1x8x16xf32>
    %cst_33 = arith.constant dense<0.000000e+00> : vector<1x8xf32>
    %67 = vector.multi_reduction <add>, %66, %cst_33 [2] : vector<1x8x16xf32> to vector<1x8xf32>
    %68 = vector.shape_cast %67 : vector<1x8xf32> to vector<1x8x1xf32>
    %69 = tpu.reciprocal %68 {approx = true} : vector<1x8x1xf32> -> vector<1x8x1xf32>
    %70 = vector.broadcast %69 : vector<1x8x1xf32> to vector<1x8x16xf32>
    %71 = arith.mulf %66, %70 : vector<1x8x16xf32>
    "tpu.trace_start"() <{level = 10 : i32, message = "nqk,nkd->nqd"}> : () -> ()
    %cst_34 = arith.constant dense<0.000000e+00> : vector<1x8x8xf32>
    %72 = tpu.matmul %71, %60, %cst_34 {dimension_numbers = #tpu.dot_dimension_numbers<[2], [1], [1], [2], [0, 0, 0, 1, 1, 2], [0], [0]>} : vector<1x8x16xf32>, vector<1x16x8xf32>, vector<1x8x8xf32> -> vector<1x8x8xf32>
    "tpu.trace_stop"() : () -> ()
    %c0_35 = arith.constant 0 : index
    %c0_36 = arith.constant 0 : index
    %c24 = arith.constant 24 : index
    %73 = vector.load %arg10[%c0_35, %c0_36, %c24] : memref<1x8x32xf32, #tpu.memory_space<vmem>>, vector<1x8x8xf32>
    tpu.vector_store %arg10[%c0_35, %c0_36, %c24], %72 {strides = array<i32>} : memref<1x8x32xf32, #tpu.memory_space<vmem>>, vector<1x8x8xf32>,
    %c0_37 = arith.constant 0 : index
    %c0_38 = arith.constant 0 : index
    %c0_39 = arith.constant 0 : index
    %74 = vector.load %arg10[%c0_37, %c0_38, %c0_39] : memref<1x8x32xf32, #tpu.memory_space<vmem>>, vector<1x8x32xf32>
    %75 = vector.shape_cast %74 : vector<1x8x32xf32> to vector<8x32xf32>
    %c0_40 = arith.constant 0 : index
    %c0_41 = arith.constant 0 : index
    %76 = vector.load %arg7[%c0_40, %c0_41] : memref<32x32xf32, #tpu.memory_space<vmem>>, vector<32x32xf32>
    %cst_42 = arith.constant dense<0.000000e+00> : vector<8x32xf32>
    %77 = tpu.matmul %75, %76, %cst_42 {dimension_numbers = #tpu.dot_dimension_numbers<[1], [0], [0], [1], [0, 0, 1, 1], [], []>} : vector<8x32xf32>, vector<32x32xf32>, vector<8x32xf32> -> vector<8x32xf32>
    %c0_43 = arith.constant 0 : index
    %c0_44 = arith.constant 0 : index
    %78 = vector.load %arg8[%c0_43, %c0_44] : memref<1x32xf32, #tpu.memory_space<vmem>>, vector<1x32xf32>
    %79 = vector.broadcast %78 : vector<1x32xf32> to vector<8x32xf32>
    %80 = arith.addf %77, %79 : vector<8x32xf32>
    %c0_45 = arith.constant 0 : index
    %c0_46 = arith.constant 0 : index
    %81 = vector.load %arg9[%c0_45, %c0_46] : memref<8x32xf32, #tpu.memory_space<vmem>>, vector<8x32xf32>
    tpu.vector_store %arg9[%c0_45, %c0_46], %80 {strides = array<i32>} : memref<8x32xf32, #tpu.memory_space<vmem>>, vector<8x32xf32>,
    return
  }
  func.func @transform_0(%arg0: i32) -> (i32, i32) {
    %c0_i32 = arith.constant 0 : i32
    %c0_i32_0 = arith.constant 0 : i32
    return %arg0, %c0_i32 : i32, i32
  }
  func.func @transform_1(%arg0: i32) -> (i32, i32) {
    %c0_i32 = arith.constant 0 : i32
    %c0_i32_0 = arith.constant 0 : i32
    return %arg0, %c0_i32 : i32, i32
  }
  func.func @transform_2(%arg0: i32) -> (i32, i32) {
    %c0_i32 = arith.constant 0 : i32
    %c0_i32_0 = arith.constant 0 : i32
    %c0_i32_1 = arith.constant 0 : i32
    return %c0_i32, %c0_i32_0 : i32, i32
  }
  func.func @transform_3(%arg0: i32) -> (i32, i32) {
    %c0_i32 = arith.constant 0 : i32
    %c0_i32_0 = arith.constant 0 : i32
    %c0_i32_1 = arith.constant 0 : i32
    return %c0_i32, %c0_i32_0 : i32, i32
  }
  func.func @transform_4(%arg0: i32) -> (i32, i32) {
    %c0_i32 = arith.constant 0 : i32
    %c0_i32_0 = arith.constant 0 : i32
    %c0_i32_1 = arith.constant 0 : i32
    return %c0_i32, %c0_i32_0 : i32, i32
  }
  func.func @transform_5(%arg0: i32) -> (i32, i32) {
    %c0_i32 = arith.constant 0 : i32
    %c0_i32_0 = arith.constant 0 : i32
    %c0_i32_1 = arith.constant 0 : i32
    return %c0_i32, %c0_i32_0 : i32, i32
  }
  func.func @transform_6(%arg0: i32) -> (i32, i32) {
    %c0_i32 = arith.constant 0 : i32
    %c0_i32_0 = arith.constant 0 : i32
    %c0_i32_1 = arith.constant 0 : i32
    return %c0_i32, %c0_i32_0 : i32, i32
  }
  func.func @transform_7(%arg0: i32) -> (i32, i32) {
    %c0_i32 = arith.constant 0 : i32
    %c0_i32_0 = arith.constant 0 : i32
    %c0_i32_1 = arith.constant 0 : i32
    return %c0_i32, %c0_i32_0 : i32, i32
  }
  func.func @transform_8(%arg0: i32) -> (i32, i32) {
    %c0_i32 = arith.constant 0 : i32
    %c0_i32_0 = arith.constant 0 : i32
    return %arg0, %c0_i32 : i32, i32
  }
}

module attributes {stable_mosaic.version = 11 : i64} {
  func.func @_fusion_kernel(%arg0: i32, %arg1: memref<8x32xf32, #tpu.memory_space<vmem>>, %arg2: memref<16x64xf32, #tpu.memory_space<vmem>>, %arg3: memref<32x32xf32, #tpu.memory_space<vmem>>, %arg4: memref<1x32xf32, #tpu.memory_space<vmem>>, %arg5: memref<64x32xf32, #tpu.memory_space<vmem>>, %arg6: memref<1x32xf32, #tpu.memory_space<vmem>>, %arg7: memref<32x32xf32, #tpu.memory_space<vmem>>, %arg8: memref<1x32xf32, #tpu.memory_space<vmem>>, %arg9: memref<8x32xf32, #tpu.memory_space<vmem>>, %arg10: memref<1x8x32xf32, #tpu.memory_space<vmem>>) attributes {dimension_semantics = [#tpu.dimension_semantics<parallel>], iteration_bounds = array<i64: 2>, scalar_prefetch = 0 : i64, scratch_operands = 1 : i64, tpu.core_type = #tpu.core_type<tc>, window_params = [{transform_indices = @transform_0, window_bounds = array<i64: 8, 32>}, {transform_indices = @transform_1, window_bounds = array<i64: 16, 64>}, {pipeline_mode = #tpu.pipeline_mode<synchronous>, transform_indices = @transform_2, window_bounds = array<i64: 32, 32>}, {pipeline_mode = #tpu.pipeline_mode<synchronous>, transform_indices = @transform_3, window_bounds = array<i64: 1, 32>}, {pipeline_mode = #tpu.pipeline_mode<synchronous>, transform_indices = @transform_4, window_bounds = array<i64: 64, 32>}, {pipeline_mode = #tpu.pipeline_mode<synchronous>, transform_indices = @transform_5, window_bounds = array<i64: 1, 32>}, {pipeline_mode = #tpu.pipeline_mode<synchronous>, transform_indices = @transform_6, window_bounds = array<i64: 32, 32>}, {pipeline_mode = #tpu.pipeline_mode<synchronous>, transform_indices = @transform_7, window_bounds = array<i64: 1, 32>}, {transform_indices = @transform_8, window_bounds = array<i64: 8, 32>}]} {
    %c0 = arith.constant 0 : index
    %c0_0 = arith.constant 0 : index
    %0 = vector.load %arg1[%c0, %c0_0] : memref<8x32xf32, #tpu.memory_space<vmem>>, vector<8x32xf32>
    %c0_1 = arith.constant 0 : index
    %c0_2 = arith.constant 0 : index
    %1 = vector.load %arg3[%c0_1, %c0_2] : memref<32x32xf32, #tpu.memory_space<vmem>>, vector<32x32xf32>
    %cst = arith.constant dense<0.000000e+00> : vector<8x32xf32>
    %2 = tpu.matmul %0, %1, %cst {dimension_numbers = #tpu.dot_dimension_numbers<[1], [0], [0], [1], [0, 0, 1, 1], [], []>} : vector<8x32xf32>, vector<32x32xf32>, vector<8x32xf32> -> vector<8x32xf32>
    %c0_3 = arith.constant 0 : index
    %c0_4 = arith.constant 0 : index
    %3 = vector.load %arg4[%c0_3, %c0_4] : memref<1x32xf32, #tpu.memory_space<vmem>>, vector<1x32xf32>
    %4 = vector.broadcast %3 : vector<1x32xf32> to vector<8x32xf32>
    %5 = arith.addf %2, %4 : vector<8x32xf32>
    %c0_5 = arith.constant 0 : index
    %c0_6 = arith.constant 0 : index
    %6 = vector.load %arg2[%c0_5, %c0_6] : memref<16x64xf32, #tpu.memory_space<vmem>>, vector<16x64xf32>
    %c0_7 = arith.constant 0 : index
    %c0_8 = arith.constant 0 : index
    %7 = vector.load %arg5[%c0_7, %c0_8] : memref<64x32xf32, #tpu.memory_space<vmem>>, vector<64x32xf32>
    %cst_9 = arith.constant dense<0.000000e+00> : vector<16x32xf32>
    %8 = tpu.matmul %6, %7, %cst_9 {dimension_numbers = #tpu.dot_dimension_numbers<[1], [0], [0], [1], [0, 0, 1, 1], [], []>} : vector<16x64xf32>, vector<64x32xf32>, vector<16x32xf32> -> vector<16x32xf32>
    %c0_10 = arith.constant 0 : index
    %c0_11 = arith.constant 0 : index
    %9 = vector.load %arg6[%c0_10, %c0_11] : memref<1x32xf32, #tpu.memory_space<vmem>>, vector<1x32xf32>
    %10 = vector.broadcast %9 : vector<1x32xf32> to vector<16x32xf32>
    %11 = arith.addf %8, %10 : vector<16x32xf32>
    %12 = vector.shape_cast %5 : vector<8x32xf32> to vector<1x8x32xf32>
    %13 = vector.shape_cast %11 : vector<16x32xf32> to vector<1x16x32xf32>
    %14 = vector.extract_strided_slice %12 {offsets = [0, 0, 0], sizes = [1, 8, 8], strides = [1, 1, 1]} : vector<1x8x32xf32> to vector<1x8x8xf32>
    %15 = vector.extract_strided_slice %13 {offsets = [0, 0, 0], sizes = [1, 16, 8], strides = [1, 1, 1]} : vector<1x16x32xf32> to vector<1x16x8xf32>
    "tpu.trace_start"() <{level = 10 : i32, message = "nqd,nkd->nqk"}> : () -> ()
    %cst_12 = arith.constant dense<0.000000e+00> : vector<1x8x16xf32>
    %16 = tpu.matmul %14, %15, %cst_12 {dimension_numbers = #tpu.dot_dimension_numbers<[2], [2], [1], [1], [0, 0, 0, 1, 1, 1], [0], [0]>} : vector<1x8x8xf32>, vector<1x16x8xf32>, vector<1x8x16xf32> -> vector<1x8x16xf32>
    "tpu.trace_stop"() : () -> ()
    %cst_13 = arith.constant dense<0xFF800000> : vector<1x8xf32>
    %17 = vector.multi_reduction <maximumf>, %16, %cst_13 [2] : vector<1x8x16xf32> to vector<1x8xf32>
    %18 = vector.shape_cast %17 : vector<1x8xf32> to vector<1x8x1xf32>
    %19 = vector.broadcast %18 : vector<1x8x1xf32> to vector<1x8x16xf32>
    %20 = arith.subf %16, %19 : vector<1x8x16xf32>
    %21 = math.exp %20 : vector<1x8x16xf32>
    %cst_14 = arith.constant dense<0.000000e+00> : vector<1x8xf32>
    %22 = vector.multi_reduction <add>, %21, %cst_14 [2] : vector<1x8x16xf32> to vector<1x8xf32>
    %23 = vector.shape_cast %22 : vector<1x8xf32> to vector<1x8x1xf32>
    %24 = tpu.reciprocal %23 {approx = true} : vector<1x8x1xf32> -> vector<1x8x1xf32>
    %25 = vector.broadcast %24 : vector<1x8x1xf32> to vector<1x8x16xf32>
    %26 = arith.mulf %21, %25 : vector<1x8x16xf32>
    "tpu.trace_start"() <{level = 10 : i32, message = "nqk,nkd->nqd"}> : () -> ()
    %cst_15 = arith.constant dense<0.000000e+00> : vector<1x8x8xf32>
    %27 = tpu.matmul %26, %15, %cst_15 {dimension_numbers = #tpu.dot_dimension_numbers<[2], [1], [1], [2], [0, 0, 0, 1, 1, 2], [0], [0]>} : vector<1x8x16xf32>, vector<1x16x8xf32>, vector<1x8x8xf32> -> vector<1x8x8xf32>
    "tpu.trace_stop"() : () -> ()
    %c0_16 = arith.constant 0 : index
    %c0_17 = arith.constant 0 : index
    %c0_18 = arith.constant 0 : index
    %28 = vector.load %arg10[%c0_16, %c0_17, %c0_18] : memref<1x8x32xf32, #tpu.memory_space<vmem>>, vector<1x8x8xf32>
    tpu.vector_store %arg10[%c0_16, %c0_17, %c0_18], %27 {strides = array<i32>} : memref<1x8x32xf32, #tpu.memory_space<vmem>>, vector<1x8x8xf32>,
    %29 = vector.extract_strided_slice %12 {offsets = [0, 0, 8], sizes = [1, 8, 8], strides = [1, 1, 1]} : vector<1x8x32xf32> to vector<1x8x8xf32>
    %30 = vector.extract_strided_slice %13 {offsets = [0, 0, 8], sizes = [1, 16, 8], strides = [1, 1, 1]} : vector<1x16x32xf32> to vector<1x16x8xf32>
    "tpu.trace_start"() <{level = 10 : i32, message = "nqd,nkd->nqk"}> : () -> ()
    %cst_19 = arith.constant dense<0.000000e+00> : vector<1x8x16xf32>
    %31 = tpu.matmul %29, %30, %cst_19 {dimension_numbers = #tpu.dot_dimension_numbers<[2], [2], [1], [1], [0, 0, 0, 1, 1, 1], [0], [0]>} : vector<1x8x8xf32>, vector<1x16x8xf32>, vector<1x8x16xf32> -> vector<1x8x16xf32>
    "tpu.trace_stop"() : () -> ()
    %cst_20 = arith.constant dense<0xFF800000> : vector<1x8xf32>
    %32 = vector.multi_reduction <maximumf>, %31, %cst_20 [2] : vector<1x8x16xf32> to vector<1x8xf32>
    %33 = vector.shape_cast %32 : vector<1x8xf32> to vector<1x8x1xf32>
    %34 = vector.broadcast %33 : vector<1x8x1xf32> to vector<1x8x16xf32>
    %35 = arith.subf %31, %34 : vector<1x8x16xf32>
    %36 = math.exp %35 : vector<1x8x16xf32>
    %cst_21 = arith.constant dense<0.000000e+00> : vector<1x8xf32>
    %37 = vector.multi_reduction <add>, %36, %cst_21 [2] : vector<1x8x16xf32> to vector<1x8xf32>
    %38 = vector.shape_cast %37 : vector<1x8xf32> to vector<1x8x1xf32>
    %39 = tpu.reciprocal %38 {approx = true} : vector<1x8x1xf32> -> vector<1x8x1xf32>
    %40 = vector.broadcast %39 : vector<1x8x1xf32> to vector<1x8x16xf32>
    %41 = arith.mulf %36, %40 : vector<1x8x16xf32>
    "tpu.trace_start"() <{level = 10 : i32, message = "nqk,nkd->nqd"}> : () -> ()
    %cst_22 = arith.constant dense<0.000000e+00> : vector<1x8x8xf32>
    %42 = tpu.matmul %41, %30, %cst_22 {dimension_numbers = #tpu.dot_dimension_numbers<[2], [1], [1], [2], [0, 0, 0, 1, 1, 2], [0], [0]>} : vector<1x8x16xf32>, vector<1x16x8xf32>, vector<1x8x8xf32> -> vector<1x8x8xf32>
    "tpu.trace_stop"() : () -> ()
    %c0_23 = arith.constant 0 : index
    %c0_24 = arith.constant 0 : index
    %c8 = arith.constant 8 : index
    %43 = vector.load %arg10[%c0_23, %c0_24, %c8] : memref<1x8x32xf32, #tpu.memory_space<vmem>>, vector<1x8x8xf32>
    tpu.vector_store %arg10[%c0_23, %c0_24, %c8], %42 {strides = array<i32>} : memref<1x8x32xf32, #tpu.memory_space<vmem>>, vector<1x8x8xf32>,
    %44 = vector.extract_strided_slice %12 {offsets = [0, 0, 16], sizes = [1, 8, 8], strides = [1, 1, 1]} : vector<1x8x32xf32> to vector<1x8x8xf32>
    %45 = vector.extract_strided_slice %13 {offsets = [0, 0, 16], sizes = [1, 16, 8], strides = [1, 1, 1]} : vector<1x16x32xf32> to vector<1x16x8xf32>
    "tpu.trace_start"() <{level = 10 : i32, message = "nqd,nkd->nqk"}> : () -> ()
    %cst_25 = arith.constant dense<0.000000e+00> : vector<1x8x16xf32>
    %46 = tpu.matmul %44, %45, %cst_25 {dimension_numbers = #tpu.dot_dimension_numbers<[2], [2], [1], [1], [0, 0, 0, 1, 1, 1], [0], [0]>} : vector<1x8x8xf32>, vector<1x16x8xf32>, vector<1x8x16xf32> -> vector<1x8x16xf32>
    "tpu.trace_stop"() : () -> ()
    %cst_26 = arith.constant dense<0xFF800000> : vector<1x8xf32>
    %47 = vector.multi_reduction <maximumf>, %46, %cst_26 [2] : vector<1x8x16xf32> to vector<1x8xf32>
    %48 = vector.shape_cast %47 : vector<1x8xf32> to vector<1x8x1xf32>
    %49 = vector.broadcast %48 : vector<1x8x1xf32> to vector<1x8x16xf32>
    %50 = arith.subf %46, %49 : vector<1x8x16xf32>
    %51 = math.exp %50 : vector<1x8x16xf32>
    %cst_27 = arith.constant dense<0.000000e+00> : vector<1x8xf32>
    %52 = vector.multi_reduction <add>, %51, %cst_27 [2] : vector<1x8x16xf32> to vector<1x8xf32>
    %53 = vector.shape_cast %52 : vector<1x8xf32> to vector<1x8x1xf32>
    %54 = tpu.reciprocal %53 {approx = true} : vector<1x8x1xf32> -> vector<1x8x1xf32>
    %55 = vector.broadcast %54 : vector<1x8x1xf32> to vector<1x8x16xf32>
    %56 = arith.mulf %51, %55 : vector<1x8x16xf32>
    "tpu.trace_start"() <{level = 10 : i32, message = "nqk,nkd->nqd"}> : () -> ()
    %cst_28 = arith.constant dense<0.000000e+00> : vector<1x8x8xf32>
    %57 = tpu.matmul %56, %45, %cst_28 {dimension_numbers = #tpu.dot_dimension_numbers<[2], [1], [1], [2], [0, 0, 0, 1, 1, 2], [0], [0]>} : vector<1x8x16xf32>, vector<1x16x8xf32>, vector<1x8x8xf32> -> vector<1x8x8xf32>
    "tpu.trace_stop"() : () -> ()
    %c0_29 = arith.constant 0 : index
    %c0_30 = arith.constant 0 : index
    %c16 = arith.constant 16 : index
    %58 = vector.load %arg10[%c0_29, %c0_30, %c16] : memref<1x8x32xf32, #tpu.memory_space<vmem>>, vector<1x8x8xf32>
    tpu.vector_store %arg10[%c0_29, %c0_30, %c16], %57 {strides = array<i32>} : memref<1x8x32xf32, #tpu.memory_space<vmem>>, vector<1x8x8xf32>,
    %59 = vector.extract_strided_slice %12 {offsets = [0, 0, 24], sizes = [1, 8, 8], strides = [1, 1, 1]} : vector<1x8x32xf32> to vector<1x8x8xf32>
    %60 = vector.extract_strided_slice %13 {offsets = [0, 0, 24], sizes = [1, 16, 8], strides = [1, 1, 1]} : vector<1x16x32xf32> to vector<1x16x8xf32>
    "tpu.trace_start"() <{level = 10 : i32, message = "nqd,nkd->nqk"}> : () -> ()
    %cst_31 = arith.constant dense<0.000000e+00> : vector<1x8x16xf32>
    %61 = tpu.matmul %59, %60, %cst_31 {dimension_numbers = #tpu.dot_dimension_numbers<[2], [2], [1], [1], [0, 0, 0, 1, 1, 1], [0], [0]>} : vector<1x8x8xf32>, vector<1x16x8xf32>, vector<1x8x16xf32> -> vector<1x8x16xf32>
    "tpu.trace_stop"() : () -> ()
    %cst_32 = arith.constant dense<0xFF800000> : vector<1x8xf32>
    %62 = vector.multi_reduction <maximumf>, %61, %cst_32 [2] : vector<1x8x16xf32> to vector<1x8xf32>
    %63 = vector.shape_cast %62 : vector<1x8xf32> to vector<1x8x1xf32>
    %64 = vector.broadcast %63 : vector<1x8x1xf32> to vector<1x8x16xf32>
    %65 = arith.subf %61, %64 : vector<1x8x16xf32>
    %66 = math.exp %65 : vector<1x8x16xf32>
    %cst_33 = arith.constant dense<0.000000e+00> : vector<1x8xf32>
    %67 = vector.multi_reduction <add>, %66, %cst_33 [2] : vector<1x8x16xf32> to vector<1x8xf32>
    %68 = vector.shape_cast %67 : vector<1x8xf32> to vector<1x8x1xf32>
    %69 = tpu.reciprocal %68 {approx = true} : vector<1x8x1xf32> -> vector<1x8x1xf32>
    %70 = vector.broadcast %69 : vector<1x8x1xf32> to vector<1x8x16xf32>
    %71 = arith.mulf %66, %70 : vector<1x8x16xf32>
    "tpu.trace_start"() <{level = 10 : i32, message = "nqk,nkd->nqd"}> : () -> ()
    %cst_34 = arith.constant dense<0.000000e+00> : vector<1x8x8xf32>
    %72 = tpu.matmul %71, %60, %cst_34 {dimension_numbers = #tpu.dot_dimension_numbers<[2], [1], [1], [2], [0, 0, 0, 1, 1, 2], [0], [0]>} : vector<1x8x16xf32>, vector<1x16x8xf32>, vector<1x8x8xf32> -> vector<1x8x8xf32>
    "tpu.trace_stop"() : () -> ()
    %c0_35 = arith.constant 0 : index
    %c0_36 = arith.constant 0 : index
    %c24 = arith.constant 24 : index
    %73 = vector.load %arg10[%c0_35, %c0_36, %c24] : memref<1x8x32xf32, #tpu.memory_space<vmem>>, vector<1x8x8xf32>
    tpu.vector_store %arg10[%c0_35, %c0_36, %c24], %72 {strides = array<i32>} : memref<1x8x32xf32, #tpu.memory_space<vmem>>, vector<1x8x8xf32>,
    %c0_37 = arith.constant 0 : index
    %c0_38 = arith.constant 0 : index
    %c0_39 = arith.constant 0 : index
    %74 = vector.load %arg10[%c0_37, %c0_38, %c0_39] : memref<1x8x32xf32, #tpu.memory_space<vmem>>, vector<1x8x32xf32>
    %75 = vector.shape_cast %74 : vector<1x8x32xf32> to vector<8x32xf32>
    %c0_40 = arith.constant 0 : index
    %c0_41 = arith.constant 0 : index
    %76 = vector.load %arg7[%c0_40, %c0_41] : memref<32x32xf32, #tpu.memory_space<vmem>>, vector<32x32xf32>
    %cst_42 = arith.constant dense<0.000000e+00> : vector<8x32xf32>
    %77 = tpu.matmul %75, %76, %cst_42 {dimension_numbers = #tpu.dot_dimension_numbers<[1], [0], [0], [1], [0, 0, 1, 1], [], []>} : vector<8x32xf32>, vector<32x32xf32>, vector<8x32xf32> -> vector<8x32xf32>
    %c0_43 = arith.constant 0 : index
    %c0_44 = arith.constant 0 : index
    %78 = vector.load %arg8[%c0_43, %c0_44] : memref<1x32xf32, #tpu.memory_space<vmem>>, vector<1x32xf32>
    %79 = vector.broadcast %78 : vector<1x32xf32> to vector<8x32xf32>
    %80 = arith.addf %77, %79 : vector<8x32xf32>
    %c0_45 = arith.constant 0 : index
    %c0_46 = arith.constant 0 : index
    %81 = vector.load %arg9[%c0_45, %c0_46] : memref<8x32xf32, #tpu.memory_space<vmem>>, vector<8x32xf32>
    tpu.vector_store %arg9[%c0_45, %c0_46], %80 {strides = array<i32>} : memref<8x32xf32, #tpu.memory_space<vmem>>, vector<8x32xf32>,
    return
  }
  func.func @transform_0(%arg0: i32) -> (i32, i32) {
    %c0_i32 = arith.constant 0 : i32
    %c0_i32_0 = arith.constant 0 : i32
    return %arg0, %c0_i32 : i32, i32
  }
  func.func @transform_1(%arg0: i32) -> (i32, i32) {
    %c0_i32 = arith.constant 0 : i32
    %c0_i32_0 = arith.constant 0 : i32
    return %arg0, %c0_i32 : i32, i32
  }
  func.func @transform_2(%arg0: i32) -> (i32, i32) {
    %c0_i32 = arith.constant 0 : i32
    %c0_i32_0 = arith.constant 0 : i32
    %c0_i32_1 = arith.constant 0 : i32
    return %c0_i32, %c0_i32_0 : i32, i32
  }
  func.func @transform_3(%arg0: i32) -> (i32, i32) {
    %c0_i32 = arith.constant 0 : i32
    %c0_i32_0 = arith.constant 0 : i32
    %c0_i32_1 = arith.constant 0 : i32
    return %c0_i32, %c0_i32_0 : i32, i32
  }
  func.func @transform_4(%arg0: i32) -> (i32, i32) {
    %c0_i32 = arith.constant 0 : i32
    %c0_i32_0 = arith.constant 0 : i32
    %c0_i32_1 = arith.constant 0 : i32
    return %c0_i32, %c0_i32_0 : i32, i32
  }
  func.func @transform_5(%arg0: i32) -> (i32, i32) {
    %c0_i32 = arith.constant 0 : i32
    %c0_i32_0 = arith.constant 0 : i32
    %c0_i32_1 = arith.constant 0 : i32
    return %c0_i32, %c0_i32_0 : i32, i32
  }
  func.func @transform_6(%arg0: i32) -> (i32, i32) {
    %c0_i32 = arith.constant 0 : i32
    %c0_i32_0 = arith.constant 0 : i32
    %c0_i32_1 = arith.constant 0 : i32
    return %c0_i32, %c0_i32_0 : i32, i32
  }
  func.func @transform_7(%arg0: i32) -> (i32, i32) {
    %c0_i32 = arith.constant 0 : i32
    %c0_i32_0 = arith.constant 0 : i32
    %c0_i32_1 = arith.constant 0 : i32
    return %c0_i32, %c0_i32_0 : i32, i32
  }
  func.func @transform_8(%arg0: i32) -> (i32, i32) {
    %c0_i32 = arith.constant 0 : i32
    %c0_i32_0 = arith.constant 0 : i32
    return %arg0, %c0_i32 : i32, i32
  }
}

</mosaic_0001>

<llo_original>
// kernel: tpu_custom_call.1
$region0: #{tpu_custom_call.1}
  #allocation0 [shape = 'u32[]', space=smem, size = 0x4, offset = 0x4, fixed_abs, tag = 'smem constant byte address 0x4 - core index']
  #allocation1 [shape = 'u32[144,128]{1,0:T(1,128)}', space=vmem, size = 0x12000, scoped, tag = 'internal scratch']
  #allocation2 [shape = 'f32[1,8,32]{2,1,0:T(8,128)}', space=vmem, size = 0x1000, scoped, tag = 'scratch operand']
  %s0 = inlined_call_operand.hbm [shape: f32[16,32], index: 0, kind: input, shape index: {}]
  %s1 = inlined_call_operand.vmem [shape: f32[32,64], index: 1, kind: input, shape index: {}]
  %s2 = inlined_call_operand.vmem [shape: f32[32,32], index: 2, kind: input, shape index: {}]
  %s3 = inlined_call_operand.vmem [shape: f32[1,32], index: 3, kind: input, shape index: {}]
  %s4 = inlined_call_operand.vmem [shape: f32[64,32], index: 4, kind: input, shape index: {}]
  %s5 = inlined_call_operand.vmem [shape: f32[1,32], index: 5, kind: input, shape index: {}]
  %s6 = inlined_call_operand.vmem [shape: f32[32,32], index: 6, kind: input, shape index: {}]
  %s7 = inlined_call_operand.vmem [shape: f32[1,32], index: 7, kind: input, shape index: {}]
  %s8 = inlined_call_operand.hbm [shape: f32[16,32], index: 8, kind: output, shape index: {}]
  %s9 = sld [smem:[#allocation0]]
  $region69: #{tpu_custom_call.1} parent=0
    _
  %s11 = ssub.s32 1, %s9
  %s12 = scalar_select 0, %s11, %s9
  $region1: #{tpu_custom_call.1} parent=0
    #allocation3 [shape = 'u8[8192]{0}', space=vmem, size = 0x2000, scoped, tag = 'input window, operand 0']
    #allocation4 [shape = 's32[2]{0}', space=sflag, size = 0x8, scoped, tag = 'scoped memory for tpu_custom_call.1']
    #allocation5 [shape = 's32[2]{0}', space=sflag, size = 0x8, scoped, tag = 'scoped memory for tpu_custom_call.1']
    #allocation6 [shape = 'u8[8192]{0}', space=vmem, size = 0x2000, scoped, tag = 'output window, operand 0']
    %13 = vsyncpa [#allocation4], 0
    %s14 = scalar_lea.sflag [#allocation4], 1
    %15 = vsyncpa %s14, 0
    %16 = vsyncpa [#allocation5], 0
    %s17 = scalar_lea.sflag [#allocation5], 1
    %18 = vsyncpa %s17, 0
    loop: start=0, step=1, limit=4
    $region2: #{tpu_custom_call.1} parent=1 // loop_pre_header
      _
    $region3: #{tpu_custom_call.1} parent=1 // loop_header
      %s20 = sphi 0, %s24
      %p21 = scmp.ge.s32.totalorder %s20, 4
      %s30 = sphi 0, %s32
      %s33 = sphi 0, %s30
      %s34 = sphi 0, %s33
      %s50 = sphi 0, %s34
      %s56 = sphi 0, %s58
      %s59 = sphi 0, %s56
      %s60 = sphi 0, %s59
      %s76 = sphi 0, %s60
      %s80 = sphi 0, %s80
      %s82 = sphi 0, %s80
      %s83 = sphi 0, %s82
      %s97 = sphi 0, %s83
      %s101 = sphi 0, %s101
      %s103 = sphi 0, %s101
      %s104 = sphi 0, %s103
      %s118 = sphi 0, %s104
      %s122 = sphi 0, %s122
      %s124 = sphi 0, %s122
      %s125 = sphi 0, %s124
      %s139 = sphi 0, %s125
      %s143 = sphi 0, %s143
      %s145 = sphi 0, %s143
      %s146 = sphi 0, %s145
      %s160 = sphi 0, %s146
      %s164 = sphi 0, %s164
      %s166 = sphi 0, %s164
      %s167 = sphi 0, %s166
      %s181 = sphi 0, %s167
      %s185 = sphi 0, %s185
      %s187 = sphi 0, %s185
      %s188 = sphi 0, %s187
      %s202 = sphi 0, %s188
      %s208 = sphi 0, %s210
      %s211 = sphi 0, %s208
      %s212 = sphi 0, %s211
      %s228 = sphi 0, %s212
    $region4: #{tpu_custom_call.1} parent=1 // loop_header_branch
      %23 = sbr.rel (%p21) target = $region8
    $region5: #{tpu_custom_call.1} parent=1 // loop_body
      %s25 = ssub.s32 %s20, 1
      %s26 = ssub.s32 %s20, 2
      %s27 = sadd.s32 %s20, 1
      %s28 = ssub.s32 %s20, %s27
      %p29 = scmp.eq.s32.totalorder %s28, 0
      %s31 = sadd.s32 %s30, 1
      %s32 = scalar_select %p29, %s30, %s31
      %p35 = pneg %p29
      %p36 = scmp.eq.s32.totalorder %s20, 1
      %p37 = por %p35, %p36
      %p38 = scmp.ne.s32.totalorder %s30, %s33
      %p39 = scmp.eq.s32.totalorder %s20, 0
      %p40 = por %p38, %p39
      %p41 = scmp.ne.s32.totalorder %s30, %s33
      %p42 = scmp.eq.s32.totalorder %s25, 1
      %p43 = por %p41, %p42
      %p44 = scmp.ne.s32.totalorder %s33, %s34
      %p45 = scmp.eq.s32.totalorder %s25, 0
      %p46 = por %p44, %p45
      %p47 = scmp.ne.s32.totalorder %s33, %s34
      %p48 = scmp.eq.s32.totalorder %s26, 1
      %p49 = por %p47, %p48
      %p51 = scmp.ne.s32.totalorder %s34, %s50
      %p52 = scmp.eq.s32.totalorder %s26, 0
      %p53 = por %p51, %p52
      %s54 = ssub.s32 %s20, %s27
      %p55 = scmp.eq.s32.totalorder %s54, 0
      %s57 = sadd.s32 %s56, 1
      %s58 = scalar_select %p55, %s56, %s57
      %p61 = pneg %p55
      %p62 = scmp.eq.s32.totalorder %s20, 1
      %p63 = por %p61, %p62
      %p64 = scmp.ne.s32.totalorder %s56, %s59
      %p65 = scmp.eq.s32.totalorder %s20, 0
      %p66 = por %p64, %p65
      %p67 = scmp.ne.s32.totalorder %s56, %s59
      %p68 = scmp.eq.s32.totalorder %s25, 1
      %p69 = por %p67, %p68
      %p70 = scmp.ne.s32.totalorder %s59, %s60
      %p71 = scmp.eq.s32.totalorder %s25, 0
      %p72 = por %p70, %p71
      %p73 = scmp.ne.s32.totalorder %s59, %s60
      %p74 = scmp.eq.s32.totalorder %s26, 1
      %p75 = por %p73, %p74
      %p77 = scmp.ne.s32.totalorder %s60, %s76
      %p78 = scmp.eq.s32.totalorder %s26, 0
      %p79 = por %p77, %p78
      %s81 = sadd.s32 %s80, 1
      %p84 = scmp.eq.s32.totalorder %s20, 1
      %p85 = scmp.ne.s32.totalorder %s80, %s82
      %p86 = scmp.eq.s32.totalorder %s20, 0
      %p87 = por %p85, %p86
      %p88 = scmp.ne.s32.totalorder %s80, %s82
      %p89 = scmp.eq.s32.totalorder %s25, 1
      %p90 = por %p88, %p89
      %p91 = scmp.ne.s32.totalorder %s82, %s83
      %p92 = scmp.eq.s32.totalorder %s25, 0
      %p93 = por %p91, %p92
      %p94 = scmp.ne.s32.totalorder %s82, %s83
      %p95 = scmp.eq.s32.totalorder %s26, 1
      %p96 = por %p94, %p95
      %p98 = scmp.ne.s32.totalorder %s83, %s97
      %p99 = scmp.eq.s32.totalorder %s26, 0
      %p100 = por %p98, %p99
      %s102 = sadd.s32 %s101, 1
      %p105 = scmp.eq.s32.totalorder %s20, 1
      %p106 = scmp.ne.s32.totalorder %s101, %s103
      %p107 = scmp.eq.s32.totalorder %s20, 0
      %p108 = por %p106, %p107
      %p109 = scmp.ne.s32.totalorder %s101, %s103
      %p110 = scmp.eq.s32.totalorder %s25, 1
      %p111 = por %p109, %p110
      %p112 = scmp.ne.s32.totalorder %s103, %s104
      %p113 = scmp.eq.s32.totalorder %s25, 0
      %p114 = por %p112, %p113
      %p115 = scmp.ne.s32.totalorder %s103, %s104
      %p116 = scmp.eq.s32.totalorder %s26, 1
      %p117 = por %p115, %p116
      %p119 = scmp.ne.s32.totalorder %s104, %s118
      %p120 = scmp.eq.s32.totalorder %s26, 0
      %p121 = por %p119, %p120
      %s123 = sadd.s32 %s122, 1
      %p126 = scmp.eq.s32.totalorder %s20, 1
      %p127 = scmp.ne.s32.totalorder %s122, %s124
      %p128 = scmp.eq.s32.totalorder %s20, 0
      %p129 = por %p127, %p128
      %p130 = scmp.ne.s32.totalorder %s122, %s124
      %p131 = scmp.eq.s32.totalorder %s25, 1
      %p132 = por %p130, %p131
      %p133 = scmp.ne.s32.totalorder %s124, %s125
      %p134 = scmp.eq.s32.totalorder %s25, 0
      %p135 = por %p133, %p134
      %p136 = scmp.ne.s32.totalorder %s124, %s125
      %p137 = scmp.eq.s32.totalorder %s26, 1
      %p138 = por %p136, %p137
      %p140 = scmp.ne.s32.totalorder %s125, %s139
      %p141 = scmp.eq.s32.totalorder %s26, 0
      %p142 = por %p140, %p141
      %s144 = sadd.s32 %s143, 1
      %p147 = scmp.eq.s32.totalorder %s20, 1
      %p148 = scmp.ne.s32.totalorder %s143, %s145
      %p149 = scmp.eq.s32.totalorder %s20, 0
      %p150 = por %p148, %p149
      %p151 = scmp.ne.s32.totalorder %s143, %s145
      %p152 = scmp.eq.s32.totalorder %s25, 1
      %p153 = por %p151, %p152
      %p154 = scmp.ne.s32.totalorder %s145, %s146
      %p155 = scmp.eq.s32.totalorder %s25, 0
      %p156 = por %p154, %p155
      %p157 = scmp.ne.s32.totalorder %s145, %s146
      %p158 = scmp.eq.s32.totalorder %s26, 1
      %p159 = por %p157, %p158
      %p161 = scmp.ne.s32.totalorder %s146, %s160
      %p162 = scmp.eq.s32.totalorder %s26, 0
      %p163 = por %p161, %p162
      %s165 = sadd.s32 %s164, 1
      %p168 = scmp.eq.s32.totalorder %s20, 1
      %p169 = scmp.ne.s32.totalorder %s164, %s166
      %p170 = scmp.eq.s32.totalorder %s20, 0
      %p171 = por %p169, %p170
      %p172 = scmp.ne.s32.totalorder %s164, %s166
      %p173 = scmp.eq.s32.totalorder %s25, 1
      %p174 = por %p172, %p173
      %p175 = scmp.ne.s32.totalorder %s166, %s167
      %p176 = scmp.eq.s32.totalorder %s25, 0
      %p177 = por %p175, %p176
      %p178 = scmp.ne.s32.totalorder %s166, %s167
      %p179 = scmp.eq.s32.totalorder %s26, 1
      %p180 = por %p178, %p179
      %p182 = scmp.ne.s32.totalorder %s167, %s181
      %p183 = scmp.eq.s32.totalorder %s26, 0
      %p184 = por %p182, %p183
      %s186 = sadd.s32 %s185, 1
      %p189 = scmp.eq.s32.totalorder %s20, 1
      %p190 = scmp.ne.s32.totalorder %s185, %s187
      %p191 = scmp.eq.s32.totalorder %s20, 0
      %p192 = por %p190, %p191
      %p193 = scmp.ne.s32.totalorder %s185, %s187
      %p194 = scmp.eq.s32.totalorder %s25, 1
      %p195 = por %p193, %p194
      %p196 = scmp.ne.s32.totalorder %s187, %s188
      %p197 = scmp.eq.s32.totalorder %s25, 0
      %p198 = por %p196, %p197
      %p199 = scmp.ne.s32.totalorder %s187, %s188
      %p200 = scmp.eq.s32.totalorder %s26, 1
      %p201 = por %p199, %p200
      %p203 = scmp.ne.s32.totalorder %s188, %s202
      %p204 = scmp.eq.s32.totalorder %s26, 0
      %p205 = por %p203, %p204
      %s206 = ssub.s32 %s20, %s27
      %p207 = scmp.eq.s32.totalorder %s206, 0
      %s209 = sadd.s32 %s208, 1
      %s210 = scalar_select %p207, %s208, %s209
      %p213 = pneg %p207
      %p214 = scmp.eq.s32.totalorder %s20, 1
      %p215 = por %p213, %p214
      %p216 = scmp.ne.s32.totalorder %s208, %s211
      %p217 = scmp.eq.s32.totalorder %s20, 0
      %p218 = por %p216, %p217
      %p219 = scmp.ne.s32.totalorder %s208, %s211
      %p220 = scmp.eq.s32.totalorder %s25, 1
      %p221 = por %p219, %p220
      %p222 = scmp.ne.s32.totalorder %s211, %s212
      %p223 = scmp.eq.s32.totalorder %s25, 0
      %p224 = por %p222, %p223
      %p225 = scmp.ne.s32.totalorder %s211, %s212
      %p226 = scmp.eq.s32.totalorder %s26, 1
      %p227 = por %p225, %p226
      %p229 = scmp.ne.s32.totalorder %s212, %s228
      %p230 = scmp.eq.s32.totalorder %s26, 0
      %p231 = por %p229, %p230
      %p232 = scmp.le.s32.totalorder 1, %s20
      %p233 = scmp.lt.s32.totalorder %s20, 3
      %p234 = pnand %p232, %p233
      %p235 = pneg %p234
      // Predicated region
      $region9: #{tpu_custom_call.1} parent=5 // pred_check
        _
      $region10: #{tpu_custom_call.1} parent=5 // pred_check_branch
        %237 = sbr.rel (%p234) target = $region12
      $region11: #{tpu_custom_call.1} parent=5 // pred_region
        %s238 = ssub.s32 %s20, 1
        // Predicated region
        $region13: #{tpu_custom_call.1} parent=11 // pred_check
          %p239 = pneg %p93
        $region14: #{tpu_custom_call.1} parent=11 // pred_check_branch
          %241 = sbr.rel (%p239) target = $region16
        $region15: #{tpu_custom_call.1} parent=11 // pred_region
          _
        $region16: #{tpu_custom_call.1} parent=11 // pred_fallthru
          _
        // Predicated region
        $region17: #{tpu_custom_call.1} parent=11 // pred_check
          %p242 = pneg %p114
        $region18: #{tpu_custom_call.1} parent=11 // pred_check_branch
          %244 = sbr.rel (%p242) target = $region20
        $region19: #{tpu_custom_call.1} parent=11 // pred_region
          _
        $region20: #{tpu_custom_call.1} parent=11 // pred_fallthru
          _
        // Predicated region
        $region21: #{tpu_custom_call.1} parent=11 // pred_check
          %p245 = pneg %p135
        $region22: #{tpu_custom_call.1} parent=11 // pred_check_branch
          %247 = sbr.rel (%p245) target = $region24
        $region23: #{tpu_custom_call.1} parent=11 // pred_region
          _
        $region24: #{tpu_custom_call.1} parent=11 // pred_fallthru
          _
        // Predicated region
        $region25: #{tpu_custom_call.1} parent=11 // pred_check
          %p248 = pneg %p156
        $region26: #{tpu_custom_call.1} parent=11 // pred_check_branch
          %250 = sbr.rel (%p248) target = $region28
        $region27: #{tpu_custom_call.1} parent=11 // pred_region
          _
        $region28: #{tpu_custom_call.1} parent=11 // pred_fallthru
          _
        // Predicated region
        $region29: #{tpu_custom_call.1} parent=11 // pred_check
          %p251 = pneg %p177
        $region30: #{tpu_custom_call.1} parent=11 // pred_check_branch
          %253 = sbr.rel (%p251) target = $region32
        $region31: #{tpu_custom_call.1} parent=11 // pred_region
          _
        $region32: #{tpu_custom_call.1} parent=11 // pred_fallthru
          _
        // Predicated region
        $region33: #{tpu_custom_call.1} parent=11 // pred_check
          %p254 = pneg %p198
        $region34: #{tpu_custom_call.1} parent=11 // pred_check_branch
          %256 = sbr.rel (%p254) target = $region36
        $region35: #{tpu_custom_call.1} parent=11 // pred_region
          _
        $region36: #{tpu_custom_call.1} parent=11 // pred_fallthru
          _
      $region12: #{tpu_custom_call.1} parent=5 // pred_fallthru
        _
      %p257 = scmp.lt.s32.totalorder %s20, 2
      // Predicated region
      $region37: #{tpu_custom_call.1} parent=5 // pred_check
        %p258 = pneg %p257
      $region38: #{tpu_custom_call.1} parent=5 // pred_check_branch
        %260 = sbr.rel (%p258) target = $region40
      $region39: #{tpu_custom_call.1} parent=5 // pred_region
        // Predicated region
        $region41: #{tpu_custom_call.1} parent=39 // pred_check
          %p261 = pneg %p40
        $region42: #{tpu_custom_call.1} parent=39 // pred_check_branch
          %263 = sbr.rel (%p261) target = $region44
        $region43: #{tpu_custom_call.1} parent=39 // pred_region
          %s264 = sand.u32 %s30, 1
          %s265 = scalar_lea.sflag [#allocation4], %s264
          %s266 = sand.u32 %s30, 1
          %s267 = smul.addr %s266, 8
          %s268 = scalar_lea.vmem [#allocation3], %s267
          %s270 = ssub.s32 128, 128
          %271 = vsyncadd %s265, %s270
          %s272 = smul.addr %s20, 128
          %s273 = scalar_lea.hbm %s0, %s272
          %s275 = sshll.u32 %s268, 4
          %s276 = int_to_ptr.vmem [resolvable:$true] %s275
          %278 = dma.hbm_to_vmem [thread:$0]  %s273, 128, %s276, %s265
        $region44: #{tpu_custom_call.1} parent=39 // pred_fallthru
          _
        // Predicated region
        $region45: #{tpu_custom_call.1} parent=39 // pred_check
          %p279 = pneg %p66
        $region46: #{tpu_custom_call.1} parent=39 // pred_check_branch
          %281 = sbr.rel (%p279) target = $region48
        $region47: #{tpu_custom_call.1} parent=39 // pred_region
          %s282 = smul.u32 2, %s20
          %p283 = scmp.lt.s32.totalorder %s282, 3
          %s284 = scalar_select %p283, %s282, 3
          %s285 = smul.addr %s284, 8
          %s286 = scalar_lea.vmem %s1, %s285
          %s287 = smul.u32 2, %s20
        $region48: #{tpu_custom_call.1} parent=39 // pred_fallthru
          _
      $region40: #{tpu_custom_call.1} parent=5 // pred_fallthru
        _
      %p288 = scmp.le.s32.totalorder 1, %s20
      %p289 = scmp.lt.s32.totalorder %s20, 3
      %p290 = pnand %p288, %p289
      %p291 = pneg %p290
      // Predicated region
      $region49: #{tpu_custom_call.1} parent=5 // pred_check
        _
      $region50: #{tpu_custom_call.1} parent=5 // pred_check_branch
        %293 = sbr.rel (%p290) target = $region52
      $region51: #{tpu_custom_call.1} parent=5 // pred_region
        %s294 = ssub.s32 %s20, 1
        %s295 = sand.u32 %s33, 1
        %s296 = scalar_lea.sflag [#allocation4], %s295
        %s297 = sand.u32 %s33, 1
        %s298 = smul.addr %s297, 8
        %s299 = scalar_lea.vmem [#allocation3], %s298
        // Predicated region
        $region53: #{tpu_custom_call.1} parent=51 // pred_check
          %p300 = pneg %p46
        $region54: #{tpu_custom_call.1} parent=51 // pred_check_branch
          %302 = sbr.rel (%p300) target = $region56
        $region55: #{tpu_custom_call.1} parent=51 // pred_region
          %303 = dma.done %s296, 128
        $region56: #{tpu_custom_call.1} parent=51 // pred_fallthru
          _
        %s304 = sand.u32 %s33, 1
        %s305 = scalar_lea.sflag [#allocation4], %s304
        %s306 = sand.u32 %s33, 1
        %s307 = smul.addr %s306, 8
        %s308 = scalar_lea.vmem [#allocation3], %s307
        %p309 = pneg %p46
        %p310 = pneg %p43
        %s311 = smul.u32 2, %s25
        %p312 = scmp.lt.s32.totalorder %s311, 3
        %s313 = scalar_select %p312, %s311, 3
        %s314 = smul.addr %s313, 8
        %s315 = scalar_lea.vmem %s1, %s314
        %p316 = pneg %p72
        %p317 = pneg %p69
        %p318 = pneg %p93
        %p319 = pneg %p90
        %p320 = pneg %p114
        %p321 = pneg %p111
        %p322 = pneg %p135
        %p323 = pneg %p132
        %p324 = pneg %p156
        %p325 = pneg %p153
        %p326 = pneg %p177
        %p327 = pneg %p174
        %p328 = pneg %p198
        %p329 = pneg %p195
        %p330 = pneg %p224
        %p331 = pneg %p221
        %s332 = sand.u32 %s211, 1
        %s333 = scalar_lea.sflag [#allocation5], %s332
        %s334 = sand.u32 %s211, 1
        %s335 = smul.addr %s334, 8
        %s336 = scalar_lea.vmem [#allocation6], %s335
        %s337 = smul.u32 2, %s25
        %p338 = scmp.lt.s32.totalorder %s337, 3
        %s339 = scalar_select %p338, %s337, 3
        %s340 = smul.addr %s339, 8
        %s341 = scalar_lea.vmem %s1, %s340
        %s342 = smul.u32 2, %s25
        %v343 = vld [vmem:[%s299] sm:$0xff]
        %v344 = vld [vmem:[%s2] sm:$0xff]
        %v345 = vld [vmem:[%s2 + $0x8] sm:$0xff]
        %v346 = vld [vmem:[%s2 + $0x10] sm:$0xff]
        %v347 = vld [vmem:[%s2 + $0x18] sm:$0xff]
        %v348 = vld [vmem:[%s3] sm:$0x1]
        %v350 = vlaneseq
        %v351 = vshrl.u32 %v350, 7
        %v352 = vsub.s32 0, %v351
        %v353 = vrot.slane %v348, %v352
        %vm355 = vcmask 261120
        %v357 = vsel %vm355, %v343, 0
        %359 = vmatprep.subr.mxu0 0.0
        %360 = vmatpush1.msra.mxu0 %v344
        %361 = vmatprep.subr.mxu0 0.0
        %362 = vmatpush1.msra.mxu0 %v345
        %363 = vmatprep.subr.mxu0 0.0
        %364 = vmatpush1.msra.mxu0 %v346
        %365 = vmatprep.subr.mxu0 0.0
        %366 = vmatpush1.msra.mxu0 %v347
        %367 = vmatprep.subr.mxu0 0.0
        %368 = vmatpush1.msra.mxu0 0.0
        %369 = vmatprep.subr.mxu0 0.0
        %370 = vmatpush1.msra.mxu0 0.0
        %371 = vmatprep.subr.mxu0 0.0
        %372 = vmatpush1.msra.mxu0 0.0
        %373 = vmatprep.subr.mxu0 0.0
        %374 = vmatpush1.msra.mxu0 0.0
        %375 = vmatprep.subr.mxu0 0.0
        %376 = vmatpush1.msra.mxu0 0.0
        %377 = vmatprep.subr.mxu0 0.0
        %378 = vmatpush1.msra.mxu0 0.0
        %379 = vmatprep.subr.mxu0 0.0
        %380 = vmatpush1.msra.mxu0 0.0
        %381 = vmatprep.subr.mxu0 0.0
        %382 = vmatpush1.msra.mxu0 0.0
        %383 = vmatprep.subr.mxu0 0.0
        %384 = vmatpush1.msra.mxu0 0.0
        %385 = vmatprep.subr.mxu0 0.0
        %386 = vmatpush1.msra.mxu0 0.0
        %387 = vmatprep.subr.mxu0 0.0
        %388 = vmatpush1.msra.mxu0 0.0
        %389 = vmatprep.subr.mxu0 0.0
        %390 = vmatpush1.msra.mxu0 0.0
        %391 = vmatprep.subr.mxu0 0.0
        %392 = vmatpush1.msra.mxu0 0.0
        %393 = vmatprep.subr.mxu0 0.0
        %394 = vmatpush1.msra.mxu0 0.0
        %395 = vmatprep.subr.mxu0 0.0
        %396 = vmatpush1.msra.mxu0 0.0
        %397 = vmatprep.subr.mxu0 0.0
        %398 = vmatpush1.msra.mxu0 0.0
        %399 = vmatprep.subr.mxu0 0.0
        %400 = vmatpush1.msra.mxu0 0.0
        %401 = vmatprep.subr.mxu0 0.0
        %402 = vmatpush1.msra.mxu0 0.0
        %403 = vmatprep.subr.mxu0 0.0
        %404 = vmatpush1.msra.mxu0 0.0
        %405 = vmatprep.subr.mxu0 0.0
        %406 = vmatpush1.msra.mxu0 0.0
        %407 = vmatprep.subr.mxu0 0.0
        %408 = vmatpush1.msra.mxu0 0.0
        %409 = vmatprep.subr.mxu0 0.0
        %410 = vmatpush1.msra.mxu0 0.0
        %411 = vmatprep.subr.mxu0 0.0
        %412 = vmatpush1.msra.mxu0 0.0
        %413 = vmatprep.subr.mxu0 0.0
        %414 = vmatpush1.msra.mxu0 0.0
        %415 = vmatprep.subr.mxu0 0.0
        %416 = vmatpush1.msra.mxu0 0.0
        %417 = vmatprep.subr.mxu0 0.0
        %418 = vmatpush1.msra.mxu0 0.0
        %419 = vmatprep.subr.mxu0 0.0
        %420 = vmatpush1.msra.mxu0 0.0
        %421 = vmatprep.subr.mxu0 0.0
        %422 = vmatpush1.msra.mxu0 0.0
        %423 = vmatprep.mubr.f32.mxu0 0.0
        %424 = vmatmul.mubr.f32.gmra.mrb[0].mxu0 %v357
        %v425 = vpop.f32.mrb[0].mxu0
        %v426 = vadd.f32 %v353, %v425
        %v427 = vpop.f32.mrb[0].mxu0
        %428 = vdwg.mxu0
        %v429 = vld [vmem:[%s341] sm:$0xff]
        %v430 = vld [vmem:[%s341 + $0x8] sm:$0xff]
        %v431 = vld [vmem:[%s4] sm:$0xff]
        %v432 = vld [vmem:[%s4 + $0x8] sm:$0xff]
        %v433 = vld [vmem:[%s4 + $0x10] sm:$0xff]
        %v434 = vld [vmem:[%s4 + $0x18] sm:$0xff]
        %v435 = vld [vmem:[%s4 + $0x20] sm:$0xff]
        %v436 = vld [vmem:[%s4 + $0x28] sm:$0xff]
        %v437 = vld [vmem:[%s4 + $0x30] sm:$0xff]
        %v438 = vld [vmem:[%s4 + $0x38] sm:$0xff]
        %v439 = vld [vmem:[%s5] sm:$0x1]
        %v441 = vlaneseq
        %v442 = vshrl.u32 %v441, 7
        %v443 = vsub.s32 0, %v442
        %v444 = vrot.slane %v439, %v443
        %vm446 = vcmask 523264
        %v448 = vsel %vm446, %v429, 0
        %v451 = vsel %vm446, %v430, 0
        %453 = vmatprep.subr.mxu0 0.0
        %454 = vmatpush1.msra.mxu0 %v431
        %455 = vmatprep.subr.mxu0 0.0
        %456 = vmatpush1.msra.mxu0 %v432
        %457 = vmatprep.subr.mxu0 0.0
        %458 = vmatpush1.msra.mxu0 %v433
        %459 = vmatprep.subr.mxu0 0.0
        %460 = vmatpush1.msra.mxu0 %v434
        %461 = vmatprep.subr.mxu0 0.0
        %462 = vmatpush1.msra.mxu0 %v435
        %463 = vmatprep.subr.mxu0 0.0
        %464 = vmatpush1.msra.mxu0 %v436
        %465 = vmatprep.subr.mxu0 0.0
        %466 = vmatpush1.msra.mxu0 %v437
        %467 = vmatprep.subr.mxu0 0.0
        %468 = vmatpush1.msra.mxu0 %v438
        %469 = vmatprep.subr.mxu0 0.0
        %470 = vmatpush1.msra.mxu0 0.0
        %471 = vmatprep.subr.mxu0 0.0
        %472 = vmatpush1.msra.mxu0 0.0
        %473 = vmatprep.subr.mxu0 0.0
        %474 = vmatpush1.msra.mxu0 0.0
        %475 = vmatprep.subr.mxu0 0.0
        %476 = vmatpush1.msra.mxu0 0.0
        %477 = vmatprep.subr.mxu0 0.0
        %478 = vmatpush1.msra.mxu0 0.0
        %479 = vmatprep.subr.mxu0 0.0
        %480 = vmatpush1.msra.mxu0 0.0
        %481 = vmatprep.subr.mxu0 0.0
        %482 = vmatpush1.msra.mxu0 0.0
        %483 = vmatprep.subr.mxu0 0.0
        %484 = vmatpush1.msra.mxu0 0.0
        %485 = vmatprep.subr.mxu0 0.0
        %486 = vmatpush1.msra.mxu0 0.0
        %487 = vmatprep.subr.mxu0 0.0
        %488 = vmatpush1.msra.mxu0 0.0
        %489 = vmatprep.subr.mxu0 0.0
        %490 = vmatpush1.msra.mxu0 0.0
        %491 = vmatprep.subr.mxu0 0.0
        %492 = vmatpush1.msra.mxu0 0.0
        %493 = vmatprep.subr.mxu0 0.0
        %494 = vmatpush1.msra.mxu0 0.0
        %495 = vmatprep.subr.mxu0 0.0
        %496 = vmatpush1.msra.mxu0 0.0
        %497 = vmatprep.subr.mxu0 0.0
        %498 = vmatpush1.msra.mxu0 0.0
        %499 = vmatprep.subr.mxu0 0.0
        %500 = vmatpush1.msra.mxu0 0.0
        %501 = vmatprep.subr.mxu0 0.0
        %502 = vmatpush1.msra.mxu0 0.0
        %503 = vmatprep.subr.mxu0 0.0
        %504 = vmatpush1.msra.mxu0 0.0
        %505 = vmatprep.subr.mxu0 0.0
        %506 = vmatpush1.msra.mxu0 0.0
        %507 = vmatprep.subr.mxu0 0.0
        %508 = vmatpush1.msra.mxu0 0.0
        %509 = vmatprep.subr.mxu0 0.0
        %510 = vmatpush1.msra.mxu0 0.0
        %511 = vmatprep.subr.mxu0 0.0
        %512 = vmatpush1.msra.mxu0 0.0
        %513 = vmatprep.subr.mxu0 0.0
        %514 = vmatpush1.msra.mxu0 0.0
        %515 = vmatprep.subr.mxu0 0.0
        %516 = vmatpush1.msra.mxu0 0.0
        %517 = vmatprep.mubr.f32.mxu0 0.0
        %518 = vmatmul.mubr.f32.gmra.mrb[0].mxu0 %v448
        %v519 = vpop.f32.mrb[0].mxu0
        %v520 = vadd.f32 %v444, %v519
        %v521 = vpop.f32.mrb[0].mxu0
        %522 = vmatprep.mubr.f32.mxu0 0.0
        %523 = vmatmul.mubr.f32.gmra.mrb[0].mxu0 %v451
        %v524 = vpop.f32.mrb[0].mxu0
        %v525 = vadd.f32 %v444, %v524
        %v526 = vpop.f32.mrb[0].mxu0
        %527 = vdwg.mxu0
        %vm528 = vcmask 64512
        %v530 = vsel %vm528, %v426, 0
        %v533 = vsel %vm528, %v520, 0
        %v536 = vsel %vm528, %v525, 0
        %538 = vmatprep.subr.mxu0 0.0
        %539 = vmatpush1.xpose.msra.mxu0 %v533
        %540 = vmatprep.subr.mxu0 0.0
        %541 = vmatpush1.xpose.msra.mxu0 %v536
        %542 = vmatprep.subr.mxu0 0.0
        %543 = vmatpush1.xpose.msra.mxu0 0.0
        %544 = vmatprep.subr.mxu0 0.0
        %545 = vmatpush1.xpose.msra.mxu0 0.0
        %546 = vmatprep.subr.mxu0 0.0
        %547 = vmatpush1.xpose.msra.mxu0 0.0
        %548 = vmatprep.subr.mxu0 0.0
        %549 = vmatpush1.xpose.msra.mxu0 0.0
        %550 = vmatprep.subr.mxu0 0.0
        %551 = vmatpush1.xpose.msra.mxu0 0.0
        %552 = vmatprep.subr.mxu0 0.0
        %553 = vmatpush1.xpose.msra.mxu0 0.0
        %554 = vmatprep.subr.mxu0 0.0
        %555 = vmatpush1.xpose.msra.mxu0 0.0
        %556 = vmatprep.subr.mxu0 0.0
        %557 = vmatpush1.xpose.msra.mxu0 0.0
        %558 = vmatprep.subr.mxu0 0.0
        %559 = vmatpush1.xpose.msra.mxu0 0.0
        %560 = vmatprep.subr.mxu0 0.0
        %561 = vmatpush1.xpose.msra.mxu0 0.0
        %562 = vmatprep.subr.mxu0 0.0
        %563 = vmatpush1.xpose.msra.mxu0 0.0
        %564 = vmatprep.subr.mxu0 0.0
        %565 = vmatpush1.xpose.msra.mxu0 0.0
        %566 = vmatprep.subr.mxu0 0.0
        %567 = vmatpush1.xpose.msra.mxu0 0.0
        %568 = vmatprep.subr.mxu0 0.0
        %569 = vmatpush1.xpose.msra.mxu0 0.0
        %570 = vmatprep.subr.mxu0 0.0
        %571 = vmatpush1.xpose.msra.mxu0 0.0
        %572 = vmatprep.subr.mxu0 0.0
        %573 = vmatpush1.xpose.msra.mxu0 0.0
        %574 = vmatprep.subr.mxu0 0.0
        %575 = vmatpush1.xpose.msra.mxu0 0.0
        %576 = vmatprep.subr.mxu0 0.0
        %577 = vmatpush1.xpose.msra.mxu0 0.0
        %578 = vmatprep.subr.mxu0 0.0
        %579 = vmatpush1.xpose.msra.mxu0 0.0
        %580 = vmatprep.subr.mxu0 0.0
        %581 = vmatpush1.xpose.msra.mxu0 0.0
        %582 = vmatprep.subr.mxu0 0.0
        %583 = vmatpush1.xpose.msra.mxu0 0.0
        %584 = vmatprep.subr.mxu0 0.0
        %585 = vmatpush1.xpose.msra.mxu0 0.0
        %586 = vmatprep.subr.mxu0 0.0
        %587 = vmatpush1.xpose.msra.mxu0 0.0
        %588 = vmatprep.subr.mxu0 0.0
        %589 = vmatpush1.xpose.msra.mxu0 0.0
        %590 = vmatprep.subr.mxu0 0.0
        %591 = vmatpush1.xpose.msra.mxu0 0.0
        %592 = vmatprep.subr.mxu0 0.0
        %593 = vmatpush1.xpose.msra.mxu0 0.0
        %594 = vmatprep.subr.mxu0 0.0
        %595 = vmatpush1.xpose.msra.mxu0 0.0
        %596 = vmatprep.subr.mxu0 0.0
        %597 = vmatpush1.xpose.msra.mxu0 0.0
        %598 = vmatprep.subr.mxu0 0.0
        %599 = vmatpush1.xpose.msra.mxu0 0.0
        %600 = vmatprep.subr.mxu0 0.0
        %601 = vmatpush1.xpose.msra.mxu0 0.0
        %602 = vmatprep.mubr.f32.mxu0 0.0
        %603 = vmatmul.mubr.f32.gmra.mrb[0].mxu0 %v530
        %v604 = vpop.f32.mrb[0].mxu0
        %v605 = vadd.f32 0.0, %v604
        %v606 = vpop.f32.mrb[0].mxu0
        %607 = vdwg.mxu0
        %vm608 = vcmask 130048
        %v609 = vsel %vm608, %v605, -inf
        %610 = vmax.xlane.f32.xlu0 %v609
        %v611 = vpop.xlane.xlu0 %610
        %v612 = vsub.f32 %v605, %v611
        %v613 = vmul.f32 %v612, 1.442695
        %v614 = vpow.pop %v613
        %v615 = vsel %vm608, %v614, 0.0
        %616 = vadd.xlane.f32.xlu0 %v615
        %v617 = vpop.xlane.xlu0 %616
        %v618 = vrcp.pop %v617
        %v619 = vmul.f32 %v614, %v618
        %v621 = vsel %vm608, %v619, 0
        %623 = vmatprep.subr.mxu0 0.0
        %624 = vmatpush1.msra.mxu0 %v520
        %625 = vmatprep.subr.mxu0 0.0
        %626 = vmatpush1.msra.mxu0 %v525
        %627 = vmatprep.subr.mxu0 0.0
        %628 = vmatpush1.msra.mxu0 0.0
        %629 = vmatprep.subr.mxu0 0.0
        %630 = vmatpush1.msra.mxu0 0.0
        %631 = vmatprep.subr.mxu0 0.0
        %632 = vmatpush1.msra.mxu0 0.0
        %633 = vmatprep.subr.mxu0 0.0
        %634 = vmatpush1.msra.mxu0 0.0
        %635 = vmatprep.subr.mxu0 0.0
        %636 = vmatpush1.msra.mxu0 0.0
        %637 = vmatprep.subr.mxu0 0.0
        %638 = vmatpush1.msra.mxu0 0.0
        %639 = vmatprep.subr.mxu0 0.0
        %640 = vmatpush1.msra.mxu0 0.0
        %641 = vmatprep.subr.mxu0 0.0
        %642 = vmatpush1.msra.mxu0 0.0
        %643 = vmatprep.subr.mxu0 0.0
        %644 = vmatpush1.msra.mxu0 0.0
        %645 = vmatprep.subr.mxu0 0.0
        %646 = vmatpush1.msra.mxu0 0.0
        %647 = vmatprep.subr.mxu0 0.0
        %648 = vmatpush1.msra.mxu0 0.0
        %649 = vmatprep.subr.mxu0 0.0
        %650 = vmatpush1.msra.mxu0 0.0
        %651 = vmatprep.subr.mxu0 0.0
        %652 = vmatpush1.msra.mxu0 0.0
        %653 = vmatprep.subr.mxu0 0.0
        %654 = vmatpush1.msra.mxu0 0.0
        %655 = vmatprep.subr.mxu0 0.0
        %656 = vmatpush1.msra.mxu0 0.0
        %657 = vmatprep.subr.mxu0 0.0
        %658 = vmatpush1.msra.mxu0 0.0
        %659 = vmatprep.subr.mxu0 0.0
        %660 = vmatpush1.msra.mxu0 0.0
        %661 = vmatprep.subr.mxu0 0.0
        %662 = vmatpush1.msra.mxu0 0.0
        %663 = vmatprep.subr.mxu0 0.0
        %664 = vmatpush1.msra.mxu0 0.0
        %665 = vmatprep.subr.mxu0 0.0
        %666 = vmatpush1.msra.mxu0 0.0
        %667 = vmatprep.subr.mxu0 0.0
        %668 = vmatpush1.msra.mxu0 0.0
        %669 = vmatprep.subr.mxu0 0.0
        %670 = vmatpush1.msra.mxu0 0.0
        %671 = vmatprep.subr.mxu0 0.0
        %672 = vmatpush1.msra.mxu0 0.0
        %673 = vmatprep.subr.mxu0 0.0
        %674 = vmatpush1.msra.mxu0 0.0
        %675 = vmatprep.subr.mxu0 0.0
        %676 = vmatpush1.msra.mxu0 0.0
        %677 = vmatprep.subr.mxu0 0.0
        %678 = vmatpush1.msra.mxu0 0.0
        %679 = vmatprep.subr.mxu0 0.0
        %680 = vmatpush1.msra.mxu0 0.0
        %681 = vmatprep.subr.mxu0 0.0
        %682 = vmatpush1.msra.mxu0 0.0
        %683 = vmatprep.subr.mxu0 0.0
        %684 = vmatpush1.msra.mxu0 0.0
        %685 = vmatprep.subr.mxu0 0.0
        %686 = vmatpush1.msra.mxu0 0.0
        %687 = vmatprep.mubr.f32.mxu0 0.0
        %688 = vmatmul.mubr.f32.gmra.mrb[0].mxu0 %v621
        %v689 = vpop.f32.mrb[0].mxu0
        %v690 = vadd.f32 0.0, %v689
        %v691 = vpop.f32.mrb[0].mxu0
        %692 = vdwg.mxu0
        %693 = vst.msk [vmem:[#allocation2] sm:$0xff] %vm528, %v690
        %694 = vrot.lane.b32.xlu0 %v426, 120
        %v695 = vpop.permute.xlu0 %694
        %696 = vrot.lane.b32.xlu0 %v520, 120
        %v697 = vpop.permute.xlu0 %696
        %698 = vrot.lane.b32.xlu0 %v525, 120
        %v699 = vpop.permute.xlu0 %698
        %v700 = vsel %vm528, %v695, 0
        %v702 = vsel %vm528, %v697, 0
        %v704 = vsel %vm528, %v699, 0
        %706 = vmatprep.subr.mxu0 0.0
        %707 = vmatpush1.xpose.msra.mxu0 %v702
        %708 = vmatprep.subr.mxu0 0.0
        %709 = vmatpush1.xpose.msra.mxu0 %v704
        %710 = vmatprep.subr.mxu0 0.0
        %711 = vmatpush1.xpose.msra.mxu0 0.0
        %712 = vmatprep.subr.mxu0 0.0
        %713 = vmatpush1.xpose.msra.mxu0 0.0
        %714 = vmatprep.subr.mxu0 0.0
        %715 = vmatpush1.xpose.msra.mxu0 0.0
        %716 = vmatprep.subr.mxu0 0.0
        %717 = vmatpush1.xpose.msra.mxu0 0.0
        %718 = vmatprep.subr.mxu0 0.0
        %719 = vmatpush1.xpose.msra.mxu0 0.0
        %720 = vmatprep.subr.mxu0 0.0
        %721 = vmatpush1.xpose.msra.mxu0 0.0
        %722 = vmatprep.subr.mxu0 0.0
        %723 = vmatpush1.xpose.msra.mxu0 0.0
        %724 = vmatprep.subr.mxu0 0.0
        %725 = vmatpush1.xpose.msra.mxu0 0.0
        %726 = vmatprep.subr.mxu0 0.0
        %727 = vmatpush1.xpose.msra.mxu0 0.0
        %728 = vmatprep.subr.mxu0 0.0
        %729 = vmatpush1.xpose.msra.mxu0 0.0
        %730 = vmatprep.subr.mxu0 0.0
        %731 = vmatpush1.xpose.msra.mxu0 0.0
        %732 = vmatprep.subr.mxu0 0.0
        %733 = vmatpush1.xpose.msra.mxu0 0.0
        %734 = vmatprep.subr.mxu0 0.0
        %735 = vmatpush1.xpose.msra.mxu0 0.0
        %736 = vmatprep.subr.mxu0 0.0
        %737 = vmatpush1.xpose.msra.mxu0 0.0
        %738 = vmatprep.subr.mxu0 0.0
        %739 = vmatpush1.xpose.msra.mxu0 0.0
        %740 = vmatprep.subr.mxu0 0.0
        %741 = vmatpush1.xpose.msra.mxu0 0.0
        %742 = vmatprep.subr.mxu0 0.0
        %743 = vmatpush1.xpose.msra.mxu0 0.0
        %744 = vmatprep.subr.mxu0 0.0
        %745 = vmatpush1.xpose.msra.mxu0 0.0
        %746 = vmatprep.subr.mxu0 0.0
        %747 = vmatpush1.xpose.msra.mxu0 0.0
        %748 = vmatprep.subr.mxu0 0.0
        %749 = vmatpush1.xpose.msra.mxu0 0.0
        %750 = vmatprep.subr.mxu0 0.0
        %751 = vmatpush1.xpose.msra.mxu0 0.0
        %752 = vmatprep.subr.mxu0 0.0
        %753 = vmatpush1.xpose.msra.mxu0 0.0
        %754 = vmatprep.subr.mxu0 0.0
        %755 = vmatpush1.xpose.msra.mxu0 0.0
        %756 = vmatprep.subr.mxu0 0.0
        %757 = vmatpush1.xpose.msra.mxu0 0.0
        %758 = vmatprep.subr.mxu0 0.0
        %759 = vmatpush1.xpose.msra.mxu0 0.0
        %760 = vmatprep.subr.mxu0 0.0
        %761 = vmatpush1.xpose.msra.mxu0 0.0
        %762 = vmatprep.subr.mxu0 0.0
        %763 = vmatpush1.xpose.msra.mxu0 0.0
        %764 = vmatprep.subr.mxu0 0.0
        %765 = vmatpush1.xpose.msra.mxu0 0.0
        %766 = vmatprep.subr.mxu0 0.0
        %767 = vmatpush1.xpose.msra.mxu0 0.0
        %768 = vmatprep.subr.mxu0 0.0
        %769 = vmatpush1.xpose.msra.mxu0 0.0
        %770 = vmatprep.mubr.f32.mxu0 0.0
        %771 = vmatmul.mubr.f32.gmra.mrb[0].mxu0 %v700
        %v772 = vpop.f32.mrb[0].mxu0
        %v773 = vadd.f32 0.0, %v772
        %v774 = vpop.f32.mrb[0].mxu0
        %775 = vdwg.mxu0
        %v776 = vsel %vm608, %v773, -inf
        %777 = vmax.xlane.f32.xlu0 %v776
        %v778 = vpop.xlane.xlu0 %777
        %v779 = vsub.f32 %v773, %v778
        %v780 = vmul.f32 %v779, 1.442695
        %v781 = vpow.pop %v780
        %v782 = vsel %vm608, %v781, 0.0
        %783 = vadd.xlane.f32.xlu0 %v782
        %v784 = vpop.xlane.xlu0 %783
        %v785 = vrcp.pop %v784
        %v786 = vmul.f32 %v781, %v785
        %v790 = vsel %vm608, %v786, 0
        %792 = vmatprep.subr.mxu0 0.0
        %793 = vmatpush1.msra.mxu0 %v697
        %794 = vmatprep.subr.mxu0 0.0
        %795 = vmatpush1.msra.mxu0 %v699
        %796 = vmatprep.subr.mxu0 0.0
        %797 = vmatpush1.msra.mxu0 0.0
        %798 = vmatprep.subr.mxu0 0.0
        %799 = vmatpush1.msra.mxu0 0.0
        %800 = vmatprep.subr.mxu0 0.0
        %801 = vmatpush1.msra.mxu0 0.0
        %802 = vmatprep.subr.mxu0 0.0
        %803 = vmatpush1.msra.mxu0 0.0
        %804 = vmatprep.subr.mxu0 0.0
        %805 = vmatpush1.msra.mxu0 0.0
        %806 = vmatprep.subr.mxu0 0.0
        %807 = vmatpush1.msra.mxu0 0.0
        %808 = vmatprep.subr.mxu0 0.0
        %809 = vmatpush1.msra.mxu0 0.0
        %810 = vmatprep.subr.mxu0 0.0
        %811 = vmatpush1.msra.mxu0 0.0
        %812 = vmatprep.subr.mxu0 0.0
        %813 = vmatpush1.msra.mxu0 0.0
        %814 = vmatprep.subr.mxu0 0.0
        %815 = vmatpush1.msra.mxu0 0.0
        %816 = vmatprep.subr.mxu0 0.0
        %817 = vmatpush1.msra.mxu0 0.0
        %818 = vmatprep.subr.mxu0 0.0
        %819 = vmatpush1.msra.mxu0 0.0
        %820 = vmatprep.subr.mxu0 0.0
        %821 = vmatpush1.msra.mxu0 0.0
        %822 = vmatprep.subr.mxu0 0.0
        %823 = vmatpush1.msra.mxu0 0.0
        %824 = vmatprep.subr.mxu0 0.0
        %825 = vmatpush1.msra.mxu0 0.0
        %826 = vmatprep.subr.mxu0 0.0
        %827 = vmatpush1.msra.mxu0 0.0
        %828 = vmatprep.subr.mxu0 0.0
        %829 = vmatpush1.msra.mxu0 0.0
        %830 = vmatprep.subr.mxu0 0.0
        %831 = vmatpush1.msra.mxu0 0.0
        %832 = vmatprep.subr.mxu0 0.0
        %833 = vmatpush1.msra.mxu0 0.0
        %834 = vmatprep.subr.mxu0 0.0
        %835 = vmatpush1.msra.mxu0 0.0
        %836 = vmatprep.subr.mxu0 0.0
        %837 = vmatpush1.msra.mxu0 0.0
        %838 = vmatprep.subr.mxu0 0.0
        %839 = vmatpush1.msra.mxu0 0.0
        %840 = vmatprep.subr.mxu0 0.0
        %841 = vmatpush1.msra.mxu0 0.0
        %842 = vmatprep.subr.mxu0 0.0
        %843 = vmatpush1.msra.mxu0 0.0
        %844 = vmatprep.subr.mxu0 0.0
        %845 = vmatpush1.msra.mxu0 0.0
        %846 = vmatprep.subr.mxu0 0.0
        %847 = vmatpush1.msra.mxu0 0.0
        %848 = vmatprep.subr.mxu0 0.0
        %849 = vmatpush1.msra.mxu0 0.0
        %850 = vmatprep.subr.mxu0 0.0
        %851 = vmatpush1.msra.mxu0 0.0
        %852 = vmatprep.subr.mxu0 0.0
        %853 = vmatpush1.msra.mxu0 0.0
        %854 = vmatprep.subr.mxu0 0.0
        %855 = vmatpush1.msra.mxu0 0.0
        %856 = vmatprep.mubr.f32.mxu0 0.0
        %857 = vmatmul.mubr.f32.gmra.mrb[0].mxu0 %v790
        %v858 = vpop.f32.mrb[0].mxu0
        %v859 = vadd.f32 0.0, %v858
        %v860 = vpop.f32.mrb[0].mxu0
        %861 = vdwg.mxu0
        %863 = vrot.lane.b32.xlu0 %v859, 8
        %v864 = vpop.permute.xlu0 %863
        %vm866 = vcmask 130112
        %867 = vst.msk [vmem:[#allocation2] sm:$0xff] %vm866, %v864
        %868 = vrot.lane.b32.xlu0 %v426, 112
        %v869 = vpop.permute.xlu0 %868
        %870 = vrot.lane.b32.xlu0 %v520, 112
        %v871 = vpop.permute.xlu0 %870
        %872 = vrot.lane.b32.xlu0 %v525, 112
        %v873 = vpop.permute.xlu0 %872
        %v874 = vsel %vm528, %v869, 0
        %v876 = vsel %vm528, %v871, 0
        %v878 = vsel %vm528, %v873, 0
        %880 = vmatprep.subr.mxu0 0.0
        %881 = vmatpush1.xpose.msra.mxu0 %v876
        %882 = vmatprep.subr.mxu0 0.0
        %883 = vmatpush1.xpose.msra.mxu0 %v878
        %884 = vmatprep.subr.mxu0 0.0
        %885 = vmatpush1.xpose.msra.mxu0 0.0
        %886 = vmatprep.subr.mxu0 0.0
        %887 = vmatpush1.xpose.msra.mxu0 0.0
        %888 = vmatprep.subr.mxu0 0.0
        %889 = vmatpush1.xpose.msra.mxu0 0.0
        %890 = vmatprep.subr.mxu0 0.0
        %891 = vmatpush1.xpose.msra.mxu0 0.0
        %892 = vmatprep.subr.mxu0 0.0
        %893 = vmatpush1.xpose.msra.mxu0 0.0
        %894 = vmatprep.subr.mxu0 0.0
        %895 = vmatpush1.xpose.msra.mxu0 0.0
        %896 = vmatprep.subr.mxu0 0.0
        %897 = vmatpush1.xpose.msra.mxu0 0.0
        %898 = vmatprep.subr.mxu0 0.0
        %899 = vmatpush1.xpose.msra.mxu0 0.0
        %900 = vmatprep.subr.mxu0 0.0
        %901 = vmatpush1.xpose.msra.mxu0 0.0
        %902 = vmatprep.subr.mxu0 0.0
        %903 = vmatpush1.xpose.msra.mxu0 0.0
        %904 = vmatprep.subr.mxu0 0.0
        %905 = vmatpush1.xpose.msra.mxu0 0.0
        %906 = vmatprep.subr.mxu0 0.0
        %907 = vmatpush1.xpose.msra.mxu0 0.0
        %908 = vmatprep.subr.mxu0 0.0
        %909 = vmatpush1.xpose.msra.mxu0 0.0
        %910 = vmatprep.subr.mxu0 0.0
        %911 = vmatpush1.xpose.msra.mxu0 0.0
        %912 = vmatprep.subr.mxu0 0.0
        %913 = vmatpush1.xpose.msra.mxu0 0.0
        %914 = vmatprep.subr.mxu0 0.0
        %915 = vmatpush1.xpose.msra.mxu0 0.0
        %916 = vmatprep.subr.mxu0 0.0
        %917 = vmatpush1.xpose.msra.mxu0 0.0
        %918 = vmatprep.subr.mxu0 0.0
        %919 = vmatpush1.xpose.msra.mxu0 0.0
        %920 = vmatprep.subr.mxu0 0.0
        %921 = vmatpush1.xpose.msra.mxu0 0.0
        %922 = vmatprep.subr.mxu0 0.0
        %923 = vmatpush1.xpose.msra.mxu0 0.0
        %924 = vmatprep.subr.mxu0 0.0
        %925 = vmatpush1.xpose.msra.mxu0 0.0
        %926 = vmatprep.subr.mxu0 0.0
        %927 = vmatpush1.xpose.msra.mxu0 0.0
        %928 = vmatprep.subr.mxu0 0.0
        %929 = vmatpush1.xpose.msra.mxu0 0.0
        %930 = vmatprep.subr.mxu0 0.0
        %931 = vmatpush1.xpose.msra.mxu0 0.0
        %932 = vmatprep.subr.mxu0 0.0
        %933 = vmatpush1.xpose.msra.mxu0 0.0
        %934 = vmatprep.subr.mxu0 0.0
        %935 = vmatpush1.xpose.msra.mxu0 0.0
        %936 = vmatprep.subr.mxu0 0.0
        %937 = vmatpush1.xpose.msra.mxu0 0.0
        %938 = vmatprep.subr.mxu0 0.0
        %939 = vmatpush1.xpose.msra.mxu0 0.0
        %940 = vmatprep.subr.mxu0 0.0
        %941 = vmatpush1.xpose.msra.mxu0 0.0
        %942 = vmatprep.subr.mxu0 0.0
        %943 = vmatpush1.xpose.msra.mxu0 0.0
        %944 = vmatprep.mubr.f32.mxu0 0.0
        %945 = vmatmul.mubr.f32.gmra.mrb[0].mxu0 %v874
        %v946 = vpop.f32.mrb[0].mxu0
        %v947 = vadd.f32 0.0, %v946
        %v948 = vpop.f32.mrb[0].mxu0
        %949 = vdwg.mxu0
        %v950 = vsel %vm608, %v947, -inf
        %951 = vmax.xlane.f32.xlu0 %v950
        %v952 = vpop.xlane.xlu0 %951
        %v953 = vsub.f32 %v947, %v952
        %v954 = vmul.f32 %v953, 1.442695
        %v955 = vpow.pop %v954
        %v956 = vsel %vm608, %v955, 0.0
        %957 = vadd.xlane.f32.xlu0 %v956
        %v958 = vpop.xlane.xlu0 %957
        %v959 = vrcp.pop %v958
        %v960 = vmul.f32 %v955, %v959
        %v964 = vsel %vm608, %v960, 0
        %966 = vmatprep.subr.mxu0 0.0
        %967 = vmatpush1.msra.mxu0 %v871
        %968 = vmatprep.subr.mxu0 0.0
        %969 = vmatpush1.msra.mxu0 %v873
        %970 = vmatprep.subr.mxu0 0.0
        %971 = vmatpush1.msra.mxu0 0.0
        %972 = vmatprep.subr.mxu0 0.0
        %973 = vmatpush1.msra.mxu0 0.0
        %974 = vmatprep.subr.mxu0 0.0
        %975 = vmatpush1.msra.mxu0 0.0
        %976 = vmatprep.subr.mxu0 0.0
        %977 = vmatpush1.msra.mxu0 0.0
        %978 = vmatprep.subr.mxu0 0.0
        %979 = vmatpush1.msra.mxu0 0.0
        %980 = vmatprep.subr.mxu0 0.0
        %981 = vmatpush1.msra.mxu0 0.0
        %982 = vmatprep.subr.mxu0 0.0
        %983 = vmatpush1.msra.mxu0 0.0
        %984 = vmatprep.subr.mxu0 0.0
        %985 = vmatpush1.msra.mxu0 0.0
        %986 = vmatprep.subr.mxu0 0.0
        %987 = vmatpush1.msra.mxu0 0.0
        %988 = vmatprep.subr.mxu0 0.0
        %989 = vmatpush1.msra.mxu0 0.0
        %990 = vmatprep.subr.mxu0 0.0
        %991 = vmatpush1.msra.mxu0 0.0
        %992 = vmatprep.subr.mxu0 0.0
        %993 = vmatpush1.msra.mxu0 0.0
        %994 = vmatprep.subr.mxu0 0.0
        %995 = vmatpush1.msra.mxu0 0.0
        %996 = vmatprep.subr.mxu0 0.0
        %997 = vmatpush1.msra.mxu0 0.0
        %998 = vmatprep.subr.mxu0 0.0
        %999 = vmatpush1.msra.mxu0 0.0
        %1000 = vmatprep.subr.mxu0 0.0
        %1001 = vmatpush1.msra.mxu0 0.0
        %1002 = vmatprep.subr.mxu0 0.0
        %1003 = vmatpush1.msra.mxu0 0.0
        %1004 = vmatprep.subr.mxu0 0.0
        %1005 = vmatpush1.msra.mxu0 0.0
        %1006 = vmatprep.subr.mxu0 0.0
        %1007 = vmatpush1.msra.mxu0 0.0
        %1008 = vmatprep.subr.mxu0 0.0
        %1009 = vmatpush1.msra.mxu0 0.0
        %1010 = vmatprep.subr.mxu0 0.0
        %1011 = vmatpush1.msra.mxu0 0.0
        %1012 = vmatprep.subr.mxu0 0.0
        %1013 = vmatpush1.msra.mxu0 0.0
        %1014 = vmatprep.subr.mxu0 0.0
        %1015 = vmatpush1.msra.mxu0 0.0
        %1016 = vmatprep.subr.mxu0 0.0
        %1017 = vmatpush1.msra.mxu0 0.0
        %1018 = vmatprep.subr.mxu0 0.0
        %1019 = vmatpush1.msra.mxu0 0.0
        %1020 = vmatprep.subr.mxu0 0.0
        %1021 = vmatpush1.msra.mxu0 0.0
        %1022 = vmatprep.subr.mxu0 0.0
        %1023 = vmatpush1.msra.mxu0 0.0
        %1024 = vmatprep.subr.mxu0 0.0
        %1025 = vmatpush1.msra.mxu0 0.0
        %1026 = vmatprep.subr.mxu0 0.0
        %1027 = vmatpush1.msra.mxu0 0.0
        %1028 = vmatprep.subr.mxu0 0.0
        %1029 = vmatpush1.msra.mxu0 0.0
        %1030 = vmatprep.mubr.f32.mxu0 0.0
        %1031 = vmatmul.mubr.f32.gmra.mrb[0].mxu0 %v964
        %v1032 = vpop.f32.mrb[0].mxu0
        %v1033 = vadd.f32 0.0, %v1032
        %v1034 = vpop.f32.mrb[0].mxu0
        %1035 = vdwg.mxu0
        %1037 = vrot.lane.b32.xlu0 %v1033, 16
        %v1038 = vpop.permute.xlu0 %1037
        %vm1040 = vcmask 195712
        %1041 = vst.msk [vmem:[#allocation2] sm:$0xff] %vm1040, %v1038
        %1042 = vrot.lane.b32.xlu0 %v426, 104
        %v1043 = vpop.permute.xlu0 %1042
        %1044 = vrot.lane.b32.xlu0 %v520, 104
        %v1045 = vpop.permute.xlu0 %1044
        %1046 = vrot.lane.b32.xlu0 %v525, 104
        %v1047 = vpop.permute.xlu0 %1046
        %v1048 = vsel %vm528, %v1043, 0
        %v1050 = vsel %vm528, %v1045, 0
        %v1052 = vsel %vm528, %v1047, 0
        %1054 = vmatprep.subr.mxu0 0.0
        %1055 = vmatpush1.xpose.msra.mxu0 %v1050
        %1056 = vmatprep.subr.mxu0 0.0
        %1057 = vmatpush1.xpose.msra.mxu0 %v1052
        %1058 = vmatprep.subr.mxu0 0.0
        %1059 = vmatpush1.xpose.msra.mxu0 0.0
        %1060 = vmatprep.subr.mxu0 0.0
        %1061 = vmatpush1.xpose.msra.mxu0 0.0
        %1062 = vmatprep.subr.mxu0 0.0
        %1063 = vmatpush1.xpose.msra.mxu0 0.0
        %1064 = vmatprep.subr.mxu0 0.0
        %1065 = vmatpush1.xpose.msra.mxu0 0.0
        %1066 = vmatprep.subr.mxu0 0.0
        %1067 = vmatpush1.xpose.msra.mxu0 0.0
        %1068 = vmatprep.subr.mxu0 0.0
        %1069 = vmatpush1.xpose.msra.mxu0 0.0
        %1070 = vmatprep.subr.mxu0 0.0
        %1071 = vmatpush1.xpose.msra.mxu0 0.0
        %1072 = vmatprep.subr.mxu0 0.0
        %1073 = vmatpush1.xpose.msra.mxu0 0.0
        %1074 = vmatprep.subr.mxu0 0.0
        %1075 = vmatpush1.xpose.msra.mxu0 0.0
        %1076 = vmatprep.subr.mxu0 0.0
        %1077 = vmatpush1.xpose.msra.mxu0 0.0
        %1078 = vmatprep.subr.mxu0 0.0
        %1079 = vmatpush1.xpose.msra.mxu0 0.0
        %1080 = vmatprep.subr.mxu0 0.0
        %1081 = vmatpush1.xpose.msra.mxu0 0.0
        %1082 = vmatprep.subr.mxu0 0.0
        %1083 = vmatpush1.xpose.msra.mxu0 0.0
        %1084 = vmatprep.subr.mxu0 0.0
        %1085 = vmatpush1.xpose.msra.mxu0 0.0
        %1086 = vmatprep.subr.mxu0 0.0
        %1087 = vmatpush1.xpose.msra.mxu0 0.0
        %1088 = vmatprep.subr.mxu0 0.0
        %1089 = vmatpush1.xpose.msra.mxu0 0.0
        %1090 = vmatprep.subr.mxu0 0.0
        %1091 = vmatpush1.xpose.msra.mxu0 0.0
        %1092 = vmatprep.subr.mxu0 0.0
        %1093 = vmatpush1.xpose.msra.mxu0 0.0
        %1094 = vmatprep.subr.mxu0 0.0
        %1095 = vmatpush1.xpose.msra.mxu0 0.0
        %1096 = vmatprep.subr.mxu0 0.0
        %1097 = vmatpush1.xpose.msra.mxu0 0.0
        %1098 = vmatprep.subr.mxu0 0.0
        %1099 = vmatpush1.xpose.msra.mxu0 0.0
        %1100 = vmatprep.subr.mxu0 0.0
        %1101 = vmatpush1.xpose.msra.mxu0 0.0
        %1102 = vmatprep.subr.mxu0 0.0
        %1103 = vmatpush1.xpose.msra.mxu0 0.0
        %1104 = vmatprep.subr.mxu0 0.0
        %1105 = vmatpush1.xpose.msra.mxu0 0.0
        %1106 = vmatprep.subr.mxu0 0.0
        %1107 = vmatpush1.xpose.msra.mxu0 0.0
        %1108 = vmatprep.subr.mxu0 0.0
        %1109 = vmatpush1.xpose.msra.mxu0 0.0
        %1110 = vmatprep.subr.mxu0 0.0
        %1111 = vmatpush1.xpose.msra.mxu0 0.0
        %1112 = vmatprep.subr.mxu0 0.0
        %1113 = vmatpush1.xpose.msra.mxu0 0.0
        %1114 = vmatprep.subr.mxu0 0.0
        %1115 = vmatpush1.xpose.msra.mxu0 0.0
        %1116 = vmatprep.subr.mxu0 0.0
        %1117 = vmatpush1.xpose.msra.mxu0 0.0
        %1118 = vmatprep.mubr.f32.mxu0 0.0
        %1119 = vmatmul.mubr.f32.gmra.mrb[0].mxu0 %v1048
        %v1120 = vpop.f32.mrb[0].mxu0
        %v1121 = vadd.f32 0.0, %v1120
        %v1122 = vpop.f32.mrb[0].mxu0
        %1123 = vdwg.mxu0
        %v1124 = vsel %vm608, %v1121, -inf
        %1125 = vmax.xlane.f32.xlu0 %v1124
        %v1126 = vpop.xlane.xlu0 %1125
        %v1127 = vsub.f32 %v1121, %v1126
        %v1128 = vmul.f32 %v1127, 1.442695
        %v1129 = vpow.pop %v1128
        %v1130 = vsel %vm608, %v1129, 0.0
        %1131 = vadd.xlane.f32.xlu0 %v1130
        %v1132 = vpop.xlane.xlu0 %1131
        %v1133 = vrcp.pop %v1132
        %v1134 = vmul.f32 %v1129, %v1133
        %v1138 = vsel %vm608, %v1134, 0
        %1140 = vmatprep.subr.mxu0 0.0
        %1141 = vmatpush1.msra.mxu0 %v1045
        %1142 = vmatprep.subr.mxu0 0.0
        %1143 = vmatpush1.msra.mxu0 %v1047
        %1144 = vmatprep.subr.mxu0 0.0
        %1145 = vmatpush1.msra.mxu0 0.0
        %1146 = vmatprep.subr.mxu0 0.0
        %1147 = vmatpush1.msra.mxu0 0.0
        %1148 = vmatprep.subr.mxu0 0.0
        %1149 = vmatpush1.msra.mxu0 0.0
        %1150 = vmatprep.subr.mxu0 0.0
        %1151 = vmatpush1.msra.mxu0 0.0
        %1152 = vmatprep.subr.mxu0 0.0
        %1153 = vmatpush1.msra.mxu0 0.0
        %1154 = vmatprep.subr.mxu0 0.0
        %1155 = vmatpush1.msra.mxu0 0.0
        %1156 = vmatprep.subr.mxu0 0.0
        %1157 = vmatpush1.msra.mxu0 0.0
        %1158 = vmatprep.subr.mxu0 0.0
        %1159 = vmatpush1.msra.mxu0 0.0
        %1160 = vmatprep.subr.mxu0 0.0
        %1161 = vmatpush1.msra.mxu0 0.0
        %1162 = vmatprep.subr.mxu0 0.0
        %1163 = vmatpush1.msra.mxu0 0.0
        %1164 = vmatprep.subr.mxu0 0.0
        %1165 = vmatpush1.msra.mxu0 0.0
        %1166 = vmatprep.subr.mxu0 0.0
        %1167 = vmatpush1.msra.mxu0 0.0
        %1168 = vmatprep.subr.mxu0 0.0
        %1169 = vmatpush1.msra.mxu0 0.0
        %1170 = vmatprep.subr.mxu0 0.0
        %1171 = vmatpush1.msra.mxu0 0.0
        %1172 = vmatprep.subr.mxu0 0.0
        %1173 = vmatpush1.msra.mxu0 0.0
        %1174 = vmatprep.subr.mxu0 0.0
        %1175 = vmatpush1.msra.mxu0 0.0
        %1176 = vmatprep.subr.mxu0 0.0
        %1177 = vmatpush1.msra.mxu0 0.0
        %1178 = vmatprep.subr.mxu0 0.0
        %1179 = vmatpush1.msra.mxu0 0.0
        %1180 = vmatprep.subr.mxu0 0.0
        %1181 = vmatpush1.msra.mxu0 0.0
        %1182 = vmatprep.subr.mxu0 0.0
        %1183 = vmatpush1.msra.mxu0 0.0
        %1184 = vmatprep.subr.mxu0 0.0
        %1185 = vmatpush1.msra.mxu0 0.0
        %1186 = vmatprep.subr.mxu0 0.0
        %1187 = vmatpush1.msra.mxu0 0.0
        %1188 = vmatprep.subr.mxu0 0.0
        %1189 = vmatpush1.msra.mxu0 0.0
        %1190 = vmatprep.subr.mxu0 0.0
        %1191 = vmatpush1.msra.mxu0 0.0
        %1192 = vmatprep.subr.mxu0 0.0
        %1193 = vmatpush1.msra.mxu0 0.0
        %1194 = vmatprep.subr.mxu0 0.0
        %1195 = vmatpush1.msra.mxu0 0.0
        %1196 = vmatprep.subr.mxu0 0.0
        %1197 = vmatpush1.msra.mxu0 0.0
        %1198 = vmatprep.subr.mxu0 0.0
        %1199 = vmatpush1.msra.mxu0 0.0
        %1200 = vmatprep.subr.mxu0 0.0
        %1201 = vmatpush1.msra.mxu0 0.0
        %1202 = vmatprep.subr.mxu0 0.0
        %1203 = vmatpush1.msra.mxu0 0.0
        %1204 = vmatprep.mubr.f32.mxu0 0.0
        %1205 = vmatmul.mubr.f32.gmra.mrb[0].mxu0 %v1138
        %v1206 = vpop.f32.mrb[0].mxu0
        %v1207 = vadd.f32 0.0, %v1206
        %v1208 = vpop.f32.mrb[0].mxu0
        %1209 = vdwg.mxu0
        %1211 = vrot.lane.b32.xlu0 %v1207, 24
        %v1212 = vpop.permute.xlu0 %1211
        %vm1214 = vcmask 261312
        %1215 = vst.msk [vmem:[#allocation2] sm:$0xff] %vm1214, %v1212
        %v1216 = vld [vmem:[#allocation2] sm:$0xff]
        %v1217 = vld [vmem:[%s6] sm:$0xff]
        %v1218 = vld [vmem:[%s6 + $0x8] sm:$0xff]
        %v1219 = vld [vmem:[%s6 + $0x10] sm:$0xff]
        %v1220 = vld [vmem:[%s6 + $0x18] sm:$0xff]
        %v1221 = vld [vmem:[%s7] sm:$0x1]
        %v1223 = vlaneseq
        %v1224 = vshrl.u32 %v1223, 7
        %v1225 = vsub.s32 0, %v1224
        %v1226 = vrot.slane %v1221, %v1225
        %v1229 = vsel %vm355, %v1216, 0
        %1231 = vmatprep.subr.mxu0 0.0
        %1232 = vmatpush1.msra.mxu0 %v1217
        %1233 = vmatprep.subr.mxu0 0.0
        %1234 = vmatpush1.msra.mxu0 %v1218
        %1235 = vmatprep.subr.mxu0 0.0
        %1236 = vmatpush1.msra.mxu0 %v1219
        %1237 = vmatprep.subr.mxu0 0.0
        %1238 = vmatpush1.msra.mxu0 %v1220
        %1239 = vmatprep.subr.mxu0 0.0
        %1240 = vmatpush1.msra.mxu0 0.0
        %1241 = vmatprep.subr.mxu0 0.0
        %1242 = vmatpush1.msra.mxu0 0.0
        %1243 = vmatprep.subr.mxu0 0.0
        %1244 = vmatpush1.msra.mxu0 0.0
        %1245 = vmatprep.subr.mxu0 0.0
        %1246 = vmatpush1.msra.mxu0 0.0
        %1247 = vmatprep.subr.mxu0 0.0
        %1248 = vmatpush1.msra.mxu0 0.0
        %1249 = vmatprep.subr.mxu0 0.0
        %1250 = vmatpush1.msra.mxu0 0.0
        %1251 = vmatprep.subr.mxu0 0.0
        %1252 = vmatpush1.msra.mxu0 0.0
        %1253 = vmatprep.subr.mxu0 0.0
        %1254 = vmatpush1.msra.mxu0 0.0
        %1255 = vmatprep.subr.mxu0 0.0
        %1256 = vmatpush1.msra.mxu0 0.0
        %1257 = vmatprep.subr.mxu0 0.0
        %1258 = vmatpush1.msra.mxu0 0.0
        %1259 = vmatprep.subr.mxu0 0.0
        %1260 = vmatpush1.msra.mxu0 0.0
        %1261 = vmatprep.subr.mxu0 0.0
        %1262 = vmatpush1.msra.mxu0 0.0
        %1263 = vmatprep.subr.mxu0 0.0
        %1264 = vmatpush1.msra.mxu0 0.0
        %1265 = vmatprep.subr.mxu0 0.0
        %1266 = vmatpush1.msra.mxu0 0.0
        %1267 = vmatprep.subr.mxu0 0.0
        %1268 = vmatpush1.msra.mxu0 0.0
        %1269 = vmatprep.subr.mxu0 0.0
        %1270 = vmatpush1.msra.mxu0 0.0
        %1271 = vmatprep.subr.mxu0 0.0
        %1272 = vmatpush1.msra.mxu0 0.0
        %1273 = vmatprep.subr.mxu0 0.0
        %1274 = vmatpush1.msra.mxu0 0.0
        %1275 = vmatprep.subr.mxu0 0.0
        %1276 = vmatpush1.msra.mxu0 0.0
        %1277 = vmatprep.subr.mxu0 0.0
        %1278 = vmatpush1.msra.mxu0 0.0
        %1279 = vmatprep.subr.mxu0 0.0
        %1280 = vmatpush1.msra.mxu0 0.0
        %1281 = vmatprep.subr.mxu0 0.0
        %1282 = vmatpush1.msra.mxu0 0.0
        %1283 = vmatprep.subr.mxu0 0.0
        %1284 = vmatpush1.msra.mxu0 0.0
        %1285 = vmatprep.subr.mxu0 0.0
        %1286 = vmatpush1.msra.mxu0 0.0
        %1287 = vmatprep.subr.mxu0 0.0
        %1288 = vmatpush1.msra.mxu0 0.0
        %1289 = vmatprep.subr.mxu0 0.0
        %1290 = vmatpush1.msra.mxu0 0.0
        %1291 = vmatprep.subr.mxu0 0.0
        %1292 = vmatpush1.msra.mxu0 0.0
        %1293 = vmatprep.subr.mxu0 0.0
        %1294 = vmatpush1.msra.mxu0 0.0
        %1295 = vmatprep.mubr.f32.mxu0 0.0
        %1296 = vmatmul.mubr.f32.gmra.mrb[0].mxu0 %v1229
        %v1297 = vpop.f32.mrb[0].mxu0
        %v1298 = vadd.f32 %v1226, %v1297
        %v1299 = vpop.f32.mrb[0].mxu0
        %1300 = vdwg.mxu0
        %1301 = vst.msk [vmem:[%s336] sm:$0xff] %vm355, %v1298
        %s1302 = sand.u32 %s211, 1
        %s1303 = scalar_lea.sflag [#allocation5], %s1302
        %s1304 = sand.u32 %s211, 1
        %s1305 = smul.addr %s1304, 8
        %s1306 = scalar_lea.vmem [#allocation6], %s1305
        // Predicated region
        $region57: #{tpu_custom_call.1} parent=51 // pred_check
          %p1307 = pneg %p221
        $region58: #{tpu_custom_call.1} parent=51 // pred_check_branch
          %1309 = sbr.rel (%p1307) target = $region60
        $region59: #{tpu_custom_call.1} parent=51 // pred_region
          %s1311 = ssub.s32 128, 128
          %1312 = vsyncadd %s1303, %s1311
          %s1313 = smul.addr %s25, 128
          %s1314 = scalar_lea.hbm %s8, %s1313
          %s1316 = sshll.u32 %s1306, 4
          %s1317 = int_to_ptr.vmem [resolvable:$true] %s1316
          %1319 = dma.vmem_to_hbm [thread:$0]  %s1317, 128, %s1314, %s1303
        $region60: #{tpu_custom_call.1} parent=51 // pred_fallthru
          _
      $region52: #{tpu_custom_call.1} parent=5 // pred_fallthru
        _
      %p1320 = scmp.le.s32.totalorder 2, %s20
      // Predicated region
      $region61: #{tpu_custom_call.1} parent=5 // pred_check
        %p1321 = pneg %p1320
      $region62: #{tpu_custom_call.1} parent=5 // pred_check_branch
        %1323 = sbr.rel (%p1321) target = $region64
      $region63: #{tpu_custom_call.1} parent=5 // pred_region
        %s1324 = ssub.s32 %s20, 2
        // Predicated region
        $region65: #{tpu_custom_call.1} parent=63 // pred_check
          %p1325 = pneg %p227
        $region66: #{tpu_custom_call.1} parent=63 // pred_check_branch
          %1327 = sbr.rel (%p1325) target = $region68
        $region67: #{tpu_custom_call.1} parent=63 // pred_region
          %s1328 = sand.u32 %s212, 1
          %s1329 = scalar_lea.sflag [#allocation5], %s1328
          %s1330 = sand.u32 %s212, 1
          %s1331 = smul.addr %s1330, 8
          %s1332 = scalar_lea.vmem [#allocation6], %s1331
          %1333 = dma.done %s1329, 128
        $region68: #{tpu_custom_call.1} parent=63 // pred_fallthru
          _
      $region64: #{tpu_custom_call.1} parent=5 // pred_fallthru
        _
    $region6: #{tpu_custom_call.1} parent=1 // loop_footer
      %s24 = sadd.s32 1, %s20
    $region7: #{tpu_custom_call.1} parent=1 // loop_footer_branch
      %19 = sbr.rel target = $region3
    $region8: #{tpu_custom_call.1} parent=1 // loop_exit
      _
    %1334 = vsyncpa [#allocation4], 1
    %s1335 = scalar_lea.sflag [#allocation4], 1
    %1336 = vsyncpa %s1335, 1
    %1337 = vsyncpa [#allocation5], 1
    %s1338 = scalar_lea.sflag [#allocation5], 1
    %1339 = vsyncpa %s1338, 1

// kernel: tpu_custom_call.1
$region0: #{tpu_custom_call.1}
  #allocation0 [shape = 'u32[]', space=smem, size = 0x4, offset = 0x4, fixed_abs, tag = 'smem constant byte address 0x4 - core index']
  #allocation1 [shape = 'u32[144,128]{1,0:T(1,128)}', space=vmem, size = 0x12000, scoped, tag = 'internal scratch']
  #allocation2 [shape = 'f32[1,8,32]{2,1,0:T(8,128)}', space=vmem, size = 0x1000, scoped, tag = 'scratch operand']
  %s0 = inlined_call_operand.hbm [shape: f32[16,32], index: 0, kind: input, shape index: {}]
  %s1 = inlined_call_operand.vmem [shape: f32[32,64], index: 1, kind: input, shape index: {}]
  %s2 = inlined_call_operand.vmem [shape: f32[32,32], index: 2, kind: input, shape index: {}]
  %s3 = inlined_call_operand.vmem [shape: f32[1,32], index: 3, kind: input, shape index: {}]
  %s4 = inlined_call_operand.vmem [shape: f32[64,32], index: 4, kind: input, shape index: {}]
  %s5 = inlined_call_operand.vmem [shape: f32[1,32], index: 5, kind: input, shape index: {}]
  %s6 = inlined_call_operand.vmem [shape: f32[32,32], index: 6, kind: input, shape index: {}]
  %s7 = inlined_call_operand.vmem [shape: f32[1,32], index: 7, kind: input, shape index: {}]
  %s8 = inlined_call_operand.hbm [shape: f32[16,32], index: 8, kind: output, shape index: {}]
  %s9 = sld [smem:[#allocation0]]
  $region69: #{tpu_custom_call.1} parent=0
    _
  %s11 = ssub.s32 1, %s9
  %s12 = scalar_select 0, %s11, %s9
  $region1: #{tpu_custom_call.1} parent=0
    #allocation3 [shape = 'u8[8192]{0}', space=vmem, size = 0x2000, scoped, tag = 'input window, operand 0']
    #allocation4 [shape = 's32[2]{0}', space=sflag, size = 0x8, scoped, tag = 'scoped memory for tpu_custom_call.1']
    #allocation5 [shape = 's32[2]{0}', space=sflag, size = 0x8, scoped, tag = 'scoped memory for tpu_custom_call.1']
    #allocation6 [shape = 'u8[8192]{0}', space=vmem, size = 0x2000, scoped, tag = 'output window, operand 0']
    %13 = vsyncpa [#allocation4], 0
    %s14 = scalar_lea.sflag [#allocation4], 1
    %15 = vsyncpa %s14, 0
    %16 = vsyncpa [#allocation5], 0
    %s17 = scalar_lea.sflag [#allocation5], 1
    %18 = vsyncpa %s17, 0
    loop: start=0, step=1, limit=4
    $region2: #{tpu_custom_call.1} parent=1 // loop_pre_header
      _
    $region3: #{tpu_custom_call.1} parent=1 // loop_header
      %s20 = sphi 0, %s24
      %p21 = scmp.ge.s32.totalorder %s20, 4
      %s30 = sphi 0, %s32
      %s33 = sphi 0, %s30
      %s34 = sphi 0, %s33
      %s50 = sphi 0, %s34
      %s56 = sphi 0, %s58
      %s59 = sphi 0, %s56
      %s60 = sphi 0, %s59
      %s76 = sphi 0, %s60
      %s80 = sphi 0, %s80
      %s82 = sphi 0, %s80
      %s83 = sphi 0, %s82
      %s97 = sphi 0, %s83
      %s101 = sphi 0, %s101
      %s103 = sphi 0, %s101
      %s104 = sphi 0, %s103
      %s118 = sphi 0, %s104
      %s122 = sphi 0, %s122
      %s124 = sphi 0, %s122
      %s125 = sphi 0, %s124
      %s139 = sphi 0, %s125
      %s143 = sphi 0, %s143
      %s145 = sphi 0, %s143
      %s146 = sphi 0, %s145
      %s160 = sphi 0, %s146
      %s164 = sphi 0, %s164
      %s166 = sphi 0, %s164
      %s167 = sphi 0, %s166
      %s181 = sphi 0, %s167
      %s185 = sphi 0, %s185
      %s187 = sphi 0, %s185
      %s188 = sphi 0, %s187
      %s202 = sphi 0, %s188
      %s208 = sphi 0, %s210
      %s211 = sphi 0, %s208
      %s212 = sphi 0, %s211
      %s228 = sphi 0, %s212
    $region4: #{tpu_custom_call.1} parent=1 // loop_header_branch
      %23 = sbr.rel (%p21) target = $region8
    $region5: #{tpu_custom_call.1} parent=1 // loop_body
      %s25 = ssub.s32 %s20, 1
      %s26 = ssub.s32 %s20, 2
      %s27 = sadd.s32 %s20, 1
      %s28 = ssub.s32 %s20, %s27
      %p29 = scmp.eq.s32.totalorder %s28, 0
      %s31 = sadd.s32 %s30, 1
      %s32 = scalar_select %p29, %s30, %s31
      %p35 = pneg %p29
      %p36 = scmp.eq.s32.totalorder %s20, 1
      %p37 = por %p35, %p36
      %p38 = scmp.ne.s32.totalorder %s30, %s33
      %p39 = scmp.eq.s32.totalorder %s20, 0
      %p40 = por %p38, %p39
      %p41 = scmp.ne.s32.totalorder %s30, %s33
      %p42 = scmp.eq.s32.totalorder %s25, 1
      %p43 = por %p41, %p42
      %p44 = scmp.ne.s32.totalorder %s33, %s34
      %p45 = scmp.eq.s32.totalorder %s25, 0
      %p46 = por %p44, %p45
      %p47 = scmp.ne.s32.totalorder %s33, %s34
      %p48 = scmp.eq.s32.totalorder %s26, 1
      %p49 = por %p47, %p48
      %p51 = scmp.ne.s32.totalorder %s34, %s50
      %p52 = scmp.eq.s32.totalorder %s26, 0
      %p53 = por %p51, %p52
      %s54 = ssub.s32 %s20, %s27
      %p55 = scmp.eq.s32.totalorder %s54, 0
      %s57 = sadd.s32 %s56, 1
      %s58 = scalar_select %p55, %s56, %s57
      %p61 = pneg %p55
      %p62 = scmp.eq.s32.totalorder %s20, 1
      %p63 = por %p61, %p62
      %p64 = scmp.ne.s32.totalorder %s56, %s59
      %p65 = scmp.eq.s32.totalorder %s20, 0
      %p66 = por %p64, %p65
      %p67 = scmp.ne.s32.totalorder %s56, %s59
      %p68 = scmp.eq.s32.totalorder %s25, 1
      %p69 = por %p67, %p68
      %p70 = scmp.ne.s32.totalorder %s59, %s60
      %p71 = scmp.eq.s32.totalorder %s25, 0
      %p72 = por %p70, %p71
      %p73 = scmp.ne.s32.totalorder %s59, %s60
      %p74 = scmp.eq.s32.totalorder %s26, 1
      %p75 = por %p73, %p74
      %p77 = scmp.ne.s32.totalorder %s60, %s76
      %p78 = scmp.eq.s32.totalorder %s26, 0
      %p79 = por %p77, %p78
      %s81 = sadd.s32 %s80, 1
      %p84 = scmp.eq.s32.totalorder %s20, 1
      %p85 = scmp.ne.s32.totalorder %s80, %s82
      %p86 = scmp.eq.s32.totalorder %s20, 0
      %p87 = por %p85, %p86
      %p88 = scmp.ne.s32.totalorder %s80, %s82
      %p89 = scmp.eq.s32.totalorder %s25, 1
      %p90 = por %p88, %p89
      %p91 = scmp.ne.s32.totalorder %s82, %s83
      %p92 = scmp.eq.s32.totalorder %s25, 0
      %p93 = por %p91, %p92
      %p94 = scmp.ne.s32.totalorder %s82, %s83
      %p95 = scmp.eq.s32.totalorder %s26, 1
      %p96 = por %p94, %p95
      %p98 = scmp.ne.s32.totalorder %s83, %s97
      %p99 = scmp.eq.s32.totalorder %s26, 0
      %p100 = por %p98, %p99
      %s102 = sadd.s32 %s101, 1
      %p105 = scmp.eq.s32.totalorder %s20, 1
      %p106 = scmp.ne.s32.totalorder %s101, %s103
      %p107 = scmp.eq.s32.totalorder %s20, 0
      %p108 = por %p106, %p107
      %p109 = scmp.ne.s32.totalorder %s101, %s103
      %p110 = scmp.eq.s32.totalorder %s25, 1
      %p111 = por %p109, %p110
      %p112 = scmp.ne.s32.totalorder %s103, %s104
      %p113 = scmp.eq.s32.totalorder %s25, 0
      %p114 = por %p112, %p113
      %p115 = scmp.ne.s32.totalorder %s103, %s104
      %p116 = scmp.eq.s32.totalorder %s26, 1
      %p117 = por %p115, %p116
      %p119 = scmp.ne.s32.totalorder %s104, %s118
      %p120 = scmp.eq.s32.totalorder %s26, 0
      %p121 = por %p119, %p120
      %s123 = sadd.s32 %s122, 1
      %p126 = scmp.eq.s32.totalorder %s20, 1
      %p127 = scmp.ne.s32.totalorder %s122, %s124
      %p128 = scmp.eq.s32.totalorder %s20, 0
      %p129 = por %p127, %p128
      %p130 = scmp.ne.s32.totalorder %s122, %s124
      %p131 = scmp.eq.s32.totalorder %s25, 1
      %p132 = por %p130, %p131
      %p133 = scmp.ne.s32.totalorder %s124, %s125
      %p134 = scmp.eq.s32.totalorder %s25, 0
      %p135 = por %p133, %p134
      %p136 = scmp.ne.s32.totalorder %s124, %s125
      %p137 = scmp.eq.s32.totalorder %s26, 1
      %p138 = por %p136, %p137
      %p140 = scmp.ne.s32.totalorder %s125, %s139
      %p141 = scmp.eq.s32.totalorder %s26, 0
      %p142 = por %p140, %p141
      %s144 = sadd.s32 %s143, 1
      %p147 = scmp.eq.s32.totalorder %s20, 1
      %p148 = scmp.ne.s32.totalorder %s143, %s145
      %p149 = scmp.eq.s32.totalorder %s20, 0
      %p150 = por %p148, %p149
      %p151 = scmp.ne.s32.totalorder %s143, %s145
      %p152 = scmp.eq.s32.totalorder %s25, 1
      %p153 = por %p151, %p152
      %p154 = scmp.ne.s32.totalorder %s145, %s146
      %p155 = scmp.eq.s32.totalorder %s25, 0
      %p156 = por %p154, %p155
      %p157 = scmp.ne.s32.totalorder %s145, %s146
      %p158 = scmp.eq.s32.totalorder %s26, 1
      %p159 = por %p157, %p158
      %p161 = scmp.ne.s32.totalorder %s146, %s160
      %p162 = scmp.eq.s32.totalorder %s26, 0
      %p163 = por %p161, %p162
      %s165 = sadd.s32 %s164, 1
      %p168 = scmp.eq.s32.totalorder %s20, 1
      %p169 = scmp.ne.s32.totalorder %s164, %s166
      %p170 = scmp.eq.s32.totalorder %s20, 0
      %p171 = por %p169, %p170
      %p172 = scmp.ne.s32.totalorder %s164, %s166
      %p173 = scmp.eq.s32.totalorder %s25, 1
      %p174 = por %p172, %p173
      %p175 = scmp.ne.s32.totalorder %s166, %s167
      %p176 = scmp.eq.s32.totalorder %s25, 0
      %p177 = por %p175, %p176
      %p178 = scmp.ne.s32.totalorder %s166, %s167
      %p179 = scmp.eq.s32.totalorder %s26, 1
      %p180 = por %p178, %p179
      %p182 = scmp.ne.s32.totalorder %s167, %s181
      %p183 = scmp.eq.s32.totalorder %s26, 0
      %p184 = por %p182, %p183
      %s186 = sadd.s32 %s185, 1
      %p189 = scmp.eq.s32.totalorder %s20, 1
      %p190 = scmp.ne.s32.totalorder %s185, %s187
      %p191 = scmp.eq.s32.totalorder %s20, 0
      %p192 = por %p190, %p191
      %p193 = scmp.ne.s32.totalorder %s185, %s187
      %p194 = scmp.eq.s32.totalorder %s25, 1
      %p195 = por %p193, %p194
      %p196 = scmp.ne.s32.totalorder %s187, %s188
      %p197 = scmp.eq.s32.totalorder %s25, 0
      %p198 = por %p196, %p197
      %p199 = scmp.ne.s32.totalorder %s187, %s188
      %p200 = scmp.eq.s32.totalorder %s26, 1
      %p201 = por %p199, %p200
      %p203 = scmp.ne.s32.totalorder %s188, %s202
      %p204 = scmp.eq.s32.totalorder %s26, 0
      %p205 = por %p203, %p204
      %s206 = ssub.s32 %s20, %s27
      %p207 = scmp.eq.s32.totalorder %s206, 0
      %s209 = sadd.s32 %s208, 1
      %s210 = scalar_select %p207, %s208, %s209
      %p213 = pneg %p207
      %p214 = scmp.eq.s32.totalorder %s20, 1
      %p215 = por %p213, %p214
      %p216 = scmp.ne.s32.totalorder %s208, %s211
      %p217 = scmp.eq.s32.totalorder %s20, 0
      %p218 = por %p216, %p217
      %p219 = scmp.ne.s32.totalorder %s208, %s211
      %p220 = scmp.eq.s32.totalorder %s25, 1
      %p221 = por %p219, %p220
      %p222 = scmp.ne.s32.totalorder %s211, %s212
      %p223 = scmp.eq.s32.totalorder %s25, 0
      %p224 = por %p222, %p223
      %p225 = scmp.ne.s32.totalorder %s211, %s212
      %p226 = scmp.eq.s32.totalorder %s26, 1
      %p227 = por %p225, %p226
      %p229 = scmp.ne.s32.totalorder %s212, %s228
      %p230 = scmp.eq.s32.totalorder %s26, 0
      %p231 = por %p229, %p230
      %p232 = scmp.le.s32.totalorder 1, %s20
      %p233 = scmp.lt.s32.totalorder %s20, 3
      %p234 = pnand %p232, %p233
      %p235 = pneg %p234
      // Predicated region
      $region9: #{tpu_custom_call.1} parent=5 // pred_check
        _
      $region10: #{tpu_custom_call.1} parent=5 // pred_check_branch
        %237 = sbr.rel (%p234) target = $region12
      $region11: #{tpu_custom_call.1} parent=5 // pred_region
        %s238 = ssub.s32 %s20, 1
        // Predicated region
        $region13: #{tpu_custom_call.1} parent=11 // pred_check
          %p239 = pneg %p93
        $region14: #{tpu_custom_call.1} parent=11 // pred_check_branch
          %241 = sbr.rel (%p239) target = $region16
        $region15: #{tpu_custom_call.1} parent=11 // pred_region
          _
        $region16: #{tpu_custom_call.1} parent=11 // pred_fallthru
          _
        // Predicated region
        $region17: #{tpu_custom_call.1} parent=11 // pred_check
          %p242 = pneg %p114
        $region18: #{tpu_custom_call.1} parent=11 // pred_check_branch
          %244 = sbr.rel (%p242) target = $region20
        $region19: #{tpu_custom_call.1} parent=11 // pred_region
          _
        $region20: #{tpu_custom_call.1} parent=11 // pred_fallthru
          _
        // Predicated region
        $region21: #{tpu_custom_call.1} parent=11 // pred_check
          %p245 = pneg %p135
        $region22: #{tpu_custom_call.1} parent=11 // pred_check_branch
          %247 = sbr.rel (%p245) target = $region24
        $region23: #{tpu_custom_call.1} parent=11 // pred_region
          _
        $region24: #{tpu_custom_call.1} parent=11 // pred_fallthru
          _
        // Predicated region
        $region25: #{tpu_custom_call.1} parent=11 // pred_check
          %p248 = pneg %p156
        $region26: #{tpu_custom_call.1} parent=11 // pred_check_branch
          %250 = sbr.rel (%p248) target = $region28
        $region27: #{tpu_custom_call.1} parent=11 // pred_region
          _
        $region28: #{tpu_custom_call.1} parent=11 // pred_fallthru
          _
        // Predicated region
        $region29: #{tpu_custom_call.1} parent=11 // pred_check
          %p251 = pneg %p177
        $region30: #{tpu_custom_call.1} parent=11 // pred_check_branch
          %253 = sbr.rel (%p251) target = $region32
        $region31: #{tpu_custom_call.1} parent=11 // pred_region
          _
        $region32: #{tpu_custom_call.1} parent=11 // pred_fallthru
          _
        // Predicated region
        $region33: #{tpu_custom_call.1} parent=11 // pred_check
          %p254 = pneg %p198
        $region34: #{tpu_custom_call.1} parent=11 // pred_check_branch
          %256 = sbr.rel (%p254) target = $region36
        $region35: #{tpu_custom_call.1} parent=11 // pred_region
          _
        $region36: #{tpu_custom_call.1} parent=11 // pred_fallthru
          _
      $region12: #{tpu_custom_call.1} parent=5 // pred_fallthru
        _
      %p257 = scmp.lt.s32.totalorder %s20, 2
      // Predicated region
      $region37: #{tpu_custom_call.1} parent=5 // pred_check
        %p258 = pneg %p257
      $region38: #{tpu_custom_call.1} parent=5 // pred_check_branch
        %260 = sbr.rel (%p258) target = $region40
      $region39: #{tpu_custom_call.1} parent=5 // pred_region
        // Predicated region
        $region41: #{tpu_custom_call.1} parent=39 // pred_check
          %p261 = pneg %p40
        $region42: #{tpu_custom_call.1} parent=39 // pred_check_branch
          %263 = sbr.rel (%p261) target = $region44
        $region43: #{tpu_custom_call.1} parent=39 // pred_region
          %s264 = sand.u32 %s30, 1
          %s265 = scalar_lea.sflag [#allocation4], %s264
          %s266 = sand.u32 %s30, 1
          %s267 = smul.addr %s266, 8
          %s268 = scalar_lea.vmem [#allocation3], %s267
          %s270 = ssub.s32 128, 128
          %271 = vsyncadd %s265, %s270
          %s272 = smul.addr %s20, 128
          %s273 = scalar_lea.hbm %s0, %s272
          %s275 = sshll.u32 %s268, 4
          %s276 = int_to_ptr.vmem [resolvable:$true] %s275
          %278 = dma.hbm_to_vmem [thread:$0]  %s273, 128, %s276, %s265
        $region44: #{tpu_custom_call.1} parent=39 // pred_fallthru
          _
        // Predicated region
        $region45: #{tpu_custom_call.1} parent=39 // pred_check
          %p279 = pneg %p66
        $region46: #{tpu_custom_call.1} parent=39 // pred_check_branch
          %281 = sbr.rel (%p279) target = $region48
        $region47: #{tpu_custom_call.1} parent=39 // pred_region
          %s282 = smul.u32 2, %s20
          %p283 = scmp.lt.s32.totalorder %s282, 3
          %s284 = scalar_select %p283, %s282, 3
          %s285 = smul.addr %s284, 8
          %s286 = scalar_lea.vmem %s1, %s285
          %s287 = smul.u32 2, %s20
        $region48: #{tpu_custom_call.1} parent=39 // pred_fallthru
          _
      $region40: #{tpu_custom_call.1} parent=5 // pred_fallthru
        _
      %p288 = scmp.le.s32.totalorder 1, %s20
      %p289 = scmp.lt.s32.totalorder %s20, 3
      %p290 = pnand %p288, %p289
      %p291 = pneg %p290
      // Predicated region
      $region49: #{tpu_custom_call.1} parent=5 // pred_check
        _
      $region50: #{tpu_custom_call.1} parent=5 // pred_check_branch
        %293 = sbr.rel (%p290) target = $region52
      $region51: #{tpu_custom_call.1} parent=5 // pred_region
        %s294 = ssub.s32 %s20, 1
        %s295 = sand.u32 %s33, 1
        %s296 = scalar_lea.sflag [#allocation4], %s295
        %s297 = sand.u32 %s33, 1
        %s298 = smul.addr %s297, 8
        %s299 = scalar_lea.vmem [#allocation3], %s298
        // Predicated region
        $region53: #{tpu_custom_call.1} parent=51 // pred_check
          %p300 = pneg %p46
        $region54: #{tpu_custom_call.1} parent=51 // pred_check_branch
          %302 = sbr.rel (%p300) target = $region56
        $region55: #{tpu_custom_call.1} parent=51 // pred_region
          %303 = dma.done %s296, 128
        $region56: #{tpu_custom_call.1} parent=51 // pred_fallthru
          _
        %s304 = sand.u32 %s33, 1
        %s305 = scalar_lea.sflag [#allocation4], %s304
        %s306 = sand.u32 %s33, 1
        %s307 = smul.addr %s306, 8
        %s308 = scalar_lea.vmem [#allocation3], %s307
        %p309 = pneg %p46
        %p310 = pneg %p43
        %s311 = smul.u32 2, %s25
        %p312 = scmp.lt.s32.totalorder %s311, 3
        %s313 = scalar_select %p312, %s311, 3
        %s314 = smul.addr %s313, 8
        %s315 = scalar_lea.vmem %s1, %s314
        %p316 = pneg %p72
        %p317 = pneg %p69
        %p318 = pneg %p93
        %p319 = pneg %p90
        %p320 = pneg %p114
        %p321 = pneg %p111
        %p322 = pneg %p135
        %p323 = pneg %p132
        %p324 = pneg %p156
        %p325 = pneg %p153
        %p326 = pneg %p177
        %p327 = pneg %p174
        %p328 = pneg %p198
        %p329 = pneg %p195
        %p330 = pneg %p224
        %p331 = pneg %p221
        %s332 = sand.u32 %s211, 1
        %s333 = scalar_lea.sflag [#allocation5], %s332
        %s334 = sand.u32 %s211, 1
        %s335 = smul.addr %s334, 8
        %s336 = scalar_lea.vmem [#allocation6], %s335
        %s337 = smul.u32 2, %s25
        %p338 = scmp.lt.s32.totalorder %s337, 3
        %s339 = scalar_select %p338, %s337, 3
        %s340 = smul.addr %s339, 8
        %s341 = scalar_lea.vmem %s1, %s340
        %s342 = smul.u32 2, %s25
        %v343 = vld [vmem:[%s299] sm:$0xff]
        %v344 = vld [vmem:[%s2] sm:$0xff]
        %v345 = vld [vmem:[%s2 + $0x8] sm:$0xff]
        %v346 = vld [vmem:[%s2 + $0x10] sm:$0xff]
        %v347 = vld [vmem:[%s2 + $0x18] sm:$0xff]
        %v348 = vld [vmem:[%s3] sm:$0x1]
        %v350 = vlaneseq
        %v351 = vshrl.u32 %v350, 7
        %v352 = vsub.s32 0, %v351
        %v353 = vrot.slane %v348, %v352
        %vm355 = vcmask 261120
        %v357 = vsel %vm355, %v343, 0
        %359 = vmatprep.subr.mxu0 0.0
        %360 = vmatpush1.msra.mxu0 %v344
        %361 = vmatprep.subr.mxu0 0.0
        %362 = vmatpush1.msra.mxu0 %v345
        %363 = vmatprep.subr.mxu0 0.0
        %364 = vmatpush1.msra.mxu0 %v346
        %365 = vmatprep.subr.mxu0 0.0
        %366 = vmatpush1.msra.mxu0 %v347
        %367 = vmatprep.subr.mxu0 0.0
        %368 = vmatpush1.msra.mxu0 0.0
        %369 = vmatprep.subr.mxu0 0.0
        %370 = vmatpush1.msra.mxu0 0.0
        %371 = vmatprep.subr.mxu0 0.0
        %372 = vmatpush1.msra.mxu0 0.0
        %373 = vmatprep.subr.mxu0 0.0
        %374 = vmatpush1.msra.mxu0 0.0
        %375 = vmatprep.subr.mxu0 0.0
        %376 = vmatpush1.msra.mxu0 0.0
        %377 = vmatprep.subr.mxu0 0.0
        %378 = vmatpush1.msra.mxu0 0.0
        %379 = vmatprep.subr.mxu0 0.0
        %380 = vmatpush1.msra.mxu0 0.0
        %381 = vmatprep.subr.mxu0 0.0
        %382 = vmatpush1.msra.mxu0 0.0
        %383 = vmatprep.subr.mxu0 0.0
        %384 = vmatpush1.msra.mxu0 0.0
        %385 = vmatprep.subr.mxu0 0.0
        %386 = vmatpush1.msra.mxu0 0.0
        %387 = vmatprep.subr.mxu0 0.0
        %388 = vmatpush1.msra.mxu0 0.0
        %389 = vmatprep.subr.mxu0 0.0
        %390 = vmatpush1.msra.mxu0 0.0
        %391 = vmatprep.subr.mxu0 0.0
        %392 = vmatpush1.msra.mxu0 0.0
        %393 = vmatprep.subr.mxu0 0.0
        %394 = vmatpush1.msra.mxu0 0.0
        %395 = vmatprep.subr.mxu0 0.0
        %396 = vmatpush1.msra.mxu0 0.0
        %397 = vmatprep.subr.mxu0 0.0
        %398 = vmatpush1.msra.mxu0 0.0
        %399 = vmatprep.subr.mxu0 0.0
        %400 = vmatpush1.msra.mxu0 0.0
        %401 = vmatprep.subr.mxu0 0.0
        %402 = vmatpush1.msra.mxu0 0.0
        %403 = vmatprep.subr.mxu0 0.0
        %404 = vmatpush1.msra.mxu0 0.0
        %405 = vmatprep.subr.mxu0 0.0
        %406 = vmatpush1.msra.mxu0 0.0
        %407 = vmatprep.subr.mxu0 0.0
        %408 = vmatpush1.msra.mxu0 0.0
        %409 = vmatprep.subr.mxu0 0.0
        %410 = vmatpush1.msra.mxu0 0.0
        %411 = vmatprep.subr.mxu0 0.0
        %412 = vmatpush1.msra.mxu0 0.0
        %413 = vmatprep.subr.mxu0 0.0
        %414 = vmatpush1.msra.mxu0 0.0
        %415 = vmatprep.subr.mxu0 0.0
        %416 = vmatpush1.msra.mxu0 0.0
        %417 = vmatprep.subr.mxu0 0.0
        %418 = vmatpush1.msra.mxu0 0.0
        %419 = vmatprep.subr.mxu0 0.0
        %420 = vmatpush1.msra.mxu0 0.0
        %421 = vmatprep.subr.mxu0 0.0
        %422 = vmatpush1.msra.mxu0 0.0
        %423 = vmatprep.mubr.f32.mxu0 0.0
        %424 = vmatmul.mubr.f32.gmra.mrb[0].mxu0 %v357
        %v425 = vpop.f32.mrb[0].mxu0
        %v426 = vadd.f32 %v353, %v425
        %v427 = vpop.f32.mrb[0].mxu0
        %428 = vdwg.mxu0
        %v429 = vld [vmem:[%s341] sm:$0xff]
        %v430 = vld [vmem:[%s341 + $0x8] sm:$0xff]
        %v431 = vld [vmem:[%s4] sm:$0xff]
        %v432 = vld [vmem:[%s4 + $0x8] sm:$0xff]
        %v433 = vld [vmem:[%s4 + $0x10] sm:$0xff]
        %v434 = vld [vmem:[%s4 + $0x18] sm:$0xff]
        %v435 = vld [vmem:[%s4 + $0x20] sm:$0xff]
        %v436 = vld [vmem:[%s4 + $0x28] sm:$0xff]
        %v437 = vld [vmem:[%s4 + $0x30] sm:$0xff]
        %v438 = vld [vmem:[%s4 + $0x38] sm:$0xff]
        %v439 = vld [vmem:[%s5] sm:$0x1]
        %v441 = vlaneseq
        %v442 = vshrl.u32 %v441, 7
        %v443 = vsub.s32 0, %v442
        %v444 = vrot.slane %v439, %v443
        %vm446 = vcmask 523264
        %v448 = vsel %vm446, %v429, 0
        %v451 = vsel %vm446, %v430, 0
        %453 = vmatprep.subr.mxu0 0.0
        %454 = vmatpush1.msra.mxu0 %v431
        %455 = vmatprep.subr.mxu0 0.0
        %456 = vmatpush1.msra.mxu0 %v432
        %457 = vmatprep.subr.mxu0 0.0
        %458 = vmatpush1.msra.mxu0 %v433
        %459 = vmatprep.subr.mxu0 0.0
        %460 = vmatpush1.msra.mxu0 %v434
        %461 = vmatprep.subr.mxu0 0.0
        %462 = vmatpush1.msra.mxu0 %v435
        %463 = vmatprep.subr.mxu0 0.0
        %464 = vmatpush1.msra.mxu0 %v436
        %465 = vmatprep.subr.mxu0 0.0
        %466 = vmatpush1.msra.mxu0 %v437
        %467 = vmatprep.subr.mxu0 0.0
        %468 = vmatpush1.msra.mxu0 %v438
        %469 = vmatprep.subr.mxu0 0.0
        %470 = vmatpush1.msra.mxu0 0.0
        %471 = vmatprep.subr.mxu0 0.0
        %472 = vmatpush1.msra.mxu0 0.0
        %473 = vmatprep.subr.mxu0 0.0
        %474 = vmatpush1.msra.mxu0 0.0
        %475 = vmatprep.subr.mxu0 0.0
        %476 = vmatpush1.msra.mxu0 0.0
        %477 = vmatprep.subr.mxu0 0.0
        %478 = vmatpush1.msra.mxu0 0.0
        %479 = vmatprep.subr.mxu0 0.0
        %480 = vmatpush1.msra.mxu0 0.0
        %481 = vmatprep.subr.mxu0 0.0
        %482 = vmatpush1.msra.mxu0 0.0
        %483 = vmatprep.subr.mxu0 0.0
        %484 = vmatpush1.msra.mxu0 0.0
        %485 = vmatprep.subr.mxu0 0.0
        %486 = vmatpush1.msra.mxu0 0.0
        %487 = vmatprep.subr.mxu0 0.0
        %488 = vmatpush1.msra.mxu0 0.0
        %489 = vmatprep.subr.mxu0 0.0
        %490 = vmatpush1.msra.mxu0 0.0
        %491 = vmatprep.subr.mxu0 0.0
        %492 = vmatpush1.msra.mxu0 0.0
        %493 = vmatprep.subr.mxu0 0.0
        %494 = vmatpush1.msra.mxu0 0.0
        %495 = vmatprep.subr.mxu0 0.0
        %496 = vmatpush1.msra.mxu0 0.0
        %497 = vmatprep.subr.mxu0 0.0
        %498 = vmatpush1.msra.mxu0 0.0
        %499 = vmatprep.subr.mxu0 0.0
        %500 = vmatpush1.msra.mxu0 0.0
        %501 = vmatprep.subr.mxu0 0.0
        %502 = vmatpush1.msra.mxu0 0.0
        %503 = vmatprep.subr.mxu0 0.0
        %504 = vmatpush1.msra.mxu0 0.0
        %505 = vmatprep.subr.mxu0 0.0
        %506 = vmatpush1.msra.mxu0 0.0
        %507 = vmatprep.subr.mxu0 0.0
        %508 = vmatpush1.msra.mxu0 0.0
        %509 = vmatprep.subr.mxu0 0.0
        %510 = vmatpush1.msra.mxu0 0.0
        %511 = vmatprep.subr.mxu0 0.0
        %512 = vmatpush1.msra.mxu0 0.0
        %513 = vmatprep.subr.mxu0 0.0
        %514 = vmatpush1.msra.mxu0 0.0
        %515 = vmatprep.subr.mxu0 0.0
        %516 = vmatpush1.msra.mxu0 0.0
        %517 = vmatprep.mubr.f32.mxu0 0.0
        %518 = vmatmul.mubr.f32.gmra.mrb[0].mxu0 %v448
        %v519 = vpop.f32.mrb[0].mxu0
        %v520 = vadd.f32 %v444, %v519
        %v521 = vpop.f32.mrb[0].mxu0
        %522 = vmatprep.mubr.f32.mxu0 0.0
        %523 = vmatmul.mubr.f32.gmra.mrb[0].mxu0 %v451
        %v524 = vpop.f32.mrb[0].mxu0
        %v525 = vadd.f32 %v444, %v524
        %v526 = vpop.f32.mrb[0].mxu0
        %527 = vdwg.mxu0
        %vm528 = vcmask 64512
        %v530 = vsel %vm528, %v426, 0
        %v533 = vsel %vm528, %v520, 0
        %v536 = vsel %vm528, %v525, 0
        %538 = vmatprep.subr.mxu0 0.0
        %539 = vmatpush1.xpose.msra.mxu0 %v533
        %540 = vmatprep.subr.mxu0 0.0
        %541 = vmatpush1.xpose.msra.mxu0 %v536
        %542 = vmatprep.subr.mxu0 0.0
        %543 = vmatpush1.xpose.msra.mxu0 0.0
        %544 = vmatprep.subr.mxu0 0.0
        %545 = vmatpush1.xpose.msra.mxu0 0.0
        %546 = vmatprep.subr.mxu0 0.0
        %547 = vmatpush1.xpose.msra.mxu0 0.0
        %548 = vmatprep.subr.mxu0 0.0
        %549 = vmatpush1.xpose.msra.mxu0 0.0
        %550 = vmatprep.subr.mxu0 0.0
        %551 = vmatpush1.xpose.msra.mxu0 0.0
        %552 = vmatprep.subr.mxu0 0.0
        %553 = vmatpush1.xpose.msra.mxu0 0.0
        %554 = vmatprep.subr.mxu0 0.0
        %555 = vmatpush1.xpose.msra.mxu0 0.0
        %556 = vmatprep.subr.mxu0 0.0
        %557 = vmatpush1.xpose.msra.mxu0 0.0
        %558 = vmatprep.subr.mxu0 0.0
        %559 = vmatpush1.xpose.msra.mxu0 0.0
        %560 = vmatprep.subr.mxu0 0.0
        %561 = vmatpush1.xpose.msra.mxu0 0.0
        %562 = vmatprep.subr.mxu0 0.0
        %563 = vmatpush1.xpose.msra.mxu0 0.0
        %564 = vmatprep.subr.mxu0 0.0
        %565 = vmatpush1.xpose.msra.mxu0 0.0
        %566 = vmatprep.subr.mxu0 0.0
        %567 = vmatpush1.xpose.msra.mxu0 0.0
        %568 = vmatprep.subr.mxu0 0.0
        %569 = vmatpush1.xpose.msra.mxu0 0.0
        %570 = vmatprep.subr.mxu0 0.0
        %571 = vmatpush1.xpose.msra.mxu0 0.0
        %572 = vmatprep.subr.mxu0 0.0
        %573 = vmatpush1.xpose.msra.mxu0 0.0
        %574 = vmatprep.subr.mxu0 0.0
        %575 = vmatpush1.xpose.msra.mxu0 0.0
        %576 = vmatprep.subr.mxu0 0.0
        %577 = vmatpush1.xpose.msra.mxu0 0.0
        %578 = vmatprep.subr.mxu0 0.0
        %579 = vmatpush1.xpose.msra.mxu0 0.0
        %580 = vmatprep.subr.mxu0 0.0
        %581 = vmatpush1.xpose.msra.mxu0 0.0
        %582 = vmatprep.subr.mxu0 0.0
        %583 = vmatpush1.xpose.msra.mxu0 0.0
        %584 = vmatprep.subr.mxu0 0.0
        %585 = vmatpush1.xpose.msra.mxu0 0.0
        %586 = vmatprep.subr.mxu0 0.0
        %587 = vmatpush1.xpose.msra.mxu0 0.0
        %588 = vmatprep.subr.mxu0 0.0
        %589 = vmatpush1.xpose.msra.mxu0 0.0
        %590 = vmatprep.subr.mxu0 0.0
        %591 = vmatpush1.xpose.msra.mxu0 0.0
        %592 = vmatprep.subr.mxu0 0.0
        %593 = vmatpush1.xpose.msra.mxu0 0.0
        %594 = vmatprep.subr.mxu0 0.0
        %595 = vmatpush1.xpose.msra.mxu0 0.0
        %596 = vmatprep.subr.mxu0 0.0
        %597 = vmatpush1.xpose.msra.mxu0 0.0
        %598 = vmatprep.subr.mxu0 0.0
        %599 = vmatpush1.xpose.msra.mxu0 0.0
        %600 = vmatprep.subr.mxu0 0.0
        %601 = vmatpush1.xpose.msra.mxu0 0.0
        %602 = vmatprep.mubr.f32.mxu0 0.0
        %603 = vmatmul.mubr.f32.gmra.mrb[0].mxu0 %v530
        %v604 = vpop.f32.mrb[0].mxu0
        %v605 = vadd.f32 0.0, %v604
        %v606 = vpop.f32.mrb[0].mxu0
        %607 = vdwg.mxu0
        %vm608 = vcmask 130048
        %v609 = vsel %vm608, %v605, -inf
        %610 = vmax.xlane.f32.xlu0 %v609
        %v611 = vpop.xlane.xlu0 %610
        %v612 = vsub.f32 %v605, %v611
        %v613 = vmul.f32 %v612, 1.442695
        %v614 = vpow.pop %v613
        %v615 = vsel %vm608, %v614, 0.0
        %616 = vadd.xlane.f32.xlu0 %v615
        %v617 = vpop.xlane.xlu0 %616
        %v618 = vrcp.pop %v617
        %v619 = vmul.f32 %v614, %v618
        %v621 = vsel %vm608, %v619, 0
        %623 = vmatprep.subr.mxu0 0.0
        %624 = vmatpush1.msra.mxu0 %v520
        %625 = vmatprep.subr.mxu0 0.0
        %626 = vmatpush1.msra.mxu0 %v525
        %627 = vmatprep.subr.mxu0 0.0
        %628 = vmatpush1.msra.mxu0 0.0
        %629 = vmatprep.subr.mxu0 0.0
        %630 = vmatpush1.msra.mxu0 0.0
        %631 = vmatprep.subr.mxu0 0.0
        %632 = vmatpush1.msra.mxu0 0.0
        %633 = vmatprep.subr.mxu0 0.0
        %634 = vmatpush1.msra.mxu0 0.0
        %635 = vmatprep.subr.mxu0 0.0
        %636 = vmatpush1.msra.mxu0 0.0
        %637 = vmatprep.subr.mxu0 0.0
        %638 = vmatpush1.msra.mxu0 0.0
        %639 = vmatprep.subr.mxu0 0.0
        %640 = vmatpush1.msra.mxu0 0.0
        %641 = vmatprep.subr.mxu0 0.0
        %642 = vmatpush1.msra.mxu0 0.0
        %643 = vmatprep.subr.mxu0 0.0
        %644 = vmatpush1.msra.mxu0 0.0
        %645 = vmatprep.subr.mxu0 0.0
        %646 = vmatpush1.msra.mxu0 0.0
        %647 = vmatprep.subr.mxu0 0.0
        %648 = vmatpush1.msra.mxu0 0.0
        %649 = vmatprep.subr.mxu0 0.0
        %650 = vmatpush1.msra.mxu0 0.0
        %651 = vmatprep.subr.mxu0 0.0
        %652 = vmatpush1.msra.mxu0 0.0
        %653 = vmatprep.subr.mxu0 0.0
        %654 = vmatpush1.msra.mxu0 0.0
        %655 = vmatprep.subr.mxu0 0.0
        %656 = vmatpush1.msra.mxu0 0.0
        %657 = vmatprep.subr.mxu0 0.0
        %658 = vmatpush1.msra.mxu0 0.0
        %659 = vmatprep.subr.mxu0 0.0
        %660 = vmatpush1.msra.mxu0 0.0
        %661 = vmatprep.subr.mxu0 0.0
        %662 = vmatpush1.msra.mxu0 0.0
        %663 = vmatprep.subr.mxu0 0.0
        %664 = vmatpush1.msra.mxu0 0.0
        %665 = vmatprep.subr.mxu0 0.0
        %666 = vmatpush1.msra.mxu0 0.0
        %667 = vmatprep.subr.mxu0 0.0
        %668 = vmatpush1.msra.mxu0 0.0
        %669 = vmatprep.subr.mxu0 0.0
        %670 = vmatpush1.msra.mxu0 0.0
        %671 = vmatprep.subr.mxu0 0.0
        %672 = vmatpush1.msra.mxu0 0.0
        %673 = vmatprep.subr.mxu0 0.0
        %674 = vmatpush1.msra.mxu0 0.0
        %675 = vmatprep.subr.mxu0 0.0
        %676 = vmatpush1.msra.mxu0 0.0
        %677 = vmatprep.subr.mxu0 0.0
        %678 = vmatpush1.msra.mxu0 0.0
        %679 = vmatprep.subr.mxu0 0.0
        %680 = vmatpush1.msra.mxu0 0.0
        %681 = vmatprep.subr.mxu0 0.0
        %682 = vmatpush1.msra.mxu0 0.0
        %683 = vmatprep.subr.mxu0 0.0
        %684 = vmatpush1.msra.mxu0 0.0
        %685 = vmatprep.subr.mxu0 0.0
        %686 = vmatpush1.msra.mxu0 0.0
        %687 = vmatprep.mubr.f32.mxu0 0.0
        %688 = vmatmul.mubr.f32.gmra.mrb[0].mxu0 %v621
        %v689 = vpop.f32.mrb[0].mxu0
        %v690 = vadd.f32 0.0, %v689
        %v691 = vpop.f32.mrb[0].mxu0
        %692 = vdwg.mxu0
        %693 = vst.msk [vmem:[#allocation2] sm:$0xff] %vm528, %v690
        %694 = vrot.lane.b32.xlu0 %v426, 120
        %v695 = vpop.permute.xlu0 %694
        %696 = vrot.lane.b32.xlu0 %v520, 120
        %v697 = vpop.permute.xlu0 %696
        %698 = vrot.lane.b32.xlu0 %v525, 120
        %v699 = vpop.permute.xlu0 %698
        %v700 = vsel %vm528, %v695, 0
        %v702 = vsel %vm528, %v697, 0
        %v704 = vsel %vm528, %v699, 0
        %706 = vmatprep.subr.mxu0 0.0
        %707 = vmatpush1.xpose.msra.mxu0 %v702
        %708 = vmatprep.subr.mxu0 0.0
        %709 = vmatpush1.xpose.msra.mxu0 %v704
        %710 = vmatprep.subr.mxu0 0.0
        %711 = vmatpush1.xpose.msra.mxu0 0.0
        %712 = vmatprep.subr.mxu0 0.0
        %713 = vmatpush1.xpose.msra.mxu0 0.0
        %714 = vmatprep.subr.mxu0 0.0
        %715 = vmatpush1.xpose.msra.mxu0 0.0
        %716 = vmatprep.subr.mxu0 0.0
        %717 = vmatpush1.xpose.msra.mxu0 0.0
        %718 = vmatprep.subr.mxu0 0.0
        %719 = vmatpush1.xpose.msra.mxu0 0.0
        %720 = vmatprep.subr.mxu0 0.0
        %721 = vmatpush1.xpose.msra.mxu0 0.0
        %722 = vmatprep.subr.mxu0 0.0
        %723 = vmatpush1.xpose.msra.mxu0 0.0
        %724 = vmatprep.subr.mxu0 0.0
        %725 = vmatpush1.xpose.msra.mxu0 0.0
        %726 = vmatprep.subr.mxu0 0.0
        %727 = vmatpush1.xpose.msra.mxu0 0.0
        %728 = vmatprep.subr.mxu0 0.0
        %729 = vmatpush1.xpose.msra.mxu0 0.0
        %730 = vmatprep.subr.mxu0 0.0
        %731 = vmatpush1.xpose.msra.mxu0 0.0
        %732 = vmatprep.subr.mxu0 0.0
        %733 = vmatpush1.xpose.msra.mxu0 0.0
        %734 = vmatprep.subr.mxu0 0.0
        %735 = vmatpush1.xpose.msra.mxu0 0.0
        %736 = vmatprep.subr.mxu0 0.0
        %737 = vmatpush1.xpose.msra.mxu0 0.0
        %738 = vmatprep.subr.mxu0 0.0
        %739 = vmatpush1.xpose.msra.mxu0 0.0
        %740 = vmatprep.subr.mxu0 0.0
        %741 = vmatpush1.xpose.msra.mxu0 0.0
        %742 = vmatprep.subr.mxu0 0.0
        %743 = vmatpush1.xpose.msra.mxu0 0.0
        %744 = vmatprep.subr.mxu0 0.0
        %745 = vmatpush1.xpose.msra.mxu0 0.0
        %746 = vmatprep.subr.mxu0 0.0
        %747 = vmatpush1.xpose.msra.mxu0 0.0
        %748 = vmatprep.subr.mxu0 0.0
        %749 = vmatpush1.xpose.msra.mxu0 0.0
        %750 = vmatprep.subr.mxu0 0.0
        %751 = vmatpush1.xpose.msra.mxu0 0.0
        %752 = vmatprep.subr.mxu0 0.0
        %753 = vmatpush1.xpose.msra.mxu0 0.0
        %754 = vmatprep.subr.mxu0 0.0
        %755 = vmatpush1.xpose.msra.mxu0 0.0
        %756 = vmatprep.subr.mxu0 0.0
        %757 = vmatpush1.xpose.msra.mxu0 0.0
        %758 = vmatprep.subr.mxu0 0.0
        %759 = vmatpush1.xpose.msra.mxu0 0.0
        %760 = vmatprep.subr.mxu0 0.0
        %761 = vmatpush1.xpose.msra.mxu0 0.0
        %762 = vmatprep.subr.mxu0 0.0
        %763 = vmatpush1.xpose.msra.mxu0 0.0
        %764 = vmatprep.subr.mxu0 0.0
        %765 = vmatpush1.xpose.msra.mxu0 0.0
        %766 = vmatprep.subr.mxu0 0.0
        %767 = vmatpush1.xpose.msra.mxu0 0.0
        %768 = vmatprep.subr.mxu0 0.0
        %769 = vmatpush1.xpose.msra.mxu0 0.0
        %770 = vmatprep.mubr.f32.mxu0 0.0
        %771 = vmatmul.mubr.f32.gmra.mrb[0].mxu0 %v700
        %v772 = vpop.f32.mrb[0].mxu0
        %v773 = vadd.f32 0.0, %v772
        %v774 = vpop.f32.mrb[0].mxu0
        %775 = vdwg.mxu0
        %v776 = vsel %vm608, %v773, -inf
        %777 = vmax.xlane.f32.xlu0 %v776
        %v778 = vpop.xlane.xlu0 %777
        %v779 = vsub.f32 %v773, %v778
        %v780 = vmul.f32 %v779, 1.442695
        %v781 = vpow.pop %v780
        %v782 = vsel %vm608, %v781, 0.0
        %783 = vadd.xlane.f32.xlu0 %v782
        %v784 = vpop.xlane.xlu0 %783
        %v785 = vrcp.pop %v784
        %v786 = vmul.f32 %v781, %v785
        %v790 = vsel %vm608, %v786, 0
        %792 = vmatprep.subr.mxu0 0.0
        %793 = vmatpush1.msra.mxu0 %v697
        %794 = vmatprep.subr.mxu0 0.0
        %795 = vmatpush1.msra.mxu0 %v699
        %796 = vmatprep.subr.mxu0 0.0
        %797 = vmatpush1.msra.mxu0 0.0
        %798 = vmatprep.subr.mxu0 0.0
        %799 = vmatpush1.msra.mxu0 0.0
        %800 = vmatprep.subr.mxu0 0.0
        %801 = vmatpush1.msra.mxu0 0.0
        %802 = vmatprep.subr.mxu0 0.0
        %803 = vmatpush1.msra.mxu0 0.0
        %804 = vmatprep.subr.mxu0 0.0
        %805 = vmatpush1.msra.mxu0 0.0
        %806 = vmatprep.subr.mxu0 0.0
        %807 = vmatpush1.msra.mxu0 0.0
        %808 = vmatprep.subr.mxu0 0.0
        %809 = vmatpush1.msra.mxu0 0.0
        %810 = vmatprep.subr.mxu0 0.0
        %811 = vmatpush1.msra.mxu0 0.0
        %812 = vmatprep.subr.mxu0 0.0
        %813 = vmatpush1.msra.mxu0 0.0
        %814 = vmatprep.subr.mxu0 0.0
        %815 = vmatpush1.msra.mxu0 0.0
        %816 = vmatprep.subr.mxu0 0.0
        %817 = vmatpush1.msra.mxu0 0.0
        %818 = vmatprep.subr.mxu0 0.0
        %819 = vmatpush1.msra.mxu0 0.0
        %820 = vmatprep.subr.mxu0 0.0
        %821 = vmatpush1.msra.mxu0 0.0
        %822 = vmatprep.subr.mxu0 0.0
        %823 = vmatpush1.msra.mxu0 0.0
        %824 = vmatprep.subr.mxu0 0.0
        %825 = vmatpush1.msra.mxu0 0.0
        %826 = vmatprep.subr.mxu0 0.0
        %827 = vmatpush1.msra.mxu0 0.0
        %828 = vmatprep.subr.mxu0 0.0
        %829 = vmatpush1.msra.mxu0 0.0
        %830 = vmatprep.subr.mxu0 0.0
        %831 = vmatpush1.msra.mxu0 0.0
        %832 = vmatprep.subr.mxu0 0.0
        %833 = vmatpush1.msra.mxu0 0.0
        %834 = vmatprep.subr.mxu0 0.0
        %835 = vmatpush1.msra.mxu0 0.0
        %836 = vmatprep.subr.mxu0 0.0
        %837 = vmatpush1.msra.mxu0 0.0
        %838 = vmatprep.subr.mxu0 0.0
        %839 = vmatpush1.msra.mxu0 0.0
        %840 = vmatprep.subr.mxu0 0.0
        %841 = vmatpush1.msra.mxu0 0.0
        %842 = vmatprep.subr.mxu0 0.0
        %843 = vmatpush1.msra.mxu0 0.0
        %844 = vmatprep.subr.mxu0 0.0
        %845 = vmatpush1.msra.mxu0 0.0
        %846 = vmatprep.subr.mxu0 0.0
        %847 = vmatpush1.msra.mxu0 0.0
        %848 = vmatprep.subr.mxu0 0.0
        %849 = vmatpush1.msra.mxu0 0.0
        %850 = vmatprep.subr.mxu0 0.0
        %851 = vmatpush1.msra.mxu0 0.0
        %852 = vmatprep.subr.mxu0 0.0
        %853 = vmatpush1.msra.mxu0 0.0
        %854 = vmatprep.subr.mxu0 0.0
        %855 = vmatpush1.msra.mxu0 0.0
        %856 = vmatprep.mubr.f32.mxu0 0.0
        %857 = vmatmul.mubr.f32.gmra.mrb[0].mxu0 %v790
        %v858 = vpop.f32.mrb[0].mxu0
        %v859 = vadd.f32 0.0, %v858
        %v860 = vpop.f32.mrb[0].mxu0
        %861 = vdwg.mxu0
        %863 = vrot.lane.b32.xlu0 %v859, 8
        %v864 = vpop.permute.xlu0 %863
        %vm866 = vcmask 130112
        %867 = vst.msk [vmem:[#allocation2] sm:$0xff] %vm866, %v864
        %868 = vrot.lane.b32.xlu0 %v426, 112
        %v869 = vpop.permute.xlu0 %868
        %870 = vrot.lane.b32.xlu0 %v520, 112
        %v871 = vpop.permute.xlu0 %870
        %872 = vrot.lane.b32.xlu0 %v525, 112
        %v873 = vpop.permute.xlu0 %872
        %v874 = vsel %vm528, %v869, 0
        %v876 = vsel %vm528, %v871, 0
        %v878 = vsel %vm528, %v873, 0
        %880 = vmatprep.subr.mxu0 0.0
        %881 = vmatpush1.xpose.msra.mxu0 %v876
        %882 = vmatprep.subr.mxu0 0.0
        %883 = vmatpush1.xpose.msra.mxu0 %v878
        %884 = vmatprep.subr.mxu0 0.0
        %885 = vmatpush1.xpose.msra.mxu0 0.0
        %886 = vmatprep.subr.mxu0 0.0
        %887 = vmatpush1.xpose.msra.mxu0 0.0
        %888 = vmatprep.subr.mxu0 0.0
        %889 = vmatpush1.xpose.msra.mxu0 0.0
        %890 = vmatprep.subr.mxu0 0.0
        %891 = vmatpush1.xpose.msra.mxu0 0.0
        %892 = vmatprep.subr.mxu0 0.0
        %893 = vmatpush1.xpose.msra.mxu0 0.0
        %894 = vmatprep.subr.mxu0 0.0
        %895 = vmatpush1.xpose.msra.mxu0 0.0
        %896 = vmatprep.subr.mxu0 0.0
        %897 = vmatpush1.xpose.msra.mxu0 0.0
        %898 = vmatprep.subr.mxu0 0.0
        %899 = vmatpush1.xpose.msra.mxu0 0.0
        %900 = vmatprep.subr.mxu0 0.0
        %901 = vmatpush1.xpose.msra.mxu0 0.0
        %902 = vmatprep.subr.mxu0 0.0
        %903 = vmatpush1.xpose.msra.mxu0 0.0
        %904 = vmatprep.subr.mxu0 0.0
        %905 = vmatpush1.xpose.msra.mxu0 0.0
        %906 = vmatprep.subr.mxu0 0.0
        %907 = vmatpush1.xpose.msra.mxu0 0.0
        %908 = vmatprep.subr.mxu0 0.0
        %909 = vmatpush1.xpose.msra.mxu0 0.0
        %910 = vmatprep.subr.mxu0 0.0
        %911 = vmatpush1.xpose.msra.mxu0 0.0
        %912 = vmatprep.subr.mxu0 0.0
        %913 = vmatpush1.xpose.msra.mxu0 0.0
        %914 = vmatprep.subr.mxu0 0.0
        %915 = vmatpush1.xpose.msra.mxu0 0.0
        %916 = vmatprep.subr.mxu0 0.0
        %917 = vmatpush1.xpose.msra.mxu0 0.0
        %918 = vmatprep.subr.mxu0 0.0
        %919 = vmatpush1.xpose.msra.mxu0 0.0
        %920 = vmatprep.subr.mxu0 0.0
        %921 = vmatpush1.xpose.msra.mxu0 0.0
        %922 = vmatprep.subr.mxu0 0.0
        %923 = vmatpush1.xpose.msra.mxu0 0.0
        %924 = vmatprep.subr.mxu0 0.0
        %925 = vmatpush1.xpose.msra.mxu0 0.0
        %926 = vmatprep.subr.mxu0 0.0
        %927 = vmatpush1.xpose.msra.mxu0 0.0
        %928 = vmatprep.subr.mxu0 0.0
        %929 = vmatpush1.xpose.msra.mxu0 0.0
        %930 = vmatprep.subr.mxu0 0.0
        %931 = vmatpush1.xpose.msra.mxu0 0.0
        %932 = vmatprep.subr.mxu0 0.0
        %933 = vmatpush1.xpose.msra.mxu0 0.0
        %934 = vmatprep.subr.mxu0 0.0
        %935 = vmatpush1.xpose.msra.mxu0 0.0
        %936 = vmatprep.subr.mxu0 0.0
        %937 = vmatpush1.xpose.msra.mxu0 0.0
        %938 = vmatprep.subr.mxu0 0.0
        %939 = vmatpush1.xpose.msra.mxu0 0.0
        %940 = vmatprep.subr.mxu0 0.0
        %941 = vmatpush1.xpose.msra.mxu0 0.0
        %942 = vmatprep.subr.mxu0 0.0
        %943 = vmatpush1.xpose.msra.mxu0 0.0
        %944 = vmatprep.mubr.f32.mxu0 0.0
        %945 = vmatmul.mubr.f32.gmra.mrb[0].mxu0 %v874
        %v946 = vpop.f32.mrb[0].mxu0
        %v947 = vadd.f32 0.0, %v946
        %v948 = vpop.f32.mrb[0].mxu0
        %949 = vdwg.mxu0
        %v950 = vsel %vm608, %v947, -inf
        %951 = vmax.xlane.f32.xlu0 %v950
        %v952 = vpop.xlane.xlu0 %951
        %v953 = vsub.f32 %v947, %v952
        %v954 = vmul.f32 %v953, 1.442695
        %v955 = vpow.pop %v954
        %v956 = vsel %vm608, %v955, 0.0
        %957 = vadd.xlane.f32.xlu0 %v956
        %v958 = vpop.xlane.xlu0 %957
        %v959 = vrcp.pop %v958
        %v960 = vmul.f32 %v955, %v959
        %v964 = vsel %vm608, %v960, 0
        %966 = vmatprep.subr.mxu0 0.0
        %967 = vmatpush1.msra.mxu0 %v871
        %968 = vmatprep.subr.mxu0 0.0
        %969 = vmatpush1.msra.mxu0 %v873
        %970 = vmatprep.subr.mxu0 0.0
        %971 = vmatpush1.msra.mxu0 0.0
        %972 = vmatprep.subr.mxu0 0.0
        %973 = vmatpush1.msra.mxu0 0.0
        %974 = vmatprep.subr.mxu0 0.0
        %975 = vmatpush1.msra.mxu0 0.0
        %976 = vmatprep.subr.mxu0 0.0
        %977 = vmatpush1.msra.mxu0 0.0
        %978 = vmatprep.subr.mxu0 0.0
        %979 = vmatpush1.msra.mxu0 0.0
        %980 = vmatprep.subr.mxu0 0.0
        %981 = vmatpush1.msra.mxu0 0.0
        %982 = vmatprep.subr.mxu0 0.0
        %983 = vmatpush1.msra.mxu0 0.0
        %984 = vmatprep.subr.mxu0 0.0
        %985 = vmatpush1.msra.mxu0 0.0
        %986 = vmatprep.subr.mxu0 0.0
        %987 = vmatpush1.msra.mxu0 0.0
        %988 = vmatprep.subr.mxu0 0.0
        %989 = vmatpush1.msra.mxu0 0.0
        %990 = vmatprep.subr.mxu0 0.0
        %991 = vmatpush1.msra.mxu0 0.0
        %992 = vmatprep.subr.mxu0 0.0
        %993 = vmatpush1.msra.mxu0 0.0
        %994 = vmatprep.subr.mxu0 0.0
        %995 = vmatpush1.msra.mxu0 0.0
        %996 = vmatprep.subr.mxu0 0.0
        %997 = vmatpush1.msra.mxu0 0.0
        %998 = vmatprep.subr.mxu0 0.0
        %999 = vmatpush1.msra.mxu0 0.0
        %1000 = vmatprep.subr.mxu0 0.0
        %1001 = vmatpush1.msra.mxu0 0.0
        %1002 = vmatprep.subr.mxu0 0.0
        %1003 = vmatpush1.msra.mxu0 0.0
        %1004 = vmatprep.subr.mxu0 0.0
        %1005 = vmatpush1.msra.mxu0 0.0
        %1006 = vmatprep.subr.mxu0 0.0
        %1007 = vmatpush1.msra.mxu0 0.0
        %1008 = vmatprep.subr.mxu0 0.0
        %1009 = vmatpush1.msra.mxu0 0.0
        %1010 = vmatprep.subr.mxu0 0.0
        %1011 = vmatpush1.msra.mxu0 0.0
        %1012 = vmatprep.subr.mxu0 0.0
        %1013 = vmatpush1.msra.mxu0 0.0
        %1014 = vmatprep.subr.mxu0 0.0
        %1015 = vmatpush1.msra.mxu0 0.0
        %1016 = vmatprep.subr.mxu0 0.0
        %1017 = vmatpush1.msra.mxu0 0.0
        %1018 = vmatprep.subr.mxu0 0.0
        %1019 = vmatpush1.msra.mxu0 0.0
        %1020 = vmatprep.subr.mxu0 0.0
        %1021 = vmatpush1.msra.mxu0 0.0
        %1022 = vmatprep.subr.mxu0 0.0
        %1023 = vmatpush1.msra.mxu0 0.0
        %1024 = vmatprep.subr.mxu0 0.0
        %1025 = vmatpush1.msra.mxu0 0.0
        %1026 = vmatprep.subr.mxu0 0.0
        %1027 = vmatpush1.msra.mxu0 0.0
        %1028 = vmatprep.subr.mxu0 0.0
        %1029 = vmatpush1.msra.mxu0 0.0
        %1030 = vmatprep.mubr.f32.mxu0 0.0
        %1031 = vmatmul.mubr.f32.gmra.mrb[0].mxu0 %v964
        %v1032 = vpop.f32.mrb[0].mxu0
        %v1033 = vadd.f32 0.0, %v1032
        %v1034 = vpop.f32.mrb[0].mxu0
        %1035 = vdwg.mxu0
        %1037 = vrot.lane.b32.xlu0 %v1033, 16
        %v1038 = vpop.permute.xlu0 %1037
        %vm1040 = vcmask 195712
        %1041 = vst.msk [vmem:[#allocation2] sm:$0xff] %vm1040, %v1038
        %1042 = vrot.lane.b32.xlu0 %v426, 104
        %v1043 = vpop.permute.xlu0 %1042
        %1044 = vrot.lane.b32.xlu0 %v520, 104
        %v1045 = vpop.permute.xlu0 %1044
        %1046 = vrot.lane.b32.xlu0 %v525, 104
        %v1047 = vpop.permute.xlu0 %1046
        %v1048 = vsel %vm528, %v1043, 0
        %v1050 = vsel %vm528, %v1045, 0
        %v1052 = vsel %vm528, %v1047, 0
        %1054 = vmatprep.subr.mxu0 0.0
        %1055 = vmatpush1.xpose.msra.mxu0 %v1050
        %1056 = vmatprep.subr.mxu0 0.0
        %1057 = vmatpush1.xpose.msra.mxu0 %v1052
        %1058 = vmatprep.subr.mxu0 0.0
        %1059 = vmatpush1.xpose.msra.mxu0 0.0
        %1060 = vmatprep.subr.mxu0 0.0
        %1061 = vmatpush1.xpose.msra.mxu0 0.0
        %1062 = vmatprep.subr.mxu0 0.0
        %1063 = vmatpush1.xpose.msra.mxu0 0.0
        %1064 = vmatprep.subr.mxu0 0.0
        %1065 = vmatpush1.xpose.msra.mxu0 0.0
        %1066 = vmatprep.subr.mxu0 0.0
        %1067 = vmatpush1.xpose.msra.mxu0 0.0
        %1068 = vmatprep.subr.mxu0 0.0
        %1069 = vmatpush1.xpose.msra.mxu0 0.0
        %1070 = vmatprep.subr.mxu0 0.0
        %1071 = vmatpush1.xpose.msra.mxu0 0.0
        %1072 = vmatprep.subr.mxu0 0.0
        %1073 = vmatpush1.xpose.msra.mxu0 0.0
        %1074 = vmatprep.subr.mxu0 0.0
        %1075 = vmatpush1.xpose.msra.mxu0 0.0
        %1076 = vmatprep.subr.mxu0 0.0
        %1077 = vmatpush1.xpose.msra.mxu0 0.0
        %1078 = vmatprep.subr.mxu0 0.0
        %1079 = vmatpush1.xpose.msra.mxu0 0.0
        %1080 = vmatprep.subr.mxu0 0.0
        %1081 = vmatpush1.xpose.msra.mxu0 0.0
        %1082 = vmatprep.subr.mxu0 0.0
        %1083 = vmatpush1.xpose.msra.mxu0 0.0
        %1084 = vmatprep.subr.mxu0 0.0
        %1085 = vmatpush1.xpose.msra.mxu0 0.0
        %1086 = vmatprep.subr.mxu0 0.0
        %1087 = vmatpush1.xpose.msra.mxu0 0.0
        %1088 = vmatprep.subr.mxu0 0.0
        %1089 = vmatpush1.xpose.msra.mxu0 0.0
        %1090 = vmatprep.subr.mxu0 0.0
        %1091 = vmatpush1.xpose.msra.mxu0 0.0
        %1092 = vmatprep.subr.mxu0 0.0
        %1093 = vmatpush1.xpose.msra.mxu0 0.0
        %1094 = vmatprep.subr.mxu0 0.0
        %1095 = vmatpush1.xpose.msra.mxu0 0.0
        %1096 = vmatprep.subr.mxu0 0.0
        %1097 = vmatpush1.xpose.msra.mxu0 0.0
        %1098 = vmatprep.subr.mxu0 0.0
        %1099 = vmatpush1.xpose.msra.mxu0 0.0
        %1100 = vmatprep.subr.mxu0 0.0
        %1101 = vmatpush1.xpose.msra.mxu0 0.0
        %1102 = vmatprep.subr.mxu0 0.0
        %1103 = vmatpush1.xpose.msra.mxu0 0.0
        %1104 = vmatprep.subr.mxu0 0.0
        %1105 = vmatpush1.xpose.msra.mxu0 0.0
        %1106 = vmatprep.subr.mxu0 0.0
        %1107 = vmatpush1.xpose.msra.mxu0 0.0
        %1108 = vmatprep.subr.mxu0 0.0
        %1109 = vmatpush1.xpose.msra.mxu0 0.0
        %1110 = vmatprep.subr.mxu0 0.0
        %1111 = vmatpush1.xpose.msra.mxu0 0.0
        %1112 = vmatprep.subr.mxu0 0.0
        %1113 = vmatpush1.xpose.msra.mxu0 0.0
        %1114 = vmatprep.subr.mxu0 0.0
        %1115 = vmatpush1.xpose.msra.mxu0 0.0
        %1116 = vmatprep.subr.mxu0 0.0
        %1117 = vmatpush1.xpose.msra.mxu0 0.0
        %1118 = vmatprep.mubr.f32.mxu0 0.0
        %1119 = vmatmul.mubr.f32.gmra.mrb[0].mxu0 %v1048
        %v1120 = vpop.f32.mrb[0].mxu0
        %v1121 = vadd.f32 0.0, %v1120
        %v1122 = vpop.f32.mrb[0].mxu0
        %1123 = vdwg.mxu0
        %v1124 = vsel %vm608, %v1121, -inf
        %1125 = vmax.xlane.f32.xlu0 %v1124
        %v1126 = vpop.xlane.xlu0 %1125
        %v1127 = vsub.f32 %v1121, %v1126
        %v1128 = vmul.f32 %v1127, 1.442695
        %v1129 = vpow.pop %v1128
        %v1130 = vsel %vm608, %v1129, 0.0
        %1131 = vadd.xlane.f32.xlu0 %v1130
        %v1132 = vpop.xlane.xlu0 %1131
        %v1133 = vrcp.pop %v1132
        %v1134 = vmul.f32 %v1129, %v1133
        %v1138 = vsel %vm608, %v1134, 0
        %1140 = vmatprep.subr.mxu0 0.0
        %1141 = vmatpush1.msra.mxu0 %v1045
        %1142 = vmatprep.subr.mxu0 0.0
        %1143 = vmatpush1.msra.mxu0 %v1047
        %1144 = vmatprep.subr.mxu0 0.0
        %1145 = vmatpush1.msra.mxu0 0.0
        %1146 = vmatprep.subr.mxu0 0.0
        %1147 = vmatpush1.msra.mxu0 0.0
        %1148 = vmatprep.subr.mxu0 0.0
        %1149 = vmatpush1.msra.mxu0 0.0
        %1150 = vmatprep.subr.mxu0 0.0
        %1151 = vmatpush1.msra.mxu0 0.0
        %1152 = vmatprep.subr.mxu0 0.0
        %1153 = vmatpush1.msra.mxu0 0.0
        %1154 = vmatprep.subr.mxu0 0.0
        %1155 = vmatpush1.msra.mxu0 0.0
        %1156 = vmatprep.subr.mxu0 0.0
        %1157 = vmatpush1.msra.mxu0 0.0
        %1158 = vmatprep.subr.mxu0 0.0
        %1159 = vmatpush1.msra.mxu0 0.0
        %1160 = vmatprep.subr.mxu0 0.0
        %1161 = vmatpush1.msra.mxu0 0.0
        %1162 = vmatprep.subr.mxu0 0.0
        %1163 = vmatpush1.msra.mxu0 0.0
        %1164 = vmatprep.subr.mxu0 0.0
        %1165 = vmatpush1.msra.mxu0 0.0
        %1166 = vmatprep.subr.mxu0 0.0
        %1167 = vmatpush1.msra.mxu0 0.0
        %1168 = vmatprep.subr.mxu0 0.0
        %1169 = vmatpush1.msra.mxu0 0.0
        %1170 = vmatprep.subr.mxu0 0.0
        %1171 = vmatpush1.msra.mxu0 0.0
        %1172 = vmatprep.subr.mxu0 0.0
        %1173 = vmatpush1.msra.mxu0 0.0
        %1174 = vmatprep.subr.mxu0 0.0
        %1175 = vmatpush1.msra.mxu0 0.0
        %1176 = vmatprep.subr.mxu0 0.0
        %1177 = vmatpush1.msra.mxu0 0.0
        %1178 = vmatprep.subr.mxu0 0.0
        %1179 = vmatpush1.msra.mxu0 0.0
        %1180 = vmatprep.subr.mxu0 0.0
        %1181 = vmatpush1.msra.mxu0 0.0
        %1182 = vmatprep.subr.mxu0 0.0
        %1183 = vmatpush1.msra.mxu0 0.0
        %1184 = vmatprep.subr.mxu0 0.0
        %1185 = vmatpush1.msra.mxu0 0.0
        %1186 = vmatprep.subr.mxu0 0.0
        %1187 = vmatpush1.msra.mxu0 0.0
        %1188 = vmatprep.subr.mxu0 0.0
        %1189 = vmatpush1.msra.mxu0 0.0
        %1190 = vmatprep.subr.mxu0 0.0
        %1191 = vmatpush1.msra.mxu0 0.0
        %1192 = vmatprep.subr.mxu0 0.0
        %1193 = vmatpush1.msra.mxu0 0.0
        %1194 = vmatprep.subr.mxu0 0.0
        %1195 = vmatpush1.msra.mxu0 0.0
        %1196 = vmatprep.subr.mxu0 0.0
        %1197 = vmatpush1.msra.mxu0 0.0
        %1198 = vmatprep.subr.mxu0 0.0
        %1199 = vmatpush1.msra.mxu0 0.0
        %1200 = vmatprep.subr.mxu0 0.0
        %1201 = vmatpush1.msra.mxu0 0.0
        %1202 = vmatprep.subr.mxu0 0.0
        %1203 = vmatpush1.msra.mxu0 0.0
        %1204 = vmatprep.mubr.f32.mxu0 0.0
        %1205 = vmatmul.mubr.f32.gmra.mrb[0].mxu0 %v1138
        %v1206 = vpop.f32.mrb[0].mxu0
        %v1207 = vadd.f32 0.0, %v1206
        %v1208 = vpop.f32.mrb[0].mxu0
        %1209 = vdwg.mxu0
        %1211 = vrot.lane.b32.xlu0 %v1207, 24
        %v1212 = vpop.permute.xlu0 %1211
        %vm1214 = vcmask 261312
        %1215 = vst.msk [vmem:[#allocation2] sm:$0xff] %vm1214, %v1212
        %v1216 = vld [vmem:[#allocation2] sm:$0xff]
        %v1217 = vld [vmem:[%s6] sm:$0xff]
        %v1218 = vld [vmem:[%s6 + $0x8] sm:$0xff]
        %v1219 = vld [vmem:[%s6 + $0x10] sm:$0xff]
        %v1220 = vld [vmem:[%s6 + $0x18] sm:$0xff]
        %v1221 = vld [vmem:[%s7] sm:$0x1]
        %v1223 = vlaneseq
        %v1224 = vshrl.u32 %v1223, 7
        %v1225 = vsub.s32 0, %v1224
        %v1226 = vrot.slane %v1221, %v1225
        %v1229 = vsel %vm355, %v1216, 0
        %1231 = vmatprep.subr.mxu0 0.0
        %1232 = vmatpush1.msra.mxu0 %v1217
        %1233 = vmatprep.subr.mxu0 0.0
        %1234 = vmatpush1.msra.mxu0 %v1218
        %1235 = vmatprep.subr.mxu0 0.0
        %1236 = vmatpush1.msra.mxu0 %v1219
        %1237 = vmatprep.subr.mxu0 0.0
        %1238 = vmatpush1.msra.mxu0 %v1220
        %1239 = vmatprep.subr.mxu0 0.0
        %1240 = vmatpush1.msra.mxu0 0.0
        %1241 = vmatprep.subr.mxu0 0.0
        %1242 = vmatpush1.msra.mxu0 0.0
        %1243 = vmatprep.subr.mxu0 0.0
        %1244 = vmatpush1.msra.mxu0 0.0
        %1245 = vmatprep.subr.mxu0 0.0
        %1246 = vmatpush1.msra.mxu0 0.0
        %1247 = vmatprep.subr.mxu0 0.0
        %1248 = vmatpush1.msra.mxu0 0.0
        %1249 = vmatprep.subr.mxu0 0.0
        %1250 = vmatpush1.msra.mxu0 0.0
        %1251 = vmatprep.subr.mxu0 0.0
        %1252 = vmatpush1.msra.mxu0 0.0
        %1253 = vmatprep.subr.mxu0 0.0
        %1254 = vmatpush1.msra.mxu0 0.0
        %1255 = vmatprep.subr.mxu0 0.0
        %1256 = vmatpush1.msra.mxu0 0.0
        %1257 = vmatprep.subr.mxu0 0.0
        %1258 = vmatpush1.msra.mxu0 0.0
        %1259 = vmatprep.subr.mxu0 0.0
        %1260 = vmatpush1.msra.mxu0 0.0
        %1261 = vmatprep.subr.mxu0 0.0
        %1262 = vmatpush1.msra.mxu0 0.0
        %1263 = vmatprep.subr.mxu0 0.0
        %1264 = vmatpush1.msra.mxu0 0.0
        %1265 = vmatprep.subr.mxu0 0.0
        %1266 = vmatpush1.msra.mxu0 0.0
        %1267 = vmatprep.subr.mxu0 0.0
        %1268 = vmatpush1.msra.mxu0 0.0
        %1269 = vmatprep.subr.mxu0 0.0
        %1270 = vmatpush1.msra.mxu0 0.0
        %1271 = vmatprep.subr.mxu0 0.0
        %1272 = vmatpush1.msra.mxu0 0.0
        %1273 = vmatprep.subr.mxu0 0.0
        %1274 = vmatpush1.msra.mxu0 0.0
        %1275 = vmatprep.subr.mxu0 0.0
        %1276 = vmatpush1.msra.mxu0 0.0
        %1277 = vmatprep.subr.mxu0 0.0
        %1278 = vmatpush1.msra.mxu0 0.0
        %1279 = vmatprep.subr.mxu0 0.0
        %1280 = vmatpush1.msra.mxu0 0.0
        %1281 = vmatprep.subr.mxu0 0.0
        %1282 = vmatpush1.msra.mxu0 0.0
        %1283 = vmatprep.subr.mxu0 0.0
        %1284 = vmatpush1.msra.mxu0 0.0
        %1285 = vmatprep.subr.mxu0 0.0
        %1286 = vmatpush1.msra.mxu0 0.0
        %1287 = vmatprep.subr.mxu0 0.0
        %1288 = vmatpush1.msra.mxu0 0.0
        %1289 = vmatprep.subr.mxu0 0.0
        %1290 = vmatpush1.msra.mxu0 0.0
        %1291 = vmatprep.subr.mxu0 0.0
        %1292 = vmatpush1.msra.mxu0 0.0
        %1293 = vmatprep.subr.mxu0 0.0
        %1294 = vmatpush1.msra.mxu0 0.0
        %1295 = vmatprep.mubr.f32.mxu0 0.0
        %1296 = vmatmul.mubr.f32.gmra.mrb[0].mxu0 %v1229
        %v1297 = vpop.f32.mrb[0].mxu0
        %v1298 = vadd.f32 %v1226, %v1297
        %v1299 = vpop.f32.mrb[0].mxu0
        %1300 = vdwg.mxu0
        %1301 = vst.msk [vmem:[%s336] sm:$0xff] %vm355, %v1298
        %s1302 = sand.u32 %s211, 1
        %s1303 = scalar_lea.sflag [#allocation5], %s1302
        %s1304 = sand.u32 %s211, 1
        %s1305 = smul.addr %s1304, 8
        %s1306 = scalar_lea.vmem [#allocation6], %s1305
        // Predicated region
        $region57: #{tpu_custom_call.1} parent=51 // pred_check
          %p1307 = pneg %p221
        $region58: #{tpu_custom_call.1} parent=51 // pred_check_branch
          %1309 = sbr.rel (%p1307) target = $region60
        $region59: #{tpu_custom_call.1} parent=51 // pred_region
          %s1311 = ssub.s32 128, 128
          %1312 = vsyncadd %s1303, %s1311
          %s1313 = smul.addr %s25, 128
          %s1314 = scalar_lea.hbm %s8, %s1313
          %s1316 = sshll.u32 %s1306, 4
          %s1317 = int_to_ptr.vmem [resolvable:$true] %s1316
          %1319 = dma.vmem_to_hbm [thread:$0]  %s1317, 128, %s1314, %s1303
        $region60: #{tpu_custom_call.1} parent=51 // pred_fallthru
          _
      $region52: #{tpu_custom_call.1} parent=5 // pred_fallthru
        _
      %p1320 = scmp.le.s32.totalorder 2, %s20
      // Predicated region
      $region61: #{tpu_custom_call.1} parent=5 // pred_check
        %p1321 = pneg %p1320
      $region62: #{tpu_custom_call.1} parent=5 // pred_check_branch
        %1323 = sbr.rel (%p1321) target = $region64
      $region63: #{tpu_custom_call.1} parent=5 // pred_region
        %s1324 = ssub.s32 %s20, 2
        // Predicated region
        $region65: #{tpu_custom_call.1} parent=63 // pred_check
          %p1325 = pneg %p227
        $region66: #{tpu_custom_call.1} parent=63 // pred_check_branch
          %1327 = sbr.rel (%p1325) target = $region68
        $region67: #{tpu_custom_call.1} parent=63 // pred_region
          %s1328 = sand.u32 %s212, 1
          %s1329 = scalar_lea.sflag [#allocation5], %s1328
          %s1330 = sand.u32 %s212, 1
          %s1331 = smul.addr %s1330, 8
          %s1332 = scalar_lea.vmem [#allocation6], %s1331
          %1333 = dma.done %s1329, 128
        $region68: #{tpu_custom_call.1} parent=63 // pred_fallthru
          _
      $region64: #{tpu_custom_call.1} parent=5 // pred_fallthru
        _
    $region6: #{tpu_custom_call.1} parent=1 // loop_footer
      %s24 = sadd.s32 1, %s20
    $region7: #{tpu_custom_call.1} parent=1 // loop_footer_branch
      %19 = sbr.rel target = $region3
    $region8: #{tpu_custom_call.1} parent=1 // loop_exit
      _
    %1334 = vsyncpa [#allocation4], 1
    %s1335 = scalar_lea.sflag [#allocation4], 1
    %1336 = vsyncpa %s1335, 1
    %1337 = vsyncpa [#allocation5], 1
    %s1338 = scalar_lea.sflag [#allocation5], 1
    %1339 = vsyncpa %s1338, 1

</llo_original>
